<compile_context>
chip_gen: v7x
topology: tpu7x:2x2x1
jax: 0.10.0
libtpu: 0.0.40
codegen_flags: <defaults>
</compile_context>

<pallas_src>
import functools

import jax
import jax.numpy as jnp
from jax.experimental import pallas as pl
from jax.experimental.pallas import tpu as pltpu

EPS = 1e-5
LANE = 128

_COMPILER_PARAMS = pltpu.CompilerParams(
    dimension_semantics=("parallel", "parallel"),
    vmem_limit_bytes=32 * 1024 * 1024,
)


# ------------------------------------------------------------------ kernels --
def conv3x3_kernel(x_ref, w_ref, y_ref, s_ref, ss_ref):
    """3x3 conv tile as 9 accumulated bf16 MXU matmuls + one-pass BN stats.

    x_ref : (1, H+2, W+2, Cin_p)  bf16   halo-padded image (resident per n)
    w_ref : (9, Cin_p, Cout_p)    bf16   tap-major weights (resident)
    y_ref : (1, TH, W, Cout_p)    f32    pre-BN conv output tile
    s_ref, ss_ref : (1, 1, 1, Cout_p) f32  per-tile sum / sum-of-squares
    """
    _, th, w_out, cout_p = y_ref.shape
    cin_p = x_ref.shape[-1]
    row0 = pl.program_id(1) * th
    acc = jnp.zeros((th * w_out, cout_p), jnp.float32)
    for k in range(9):
        ky, kx = divmod(k, 3)
        patch = x_ref[0, pl.ds(row0 + ky, th), pl.ds(kx, w_out), :]
        acc = acc + jnp.dot(patch.reshape(th * w_out, cin_p), w_ref[k],
                            preferred_element_type=jnp.float32)
    y_ref[...] = acc.reshape(1, th, w_out, cout_p)
    s_ref[...] = jnp.sum(acc, axis=0).reshape(1, 1, 1, cout_p)
    ss_ref[...] = jnp.sum(acc * acc, axis=0).reshape(1, 1, 1, cout_p)


def bn_relu_kernel(y_ref, scale_ref, shift_ref, o_ref):
    """BN (pre-folded per-channel scale/shift) + ReLU; f32 math, cast out."""
    a = jnp.maximum(y_ref[...] * scale_ref[...] + shift_ref[...], 0.0)
    o_ref[...] = a.astype(o_ref.dtype)


def bn_relu_pool_kernel(y_ref, scale_ref, shift_ref, bp_ref, pool_ref):
    """BN + ReLU with a fused 2x2/stride-2 max-pool.

    The W axis is pre-merged into lanes in the wrapper (free reshape), so the
    tile is (1, TH, W//2, 2*Cp): the two W-phases of each pooling window live
    in lane halves [0:Cp) / [Cp:2Cp); H-pairs are split as a major dim.  No
    sublane reshapes or strided slices are needed in-kernel.
    """
    a = jnp.maximum(y_ref[...] * scale_ref[...] + shift_ref[...], 0.0)
    bp_ref[...] = a                                   # before_pool (merged view)
    _, th, w2, c2 = a.shape
    cp = c2 // 2
    ar = a.reshape(th // 2, 2, w2, c2)                # split H into row pairs
    ah = jnp.maximum(ar[:, 0], ar[:, 1])              # max over the 2 rows
    p = jnp.maximum(ah[:, :, :cp], ah[:, :, cp:])     # max over the 2 columns
    pool_ref[...] = p.reshape(1, th // 2, w2, cp)


# ----------------------------------------------------------------- wrappers --
def _round_up(v, m):
    return ((v + m - 1) // m) * m


def _pad_last(x, target):
    pad = target - x.shape[-1]
    if pad == 0:
        return x
    return jnp.pad(x, [(0, 0)] * (x.ndim - 1) + [(0, pad)])


def _prep_weight(w_oihw, cin_p, cout_p):
    """(Cout, Cin, 3, 3) -> (9, Cin_p, Cout_p) bf16, taps ordered (ky, kx)."""
    cout, cin, kh, kw = w_oihw.shape
    wm = jnp.transpose(w_oihw, (2, 3, 1, 0)).reshape(kh * kw, cin, cout)
    wm = jnp.pad(wm, ((0, 0), (0, cin_p - cin), (0, cout_p - cout)))
    return wm.astype(jnp.bfloat16)


def _conv3x3(xpad, wmat, th):
    """Tiled 3x3 conv (pad=1).  Returns pre-BN output + per-tile BN stats."""
    n, hp2, wp2, cin_p = xpad.shape
    h, w = hp2 - 2, wp2 - 2
    cout_p = wmat.shape[-1]
    n_h = h // th
    return pl.pallas_call(
        conv3x3_kernel,
        grid=(n, n_h),
        in_specs=[
            # Full halo-padded image: block index is constant along the h
            # axis, so it is fetched once per n and stays VMEM-resident.
            pl.BlockSpec((1, hp2, wp2, cin_p), lambda i, j: (i, 0, 0, 0)),
            pl.BlockSpec((9, cin_p, cout_p), lambda i, j: (0, 0, 0)),
        ],
        out_specs=[
            pl.BlockSpec((1, th, w, cout_p), lambda i, j: (i, j, 0, 0)),
            pl.BlockSpec((1, 1, 1, cout_p), lambda i, j: (i, j, 0, 0)),
            pl.BlockSpec((1, 1, 1, cout_p), lambda i, j: (i, j, 0, 0)),
        ],
        out_shape=[
            jax.ShapeDtypeStruct((n, h, w, cout_p), jnp.float32),
            jax.ShapeDtypeStruct((n, n_h, 1, cout_p), jnp.float32),
            jax.ShapeDtypeStruct((n, n_h, 1, cout_p), jnp.float32),
        ],
        compiler_params=_COMPILER_PARAMS,
    )(xpad, wmat)


def _bn_scale_shift(s, ss, gamma_p, beta_p, m):
    """Fold batch stats + affine params into per-channel scale/shift (f32)."""
    tot = jnp.sum(s, axis=(0, 1, 2))
    tot2 = jnp.sum(ss, axis=(0, 1, 2))
    mean = tot / m
    var = jnp.maximum(tot2 / m - mean * mean, 0.0)     # biased (training) var
    scale = gamma_p * jax.lax.rsqrt(var + EPS)
    shift = beta_p - mean * scale
    return scale.astype(jnp.float32), shift.astype(jnp.float32)


def _bn_relu(y, scale, shift, th, out_dtype):
    n, h, w, cp = y.shape
    return pl.pallas_call(
        bn_relu_kernel,
        grid=(n, h // th),
        in_specs=[
            pl.BlockSpec((1, th, w, cp), lambda i, j: (i, j, 0, 0)),
            pl.BlockSpec((1, 1, 1, cp), lambda i, j: (0, 0, 0, 0)),
            pl.BlockSpec((1, 1, 1, cp), lambda i, j: (0, 0, 0, 0)),
        ],
        out_specs=pl.BlockSpec((1, th, w, cp), lambda i, j: (i, j, 0, 0)),
        out_shape=jax.ShapeDtypeStruct((n, h, w, cp), out_dtype),
        compiler_params=_COMPILER_PARAMS,
    )(y, scale.reshape(1, 1, 1, cp), shift.reshape(1, 1, 1, cp))


def _bn_relu_pool(y, scale, shift, th):
    n, h, w, cp = y.shape
    w2 = w // 2
    # Merge W-pairs into lanes (free row-major-compatible reshape): the two
    # columns of each 2x2 window become lane halves of a 2*Cp-wide tile.
    yv = y.reshape(n, h, w2, 2 * cp)
    scale2 = jnp.concatenate([scale, scale]).reshape(1, 1, 1, 2 * cp)
    shift2 = jnp.concatenate([shift, shift]).reshape(1, 1, 1, 2 * cp)
    bp_v, pool = pl.pallas_call(
        bn_relu_pool_kernel,
        grid=(n, h // th),
        in_specs=[
            pl.BlockSpec((1, th, w2, 2 * cp), lambda i, j: (i, j, 0, 0)),
            pl.BlockSpec((1, 1, 1, 2 * cp), lambda i, j: (0, 0, 0, 0)),
            pl.BlockSpec((1, 1, 1, 2 * cp), lambda i, j: (0, 0, 0, 0)),
        ],
        out_specs=[
            pl.BlockSpec((1, th, w2, 2 * cp), lambda i, j: (i, j, 0, 0)),
            pl.BlockSpec((1, th // 2, w2, cp), lambda i, j: (i, j, 0, 0)),
        ],
        out_shape=[
            jax.ShapeDtypeStruct((n, h, w2, 2 * cp), jnp.float32),
            jax.ShapeDtypeStruct((n, h // 2, w2, cp), jnp.float32),
        ],
        compiler_params=_COMPILER_PARAMS,
    )(yv, scale2, shift2)
    return bp_v.reshape(n, h, w, cp), pool


@functools.partial(jax.jit, static_argnames=("pooling",))
def down_conv_forward(x_nchw, params, pooling=True):
    """DownConv.forward: returns (x, before_pool), both NCHW like PyTorch."""
    n, cin, h, w = x_nchw.shape
    w1, _b1, g1, be1 = params["conv_in"]    # conv bias is exactly cancelled by
    w2, _b2, g2, be2 = params["conv_out"]   # the BN mean subtraction -> unused
    cout = w1.shape[0]
    cin_p = _round_up(cin, LANE)
    cout_p = _round_up(cout, LANE)
    th = 8 if h % 8 == 0 else h             # row tile (H*W is tiny here)
    if pooling:
        # TODO(synk): PyTorch MaxPool2d floors odd H/W; only even sizes here.
        assert h % 2 == 0 and w % 2 == 0 and th % 2 == 0
    m = n * h * w

    # NCHW -> NHWC once at the module boundary; everything inside stays NHWC.
    x = jnp.transpose(x_nchw, (0, 2, 3, 1))
    x = _pad_last(x, cin_p).astype(jnp.bfloat16)
    xpad = jnp.pad(x, ((0, 0), (1, 1), (1, 1), (0, 0)))

    wm1 = _prep_weight(w1, cin_p, cout_p)
    wm2 = _prep_weight(w2, cout_p, cout_p)
    g1p = _pad_last(g1.astype(jnp.float32), cout_p)
    be1p = _pad_last(be1.astype(jnp.float32), cout_p)
    g2p = _pad_last(g2.astype(jnp.float32), cout_p)
    be2p = _pad_last(be2.astype(jnp.float32), cout_p)

    # conv_in -> BN -> ReLU  (activation kept bf16 / channel-padded for MXU)
    y1, s1, ss1 = _conv3x3(xpad, wm1, th)
    sc1, sh1 = _bn_scale_shift(s1, ss1, g1p, be1p, m)
    a1 = _bn_relu(y1, sc1, sh1, th, jnp.bfloat16)
    a1pad = jnp.pad(a1, ((0, 0), (1, 1), (1, 1), (0, 0)))

    # conv_out -> BN -> ReLU (+ fused 2x2 max-pool)
    y2, s2, ss2 = _conv3x3(a1pad, wm2, th)
    sc2, sh2 = _bn_scale_shift(s2, ss2, g2p, be2p, m)
    if pooling:
        bp_p, pool_p = _bn_relu_pool(y2, sc2, sh2, th)
        before_pool = bp_p[..., :cout]
        out = pool_p[..., :cout]
    else:
        before_pool = _bn_relu(y2, sc2, sh2, th, jnp.float32)[..., :cout]
        out = before_pool

    # NHWC -> NCHW at the module boundary.
    return (jnp.transpose(out, (0, 3, 1, 2)),
            jnp.transpose(before_pool, (0, 3, 1, 2)))


# ------------------------------------------------------------------- params --
def init_conv_bn(key, cin, cout):
    """Deterministic params matching PyTorch shapes/init scale.

    Conv2d: weight (Cout, Cin, 3, 3), bias (Cout,), uniform(+-1/sqrt(fan_in)).
    BatchNorm2d: gamma = 1, beta = 0.
    """
    kw, kb = jax.random.split(key)
    fan_in = cin * 3 * 3
    bound = 1.0 / jnp.sqrt(float(fan_in))
    w = jax.random.uniform(kw, (cout, cin, 3, 3), jnp.float32, -bound, bound)
    b = jax.random.uniform(kb, (cout,), jnp.float32, -bound, bound)
    return (w, b, jnp.ones((cout,), jnp.float32), jnp.zeros((cout,), jnp.float32))


def init_down_conv(key, in_channels, out_channels):
    k1, k2 = jax.random.split(key)
    return {
        "conv_in": init_conv_bn(k1, in_channels, out_channels),
        "conv_out": init_conv_bn(k2, out_channels, out_channels),
    }


# ---------------------------------------------------------------- reference --
def _reference(x_nchw, params, pooling):
    """Pure-JAX reference that mirrors the kernel's bf16 matmul precision."""
    def stage(x, wb, out_f32):
        w_, b_, g_, beta_ = wb
        y = jax.lax.conv_general_dilated(
            x.astype(jnp.bfloat16), w_.astype(jnp.bfloat16),
            window_strides=(1, 1), padding=((1, 1), (1, 1)),
            dimension_numbers=("NCHW", "OIHW", "NCHW"),
            preferred_element_type=jnp.float32)
        y = y + b_.reshape(1, -1, 1, 1)
        mean = y.mean(axis=(0, 2, 3), keepdims=True)
        var = ((y - mean) ** 2).mean(axis=(0, 2, 3), keepdims=True)
        a = jnp.maximum((y - mean) * jax.lax.rsqrt(var + EPS)
                        * g_.reshape(1, -1, 1, 1) + beta_.reshape(1, -1, 1, 1),
                        0.0)
        return a if out_f32 else a.astype(jnp.bfloat16).astype(jnp.float32)

    a1 = stage(x_nchw, params["conv_in"], out_f32=False)
    a2 = stage(a1, params["conv_out"], out_f32=True)
    bp = a2
    if pooling:
        n, c, hh, ww = a2.shape
        a2 = a2.reshape(n, c, hh // 2, 2, ww // 2, 2).max(axis=(3, 5))
    return a2, bp


# -------------------------------------------------------------------- main ---
if __name__ == "__main__":
    key = jax.random.PRNGKey(0)
    k_x, k_p = jax.random.split(key)

    N, CIN, COUT, H, W = 2, 4, 8, 16, 16
    x = jax.random.normal(k_x, (N, CIN, H, W), dtype=jnp.float32)
    params = init_down_conv(k_p, CIN, COUT)

    pooled, before_pool = down_conv_forward(x, params, pooling=True)
    jax.block_until_ready((pooled, before_pool))

    assert pooled.shape == (N, COUT, H // 2, W // 2)
    assert before_pool.shape == (N, COUT, H, W)

    ref_pooled, ref_bp = _reference(x, params, pooling=True)
    assert jnp.allclose(before_pool, ref_bp, atol=5e-2, rtol=5e-2), (
        float(jnp.max(jnp.abs(before_pool - ref_bp))))
    assert jnp.allclose(pooled, ref_pooled, atol=5e-2, rtol=5e-2), (
        float(jnp.max(jnp.abs(pooled - ref_pooled))))

    print("KERNEL_OK")
</pallas_src>

<mosaic_0001>
module attributes {stable_mosaic.version = 11 : i64} {
  func.func @conv3x3_kernel(%arg0: i32, %arg1: i32, %arg2: memref<1x18x18x128xbf16, #tpu.memory_space<vmem>>, %arg3: memref<9x128x128xbf16, #tpu.memory_space<vmem>>, %arg4: memref<1x8x16x128xf32, #tpu.memory_space<vmem>>, %arg5: memref<1x1x1x128xf32, #tpu.memory_space<vmem>>, %arg6: memref<1x1x1x128xf32, #tpu.memory_space<vmem>>) attributes {dimension_semantics = [#tpu.dimension_semantics<parallel>, #tpu.dimension_semantics<parallel>], iteration_bounds = array<i64: 2, 2>, scalar_prefetch = 0 : i64, scratch_operands = 0 : i64, tpu.core_type = #tpu.core_type<tc>, window_params = [{transform_indices = @transform_0, window_bounds = array<i64: 1, 18, 18, 128>}, {pipeline_mode = #tpu.pipeline_mode<synchronous>, transform_indices = @transform_1, window_bounds = array<i64: 9, 128, 128>}, {transform_indices = @transform_2, window_bounds = array<i64: 1, 8, 16, 128>}, {transform_indices = @transform_3, window_bounds = array<i64: 1, 1, 1, 128>}, {transform_indices = @transform_4, window_bounds = array<i64: 1, 1, 1, 128>}]} {
    %c8_i32 = arith.constant 8 : i32
    %0 = arith.muli %arg1, %c8_i32 : i32
    %cst = arith.constant 0.000000e+00 : f32
    %1 = vector.broadcast %cst : f32 to vector<128x128xf32>
    %c0_i32 = arith.constant 0 : i32
    %2 = arith.addi %0, %c0_i32 : i32
    %c0 = arith.constant 0 : index
    %3 = arith.index_cast %2 : i32 to index
    %c0_0 = arith.constant 0 : index
    %c0_1 = arith.constant 0 : index
    %4 = vector.load %arg2[%c0, %3, %c0_0, %c0_1] : memref<1x18x18x128xbf16, #tpu.memory_space<vmem>>, vector<1x8x16x128xbf16>
    %5 = vector.shape_cast %4 : vector<1x8x16x128xbf16> to vector<8x16x128xbf16>
    %6 = vector.shape_cast %5 : vector<8x16x128xbf16> to vector<128x128xbf16>
    %c0_2 = arith.constant 0 : index
    %c0_3 = arith.constant 0 : index
    %c0_4 = arith.constant 0 : index
    %7 = vector.load %arg3[%c0_2, %c0_3, %c0_4] : memref<9x128x128xbf16, #tpu.memory_space<vmem>>, vector<1x128x128xbf16>
    %8 = vector.shape_cast %7 : vector<1x128x128xbf16> to vector<128x128xbf16>
    %cst_5 = arith.constant dense<0.000000e+00> : vector<128x128xf32>
    %9 = tpu.matmul %6, %8, %cst_5 {dimension_numbers = #tpu.dot_dimension_numbers<[1], [0], [0], [1], [0, 0, 1, 1], [], []>} : vector<128x128xbf16>, vector<128x128xbf16>, vector<128x128xf32> -> vector<128x128xf32>
    %10 = arith.addf %1, %9 : vector<128x128xf32>
    %c0_i32_6 = arith.constant 0 : i32
    %11 = arith.addi %0, %c0_i32_6 : i32
    %c0_7 = arith.constant 0 : index
    %12 = arith.index_cast %11 : i32 to index
    %c1 = arith.constant 1 : index
    %c0_8 = arith.constant 0 : index
    %13 = vector.load %arg2[%c0_7, %12, %c1, %c0_8] : memref<1x18x18x128xbf16, #tpu.memory_space<vmem>>, vector<1x8x16x128xbf16>
    %14 = vector.shape_cast %13 : vector<1x8x16x128xbf16> to vector<8x16x128xbf16>
    %15 = vector.shape_cast %14 : vector<8x16x128xbf16> to vector<128x128xbf16>
    %c1_9 = arith.constant 1 : index
    %c0_10 = arith.constant 0 : index
    %c0_11 = arith.constant 0 : index
    %16 = vector.load %arg3[%c1_9, %c0_10, %c0_11] : memref<9x128x128xbf16, #tpu.memory_space<vmem>>, vector<1x128x128xbf16>
    %17 = vector.shape_cast %16 : vector<1x128x128xbf16> to vector<128x128xbf16>
    %cst_12 = arith.constant dense<0.000000e+00> : vector<128x128xf32>
    %18 = tpu.matmul %15, %17, %cst_12 {dimension_numbers = #tpu.dot_dimension_numbers<[1], [0], [0], [1], [0, 0, 1, 1], [], []>} : vector<128x128xbf16>, vector<128x128xbf16>, vector<128x128xf32> -> vector<128x128xf32>
    %19 = arith.addf %10, %18 : vector<128x128xf32>
    %c0_i32_13 = arith.constant 0 : i32
    %20 = arith.addi %0, %c0_i32_13 : i32
    %c0_14 = arith.constant 0 : index
    %21 = arith.index_cast %20 : i32 to index
    %c2 = arith.constant 2 : index
    %c0_15 = arith.constant 0 : index
    %22 = vector.load %arg2[%c0_14, %21, %c2, %c0_15] : memref<1x18x18x128xbf16, #tpu.memory_space<vmem>>, vector<1x8x16x128xbf16>
    %23 = vector.shape_cast %22 : vector<1x8x16x128xbf16> to vector<8x16x128xbf16>
    %24 = vector.shape_cast %23 : vector<8x16x128xbf16> to vector<128x128xbf16>
    %c2_16 = arith.constant 2 : index
    %c0_17 = arith.constant 0 : index
    %c0_18 = arith.constant 0 : index
    %25 = vector.load %arg3[%c2_16, %c0_17, %c0_18] : memref<9x128x128xbf16, #tpu.memory_space<vmem>>, vector<1x128x128xbf16>
    %26 = vector.shape_cast %25 : vector<1x128x128xbf16> to vector<128x128xbf16>
    %cst_19 = arith.constant dense<0.000000e+00> : vector<128x128xf32>
    %27 = tpu.matmul %24, %26, %cst_19 {dimension_numbers = #tpu.dot_dimension_numbers<[1], [0], [0], [1], [0, 0, 1, 1], [], []>} : vector<128x128xbf16>, vector<128x128xbf16>, vector<128x128xf32> -> vector<128x128xf32>
    %28 = arith.addf %19, %27 : vector<128x128xf32>
    %c1_i32 = arith.constant 1 : i32
    %29 = arith.addi %0, %c1_i32 : i32
    %c0_20 = arith.constant 0 : index
    %30 = arith.index_cast %29 : i32 to index
    %c0_21 = arith.constant 0 : index
    %c0_22 = arith.constant 0 : index
    %31 = vector.load %arg2[%c0_20, %30, %c0_21, %c0_22] : memref<1x18x18x128xbf16, #tpu.memory_space<vmem>>, vector<1x8x16x128xbf16>
    %32 = vector.shape_cast %31 : vector<1x8x16x128xbf16> to vector<8x16x128xbf16>
    %33 = vector.shape_cast %32 : vector<8x16x128xbf16> to vector<128x128xbf16>
    %c3 = arith.constant 3 : index
    %c0_23 = arith.constant 0 : index
    %c0_24 = arith.constant 0 : index
    %34 = vector.load %arg3[%c3, %c0_23, %c0_24] : memref<9x128x128xbf16, #tpu.memory_space<vmem>>, vector<1x128x128xbf16>
    %35 = vector.shape_cast %34 : vector<1x128x128xbf16> to vector<128x128xbf16>
    %cst_25 = arith.constant dense<0.000000e+00> : vector<128x128xf32>
    %36 = tpu.matmul %33, %35, %cst_25 {dimension_numbers = #tpu.dot_dimension_numbers<[1], [0], [0], [1], [0, 0, 1, 1], [], []>} : vector<128x128xbf16>, vector<128x128xbf16>, vector<128x128xf32> -> vector<128x128xf32>
    %37 = arith.addf %28, %36 : vector<128x128xf32>
    %c1_i32_26 = arith.constant 1 : i32
    %38 = arith.addi %0, %c1_i32_26 : i32
    %c0_27 = arith.constant 0 : index
    %39 = arith.index_cast %38 : i32 to index
    %c1_28 = arith.constant 1 : index
    %c0_29 = arith.constant 0 : index
    %40 = vector.load %arg2[%c0_27, %39, %c1_28, %c0_29] : memref<1x18x18x128xbf16, #tpu.memory_space<vmem>>, vector<1x8x16x128xbf16>
    %41 = vector.shape_cast %40 : vector<1x8x16x128xbf16> to vector<8x16x128xbf16>
    %42 = vector.shape_cast %41 : vector<8x16x128xbf16> to vector<128x128xbf16>
    %c4 = arith.constant 4 : index
    %c0_30 = arith.constant 0 : index
    %c0_31 = arith.constant 0 : index
    %43 = vector.load %arg3[%c4, %c0_30, %c0_31] : memref<9x128x128xbf16, #tpu.memory_space<vmem>>, vector<1x128x128xbf16>
    %44 = vector.shape_cast %43 : vector<1x128x128xbf16> to vector<128x128xbf16>
    %cst_32 = arith.constant dense<0.000000e+00> : vector<128x128xf32>
    %45 = tpu.matmul %42, %44, %cst_32 {dimension_numbers = #tpu.dot_dimension_numbers<[1], [0], [0], [1], [0, 0, 1, 1], [], []>} : vector<128x128xbf16>, vector<128x128xbf16>, vector<128x128xf32> -> vector<128x128xf32>
    %46 = arith.addf %37, %45 : vector<128x128xf32>
    %c1_i32_33 = arith.constant 1 : i32
    %47 = arith.addi %0, %c1_i32_33 : i32
    %c0_34 = arith.constant 0 : index
    %48 = arith.index_cast %47 : i32 to index
    %c2_35 = arith.constant 2 : index
    %c0_36 = arith.constant 0 : index
    %49 = vector.load %arg2[%c0_34, %48, %c2_35, %c0_36] : memref<1x18x18x128xbf16, #tpu.memory_space<vmem>>, vector<1x8x16x128xbf16>
    %50 = vector.shape_cast %49 : vector<1x8x16x128xbf16> to vector<8x16x128xbf16>
    %51 = vector.shape_cast %50 : vector<8x16x128xbf16> to vector<128x128xbf16>
    %c5 = arith.constant 5 : index
    %c0_37 = arith.constant 0 : index
    %c0_38 = arith.constant 0 : index
    %52 = vector.load %arg3[%c5, %c0_37, %c0_38] : memref<9x128x128xbf16, #tpu.memory_space<vmem>>, vector<1x128x128xbf16>
    %53 = vector.shape_cast %52 : vector<1x128x128xbf16> to vector<128x128xbf16>
    %cst_39 = arith.constant dense<0.000000e+00> : vector<128x128xf32>
    %54 = tpu.matmul %51, %53, %cst_39 {dimension_numbers = #tpu.dot_dimension_numbers<[1], [0], [0], [1], [0, 0, 1, 1], [], []>} : vector<128x128xbf16>, vector<128x128xbf16>, vector<128x128xf32> -> vector<128x128xf32>
    %55 = arith.addf %46, %54 : vector<128x128xf32>
    %c2_i32 = arith.constant 2 : i32
    %56 = arith.addi %0, %c2_i32 : i32
    %c0_40 = arith.constant 0 : index
    %57 = arith.index_cast %56 : i32 to index
    %c0_41 = arith.constant 0 : index
    %c0_42 = arith.constant 0 : index
    %58 = vector.load %arg2[%c0_40, %57, %c0_41, %c0_42] : memref<1x18x18x128xbf16, #tpu.memory_space<vmem>>, vector<1x8x16x128xbf16>
    %59 = vector.shape_cast %58 : vector<1x8x16x128xbf16> to vector<8x16x128xbf16>
    %60 = vector.shape_cast %59 : vector<8x16x128xbf16> to vector<128x128xbf16>
    %c6 = arith.constant 6 : index
    %c0_43 = arith.constant 0 : index
    %c0_44 = arith.constant 0 : index
    %61 = vector.load %arg3[%c6, %c0_43, %c0_44] : memref<9x128x128xbf16, #tpu.memory_space<vmem>>, vector<1x128x128xbf16>
    %62 = vector.shape_cast %61 : vector<1x128x128xbf16> to vector<128x128xbf16>
    %cst_45 = arith.constant dense<0.000000e+00> : vector<128x128xf32>
    %63 = tpu.matmul %60, %62, %cst_45 {dimension_numbers = #tpu.dot_dimension_numbers<[1], [0], [0], [1], [0, 0, 1, 1], [], []>} : vector<128x128xbf16>, vector<128x128xbf16>, vector<128x128xf32> -> vector<128x128xf32>
    %64 = arith.addf %55, %63 : vector<128x128xf32>
    %c2_i32_46 = arith.constant 2 : i32
    %65 = arith.addi %0, %c2_i32_46 : i32
    %c0_47 = arith.constant 0 : index
    %66 = arith.index_cast %65 : i32 to index
    %c1_48 = arith.constant 1 : index
    %c0_49 = arith.constant 0 : index
    %67 = vector.load %arg2[%c0_47, %66, %c1_48, %c0_49] : memref<1x18x18x128xbf16, #tpu.memory_space<vmem>>, vector<1x8x16x128xbf16>
    %68 = vector.shape_cast %67 : vector<1x8x16x128xbf16> to vector<8x16x128xbf16>
    %69 = vector.shape_cast %68 : vector<8x16x128xbf16> to vector<128x128xbf16>
    %c7 = arith.constant 7 : index
    %c0_50 = arith.constant 0 : index
    %c0_51 = arith.constant 0 : index
    %70 = vector.load %arg3[%c7, %c0_50, %c0_51] : memref<9x128x128xbf16, #tpu.memory_space<vmem>>, vector<1x128x128xbf16>
    %71 = vector.shape_cast %70 : vector<1x128x128xbf16> to vector<128x128xbf16>
    %cst_52 = arith.constant dense<0.000000e+00> : vector<128x128xf32>
    %72 = tpu.matmul %69, %71, %cst_52 {dimension_numbers = #tpu.dot_dimension_numbers<[1], [0], [0], [1], [0, 0, 1, 1], [], []>} : vector<128x128xbf16>, vector<128x128xbf16>, vector<128x128xf32> -> vector<128x128xf32>
    %73 = arith.addf %64, %72 : vector<128x128xf32>
    %c2_i32_53 = arith.constant 2 : i32
    %74 = arith.addi %0, %c2_i32_53 : i32
    %c0_54 = arith.constant 0 : index
    %75 = arith.index_cast %74 : i32 to index
    %c2_55 = arith.constant 2 : index
    %c0_56 = arith.constant 0 : index
    %76 = vector.load %arg2[%c0_54, %75, %c2_55, %c0_56] : memref<1x18x18x128xbf16, #tpu.memory_space<vmem>>, vector<1x8x16x128xbf16>
    %77 = vector.shape_cast %76 : vector<1x8x16x128xbf16> to vector<8x16x128xbf16>
    %78 = vector.shape_cast %77 : vector<8x16x128xbf16> to vector<128x128xbf16>
    %c8 = arith.constant 8 : index
    %c0_57 = arith.constant 0 : index
    %c0_58 = arith.constant 0 : index
    %79 = vector.load %arg3[%c8, %c0_57, %c0_58] : memref<9x128x128xbf16, #tpu.memory_space<vmem>>, vector<1x128x128xbf16>
    %80 = vector.shape_cast %79 : vector<1x128x128xbf16> to vector<128x128xbf16>
    %cst_59 = arith.constant dense<0.000000e+00> : vector<128x128xf32>
    %81 = tpu.matmul %78, %80, %cst_59 {dimension_numbers = #tpu.dot_dimension_numbers<[1], [0], [0], [1], [0, 0, 1, 1], [], []>} : vector<128x128xbf16>, vector<128x128xbf16>, vector<128x128xf32> -> vector<128x128xf32>
    %82 = arith.addf %73, %81 : vector<128x128xf32>
    %83 = vector.shape_cast %82 : vector<128x128xf32> to vector<1x8x16x128xf32>
    %c0_60 = arith.constant 0 : index
    %c0_61 = arith.constant 0 : index
    %c0_62 = arith.constant 0 : index
    %c0_63 = arith.constant 0 : index
    %84 = vector.load %arg4[%c0_60, %c0_61, %c0_62, %c0_63] : memref<1x8x16x128xf32, #tpu.memory_space<vmem>>, vector<1x8x16x128xf32>
    tpu.vector_store %arg4[%c0_60, %c0_61, %c0_62, %c0_63], %83 {strides = array<i32>} : memref<1x8x16x128xf32, #tpu.memory_space<vmem>>, vector<1x8x16x128xf32>,
    %cst_64 = arith.constant dense<0.000000e+00> : vector<128xf32>
    %85 = vector.multi_reduction <add>, %82, %cst_64 [0] : vector<128x128xf32> to vector<128xf32>
    %86 = vector.shape_cast %85 : vector<128xf32> to vector<1x1x1x128xf32>
    %c0_65 = arith.constant 0 : index
    %c0_66 = arith.constant 0 : index
    %c0_67 = arith.constant 0 : index
    %c0_68 = arith.constant 0 : index
    %87 = vector.load %arg5[%c0_65, %c0_66, %c0_67, %c0_68] : memref<1x1x1x128xf32, #tpu.memory_space<vmem>>, vector<1x1x1x128xf32>
    tpu.vector_store %arg5[%c0_65, %c0_66, %c0_67, %c0_68], %86 {strides = array<i32>} : memref<1x1x1x128xf32, #tpu.memory_space<vmem>>, vector<1x1x1x128xf32>,
    %88 = arith.mulf %82, %82 : vector<128x128xf32>
    %cst_69 = arith.constant dense<0.000000e+00> : vector<128xf32>
    %89 = vector.multi_reduction <add>, %88, %cst_69 [0] : vector<128x128xf32> to vector<128xf32>
    %90 = vector.shape_cast %89 : vector<128xf32> to vector<1x1x1x128xf32>
    %c0_70 = arith.constant 0 : index
    %c0_71 = arith.constant 0 : index
    %c0_72 = arith.constant 0 : index
    %c0_73 = arith.constant 0 : index
    %91 = vector.load %arg6[%c0_70, %c0_71, %c0_72, %c0_73] : memref<1x1x1x128xf32, #tpu.memory_space<vmem>>, vector<1x1x1x128xf32>
    tpu.vector_store %arg6[%c0_70, %c0_71, %c0_72, %c0_73], %90 {strides = array<i32>} : memref<1x1x1x128xf32, #tpu.memory_space<vmem>>, vector<1x1x1x128xf32>,
    return
  }
  func.func @transform_0(%arg0: i32, %arg1: i32) -> (i32, i32, i32, i32) {
    %c0_i32 = arith.constant 0 : i32
    %c0_i32_0 = arith.constant 0 : i32
    %c0_i32_1 = arith.constant 0 : i32
    %c0_i32_2 = arith.constant 0 : i32
    return %arg0, %c0_i32, %c0_i32_0, %c0_i32_1 : i32, i32, i32, i32
  }
  func.func @transform_1(%arg0: i32, %arg1: i32) -> (i32, i32, i32) {
    %c0_i32 = arith.constant 0 : i32
    %c0_i32_0 = arith.constant 0 : i32
    %c0_i32_1 = arith.constant 0 : i32
    %c0_i32_2 = arith.constant 0 : i32
    return %c0_i32, %c0_i32_0, %c0_i32_1 : i32, i32, i32
  }
  func.func @transform_2(%arg0: i32, %arg1: i32) -> (i32, i32, i32, i32) {
    %c0_i32 = arith.constant 0 : i32
    %c0_i32_0 = arith.constant 0 : i32
    %c0_i32_1 = arith.constant 0 : i32
    return %arg0, %arg1, %c0_i32, %c0_i32_0 : i32, i32, i32, i32
  }
  func.func @transform_3(%arg0: i32, %arg1: i32) -> (i32, i32, i32, i32) {
    %c0_i32 = arith.constant 0 : i32
    %c0_i32_0 = arith.constant 0 : i32
    %c0_i32_1 = arith.constant 0 : i32
    return %arg0, %arg1, %c0_i32, %c0_i32_0 : i32, i32, i32, i32
  }
  func.func @transform_4(%arg0: i32, %arg1: i32) -> (i32, i32, i32, i32) {
    %c0_i32 = arith.constant 0 : i32
    %c0_i32_0 = arith.constant 0 : i32
    %c0_i32_1 = arith.constant 0 : i32
    return %arg0, %arg1, %c0_i32, %c0_i32_0 : i32, i32, i32, i32
  }
}

module attributes {stable_mosaic.version = 11 : i64} {
  func.func @bn_relu_kernel(%arg0: i32, %arg1: i32, %arg2: memref<1x8x16x128xf32, #tpu.memory_space<vmem>>, %arg3: memref<1x1x1x128xf32, #tpu.memory_space<vmem>>, %arg4: memref<1x1x1x128xf32, #tpu.memory_space<vmem>>, %arg5: memref<1x8x16x128xbf16, #tpu.memory_space<vmem>>) attributes {dimension_semantics = [#tpu.dimension_semantics<parallel>, #tpu.dimension_semantics<parallel>], iteration_bounds = array<i64: 2, 2>, scalar_prefetch = 0 : i64, scratch_operands = 0 : i64, tpu.core_type = #tpu.core_type<tc>, window_params = [{transform_indices = @transform_0, window_bounds = array<i64: 1, 8, 16, 128>}, {pipeline_mode = #tpu.pipeline_mode<synchronous>, transform_indices = @transform_1, window_bounds = array<i64: 1, 1, 1, 128>}, {pipeline_mode = #tpu.pipeline_mode<synchronous>, transform_indices = @transform_2, window_bounds = array<i64: 1, 1, 1, 128>}, {transform_indices = @transform_3, window_bounds = array<i64: 1, 8, 16, 128>}]} {
    %c0 = arith.constant 0 : index
    %c0_0 = arith.constant 0 : index
    %c0_1 = arith.constant 0 : index
    %c0_2 = arith.constant 0 : index
    %0 = vector.load %arg2[%c0, %c0_0, %c0_1, %c0_2] : memref<1x8x16x128xf32, #tpu.memory_space<vmem>>, vector<1x8x16x128xf32>
    %c0_3 = arith.constant 0 : index
    %c0_4 = arith.constant 0 : index
    %c0_5 = arith.constant 0 : index
    %c0_6 = arith.constant 0 : index
    %1 = vector.load %arg3[%c0_3, %c0_4, %c0_5, %c0_6] : memref<1x1x1x128xf32, #tpu.memory_space<vmem>>, vector<1x1x1x128xf32>
    %2 = vector.broadcast %1 : vector<1x1x1x128xf32> to vector<1x8x16x128xf32>
    %3 = arith.mulf %0, %2 : vector<1x8x16x128xf32>
    %c0_7 = arith.constant 0 : index
    %c0_8 = arith.constant 0 : index
    %c0_9 = arith.constant 0 : index
    %c0_10 = arith.constant 0 : index
    %4 = vector.load %arg4[%c0_7, %c0_8, %c0_9, %c0_10] : memref<1x1x1x128xf32, #tpu.memory_space<vmem>>, vector<1x1x1x128xf32>
    %5 = vector.broadcast %4 : vector<1x1x1x128xf32> to vector<1x8x16x128xf32>
    %6 = arith.addf %3, %5 : vector<1x8x16x128xf32>
    %cst = arith.constant 0.000000e+00 : f32
    %7 = vector.broadcast %cst : f32 to vector<1x8x16x128xf32>
    %8 = arith.maximumf %6, %7 : vector<1x8x16x128xf32>
    %9 = arith.truncf %8 : vector<1x8x16x128xf32> to vector<1x8x16x128xbf16>
    %c0_11 = arith.constant 0 : index
    %c0_12 = arith.constant 0 : index
    %c0_13 = arith.constant 0 : index
    %c0_14 = arith.constant 0 : index
    %10 = vector.load %arg5[%c0_11, %c0_12, %c0_13, %c0_14] : memref<1x8x16x128xbf16, #tpu.memory_space<vmem>>, vector<1x8x16x128xbf16>
    tpu.vector_store %arg5[%c0_11, %c0_12, %c0_13, %c0_14], %9 {strides = array<i32>} : memref<1x8x16x128xbf16, #tpu.memory_space<vmem>>, vector<1x8x16x128xbf16>,
    return
  }
  func.func @transform_0(%arg0: i32, %arg1: i32) -> (i32, i32, i32, i32) {
    %c0_i32 = arith.constant 0 : i32
    %c0_i32_0 = arith.constant 0 : i32
    %c0_i32_1 = arith.constant 0 : i32
    return %arg0, %arg1, %c0_i32, %c0_i32_0 : i32, i32, i32, i32
  }
  func.func @transform_1(%arg0: i32, %arg1: i32) -> (i32, i32, i32, i32) {
    %c0_i32 = arith.constant 0 : i32
    %c0_i32_0 = arith.constant 0 : i32
    %c0_i32_1 = arith.constant 0 : i32
    %c0_i32_2 = arith.constant 0 : i32
    %c0_i32_3 = arith.constant 0 : i32
    return %c0_i32, %c0_i32_0, %c0_i32_1, %c0_i32_2 : i32, i32, i32, i32
  }
  func.func @transform_2(%arg0: i32, %arg1: i32) -> (i32, i32, i32, i32) {
    %c0_i32 = arith.constant 0 : i32
    %c0_i32_0 = arith.constant 0 : i32
    %c0_i32_1 = arith.constant 0 : i32
    %c0_i32_2 = arith.constant 0 : i32
    %c0_i32_3 = arith.constant 0 : i32
    return %c0_i32, %c0_i32_0, %c0_i32_1, %c0_i32_2 : i32, i32, i32, i32
  }
  func.func @transform_3(%arg0: i32, %arg1: i32) -> (i32, i32, i32, i32) {
    %c0_i32 = arith.constant 0 : i32
    %c0_i32_0 = arith.constant 0 : i32
    %c0_i32_1 = arith.constant 0 : i32
    return %arg0, %arg1, %c0_i32, %c0_i32_0 : i32, i32, i32, i32
  }
}

module attributes {stable_mosaic.version = 11 : i64} {
  func.func @bn_relu_pool_kernel(%arg0: i32, %arg1: i32, %arg2: memref<1x8x8x256xf32, #tpu.memory_space<vmem>>, %arg3: memref<1x1x1x256xf32, #tpu.memory_space<vmem>>, %arg4: memref<1x1x1x256xf32, #tpu.memory_space<vmem>>, %arg5: memref<1x8x8x256xf32, #tpu.memory_space<vmem>>, %arg6: memref<1x4x8x128xf32, #tpu.memory_space<vmem>>) attributes {dimension_semantics = [#tpu.dimension_semantics<parallel>, #tpu.dimension_semantics<parallel>], iteration_bounds = array<i64: 2, 2>, scalar_prefetch = 0 : i64, scratch_operands = 0 : i64, tpu.core_type = #tpu.core_type<tc>, window_params = [{transform_indices = @transform_0, window_bounds = array<i64: 1, 8, 8, 256>}, {pipeline_mode = #tpu.pipeline_mode<synchronous>, transform_indices = @transform_1, window_bounds = array<i64: 1, 1, 1, 256>}, {pipeline_mode = #tpu.pipeline_mode<synchronous>, transform_indices = @transform_2, window_bounds = array<i64: 1, 1, 1, 256>}, {transform_indices = @transform_3, window_bounds = array<i64: 1, 8, 8, 256>}, {transform_indices = @transform_4, window_bounds = array<i64: 1, 4, 8, 128>}]} {
    %c0 = arith.constant 0 : index
    %c0_0 = arith.constant 0 : index
    %c0_1 = arith.constant 0 : index
    %c0_2 = arith.constant 0 : index
    %0 = vector.load %arg2[%c0, %c0_0, %c0_1, %c0_2] : memref<1x8x8x256xf32, #tpu.memory_space<vmem>>, vector<1x8x8x256xf32>
    %c0_3 = arith.constant 0 : index
    %c0_4 = arith.constant 0 : index
    %c0_5 = arith.constant 0 : index
    %c0_6 = arith.constant 0 : index
    %1 = vector.load %arg3[%c0_3, %c0_4, %c0_5, %c0_6] : memref<1x1x1x256xf32, #tpu.memory_space<vmem>>, vector<1x1x1x256xf32>
    %2 = vector.broadcast %1 : vector<1x1x1x256xf32> to vector<1x8x8x256xf32>
    %3 = arith.mulf %0, %2 : vector<1x8x8x256xf32>
    %c0_7 = arith.constant 0 : index
    %c0_8 = arith.constant 0 : index
    %c0_9 = arith.constant 0 : index
    %c0_10 = arith.constant 0 : index
    %4 = vector.load %arg4[%c0_7, %c0_8, %c0_9, %c0_10] : memref<1x1x1x256xf32, #tpu.memory_space<vmem>>, vector<1x1x1x256xf32>
    %5 = vector.broadcast %4 : vector<1x1x1x256xf32> to vector<1x8x8x256xf32>
    %6 = arith.addf %3, %5 : vector<1x8x8x256xf32>
    %cst = arith.constant 0.000000e+00 : f32
    %7 = vector.broadcast %cst : f32 to vector<1x8x8x256xf32>
    %8 = arith.maximumf %6, %7 : vector<1x8x8x256xf32>
    %c0_11 = arith.constant 0 : index
    %c0_12 = arith.constant 0 : index
    %c0_13 = arith.constant 0 : index
    %c0_14 = arith.constant 0 : index
    %9 = vector.load %arg5[%c0_11, %c0_12, %c0_13, %c0_14] : memref<1x8x8x256xf32, #tpu.memory_space<vmem>>, vector<1x8x8x256xf32>
    tpu.vector_store %arg5[%c0_11, %c0_12, %c0_13, %c0_14], %8 {strides = array<i32>} : memref<1x8x8x256xf32, #tpu.memory_space<vmem>>, vector<1x8x8x256xf32>,
    %10 = vector.shape_cast %8 : vector<1x8x8x256xf32> to vector<4x2x8x256xf32>
    %11 = vector.extract_strided_slice %10 {offsets = [0, 0, 0, 0], sizes = [4, 1, 8, 256], strides = [1, 1, 1, 1]} : vector<4x2x8x256xf32> to vector<4x1x8x256xf32>
    %12 = vector.shape_cast %11 : vector<4x1x8x256xf32> to vector<4x8x256xf32>
    %13 = vector.extract_strided_slice %10 {offsets = [0, 1, 0, 0], sizes = [4, 1, 8, 256], strides = [1, 1, 1, 1]} : vector<4x2x8x256xf32> to vector<4x1x8x256xf32>
    %14 = vector.shape_cast %13 : vector<4x1x8x256xf32> to vector<4x8x256xf32>
    %15 = arith.maximumf %12, %14 : vector<4x8x256xf32>
    %16 = vector.extract_strided_slice %15 {offsets = [0, 0, 0], sizes = [4, 8, 128], strides = [1, 1, 1]} : vector<4x8x256xf32> to vector<4x8x128xf32>
    %17 = vector.extract_strided_slice %15 {offsets = [0, 0, 128], sizes = [4, 8, 128], strides = [1, 1, 1]} : vector<4x8x256xf32> to vector<4x8x128xf32>
    %18 = arith.maximumf %16, %17 : vector<4x8x128xf32>
    %19 = vector.shape_cast %18 : vector<4x8x128xf32> to vector<1x4x8x128xf32>
    %c0_15 = arith.constant 0 : index
    %c0_16 = arith.constant 0 : index
    %c0_17 = arith.constant 0 : index
    %c0_18 = arith.constant 0 : index
    %20 = vector.load %arg6[%c0_15, %c0_16, %c0_17, %c0_18] : memref<1x4x8x128xf32, #tpu.memory_space<vmem>>, vector<1x4x8x128xf32>
    tpu.vector_store %arg6[%c0_15, %c0_16, %c0_17, %c0_18], %19 {strides = array<i32>} : memref<1x4x8x128xf32, #tpu.memory_space<vmem>>, vector<1x4x8x128xf32>,
    return
  }
  func.func @transform_0(%arg0: i32, %arg1: i32) -> (i32, i32, i32, i32) {
    %c0_i32 = arith.constant 0 : i32
    %c0_i32_0 = arith.constant 0 : i32
    %c0_i32_1 = arith.constant 0 : i32
    return %arg0, %arg1, %c0_i32, %c0_i32_0 : i32, i32, i32, i32
  }
  func.func @transform_1(%arg0: i32, %arg1: i32) -> (i32, i32, i32, i32) {
    %c0_i32 = arith.constant 0 : i32
    %c0_i32_0 = arith.constant 0 : i32
    %c0_i32_1 = arith.constant 0 : i32
    %c0_i32_2 = arith.constant 0 : i32
    %c0_i32_3 = arith.constant 0 : i32
    return %c0_i32, %c0_i32_0, %c0_i32_1, %c0_i32_2 : i32, i32, i32, i32
  }
  func.func @transform_2(%arg0: i32, %arg1: i32) -> (i32, i32, i32, i32) {
    %c0_i32 = arith.constant 0 : i32
    %c0_i32_0 = arith.constant 0 : i32
    %c0_i32_1 = arith.constant 0 : i32
    %c0_i32_2 = arith.constant 0 : i32
    %c0_i32_3 = arith.constant 0 : i32
    return %c0_i32, %c0_i32_0, %c0_i32_1, %c0_i32_2 : i32, i32, i32, i32
  }
  func.func @transform_3(%arg0: i32, %arg1: i32) -> (i32, i32, i32, i32) {
    %c0_i32 = arith.constant 0 : i32
    %c0_i32_0 = arith.constant 0 : i32
    %c0_i32_1 = arith.constant 0 : i32
    return %arg0, %arg1, %c0_i32, %c0_i32_0 : i32, i32, i32, i32
  }
  func.func @transform_4(%arg0: i32, %arg1: i32) -> (i32, i32, i32, i32) {
    %c0_i32 = arith.constant 0 : i32
    %c0_i32_0 = arith.constant 0 : i32
    %c0_i32_1 = arith.constant 0 : i32
    return %arg0, %arg1, %c0_i32, %c0_i32_0 : i32, i32, i32, i32
  }
}

</mosaic_0001>

<llo_original>
// kernel: down_conv_forward.5
$region0: #{down_conv_forward.5}
  #allocation0 [shape = 'u32[]', space=smem, size = 0x4, offset = 0x4, fixed_abs, tag = 'smem constant byte address 0x4 - core index']
  #allocation1 [shape = 'u32[144,128]{1,0:T(1,128)}', space=vmem, size = 0x12000, scoped, tag = 'internal scratch']
  %s0 = inlined_call_operand.vmem [shape: f32[2,16,16,128], index: 0, kind: input, shape index: {}]
  %s1 = inlined_call_operand.vmem [shape: f32[1,1,1,128], index: 1, kind: input, shape index: {}]
  %s2 = inlined_call_operand.vmem [shape: f32[1,1,1,128], index: 2, kind: input, shape index: {}]
  %s3 = inlined_call_operand.vmem [shape: bf16[2,16,16,128], index: 3, kind: output, shape index: {}]
  %s4 = sld [smem:[#allocation0]]
  $region45: #{down_conv_forward.5} parent=0
    _
  %s6 = ssub.s32 1, %s4
  %s7 = scalar_select 0, %s6, %s4
  loop: start=0, step=1, limit=6
  $region2: #{down_conv_forward.5} parent=0 // loop_pre_header
    _
  $region3: #{down_conv_forward.5} parent=0 // loop_header
    %s9 = sphi 0, %s13
    %p10 = scmp.ge.s32.totalorder %s9, 6
    %s16 = sphi 0, %s28
    %s17 = sphi 0, %s24
    %s18 = sphi 0, %s16
    %s19 = sphi 0, %s17
    %s20 = sphi 0, %s18
    %s21 = sphi 0, %s19
    %s33 = sphi 0, %s35
    %s36 = sphi 0, %s33
    %s37 = sphi 0, %s36
    %s53 = sphi 0, %s37
    %s57 = sphi 0, %s57
    %s59 = sphi 0, %s57
    %s60 = sphi 0, %s59
    %s74 = sphi 0, %s60
    %s78 = sphi 0, %s78
    %s80 = sphi 0, %s78
    %s81 = sphi 0, %s80
    %s95 = sphi 0, %s81
    %s103 = sphi 0, %s105
    %s106 = sphi 0, %s103
    %s107 = sphi 0, %s106
    %s123 = sphi 0, %s107
  $region4: #{down_conv_forward.5} parent=0 // loop_header_branch
    %12 = sbr.rel (%p10) target = $region8
  $region5: #{down_conv_forward.5} parent=0 // loop_body
    %s14 = ssub.s32 %s9, 1
    %s15 = ssub.s32 %s9, 2
    %s22 = sadd.s32 1, %s17
    %p23 = scmp.ge.s32.totalorder %s22, 2
    %s24 = scalar_select %p23, 0, %s22
    %s25 = sadd.s32 1, %s16
    %s26 = scalar_select %p23, %s25, %s16
    %p27 = scmp.ge.s32.totalorder %s26, 2
    %s28 = scalar_select %p27, 0, %s26
    %s29 = ssub.s32 %s16, %s28
    %s30 = ssub.s32 %s17, %s24
    %s31 = sor.u32 %s29, %s30
    %p32 = scmp.eq.s32.totalorder %s31, 0
    %s34 = sadd.s32 %s33, 1
    %s35 = scalar_select %p32, %s33, %s34
    %p38 = pneg %p32
    %p39 = scmp.eq.s32.totalorder %s9, 3
    %p40 = por %p38, %p39
    %p41 = scmp.ne.s32.totalorder %s33, %s36
    %p42 = scmp.eq.s32.totalorder %s9, 0
    %p43 = por %p41, %p42
    %p44 = scmp.ne.s32.totalorder %s33, %s36
    %p45 = scmp.eq.s32.totalorder %s14, 3
    %p46 = por %p44, %p45
    %p47 = scmp.ne.s32.totalorder %s36, %s37
    %p48 = scmp.eq.s32.totalorder %s14, 0
    %p49 = por %p47, %p48
    %p50 = scmp.ne.s32.totalorder %s36, %s37
    %p51 = scmp.eq.s32.totalorder %s15, 3
    %p52 = por %p50, %p51
    %p54 = scmp.ne.s32.totalorder %s37, %s53
    %p55 = scmp.eq.s32.totalorder %s15, 0
    %p56 = por %p54, %p55
    %s58 = sadd.s32 %s57, 1
    %p61 = scmp.eq.s32.totalorder %s9, 3
    %p62 = scmp.ne.s32.totalorder %s57, %s59
    %p63 = scmp.eq.s32.totalorder %s9, 0
    %p64 = por %p62, %p63
    %p65 = scmp.ne.s32.totalorder %s57, %s59
    %p66 = scmp.eq.s32.totalorder %s14, 3
    %p67 = por %p65, %p66
    %p68 = scmp.ne.s32.totalorder %s59, %s60
    %p69 = scmp.eq.s32.totalorder %s14, 0
    %p70 = por %p68, %p69
    %p71 = scmp.ne.s32.totalorder %s59, %s60
    %p72 = scmp.eq.s32.totalorder %s15, 3
    %p73 = por %p71, %p72
    %p75 = scmp.ne.s32.totalorder %s60, %s74
    %p76 = scmp.eq.s32.totalorder %s15, 0
    %p77 = por %p75, %p76
    %s79 = sadd.s32 %s78, 1
    %p82 = scmp.eq.s32.totalorder %s9, 3
    %p83 = scmp.ne.s32.totalorder %s78, %s80
    %p84 = scmp.eq.s32.totalorder %s9, 0
    %p85 = por %p83, %p84
    %p86 = scmp.ne.s32.totalorder %s78, %s80
    %p87 = scmp.eq.s32.totalorder %s14, 3
    %p88 = por %p86, %p87
    %p89 = scmp.ne.s32.totalorder %s80, %s81
    %p90 = scmp.eq.s32.totalorder %s14, 0
    %p91 = por %p89, %p90
    %p92 = scmp.ne.s32.totalorder %s80, %s81
    %p93 = scmp.eq.s32.totalorder %s15, 3
    %p94 = por %p92, %p93
    %p96 = scmp.ne.s32.totalorder %s81, %s95
    %p97 = scmp.eq.s32.totalorder %s15, 0
    %p98 = por %p96, %p97
    %s99 = ssub.s32 %s16, %s28
    %s100 = ssub.s32 %s17, %s24
    %s101 = sor.u32 %s99, %s100
    %p102 = scmp.eq.s32.totalorder %s101, 0
    %s104 = sadd.s32 %s103, 1
    %s105 = scalar_select %p102, %s103, %s104
    %p108 = pneg %p102
    %p109 = scmp.eq.s32.totalorder %s9, 3
    %p110 = por %p108, %p109
    %p111 = scmp.ne.s32.totalorder %s103, %s106
    %p112 = scmp.eq.s32.totalorder %s9, 0
    %p113 = por %p111, %p112
    %p114 = scmp.ne.s32.totalorder %s103, %s106
    %p115 = scmp.eq.s32.totalorder %s14, 3
    %p116 = por %p114, %p115
    %p117 = scmp.ne.s32.totalorder %s106, %s107
    %p118 = scmp.eq.s32.totalorder %s14, 0
    %p119 = por %p117, %p118
    %p120 = scmp.ne.s32.totalorder %s106, %s107
    %p121 = scmp.eq.s32.totalorder %s15, 3
    %p122 = por %p120, %p121
    %p124 = scmp.ne.s32.totalorder %s107, %s123
    %p125 = scmp.eq.s32.totalorder %s15, 0
    %p126 = por %p124, %p125
    %p127 = scmp.le.s32.totalorder 1, %s9
    %p128 = scmp.lt.s32.totalorder %s9, 5
    %p129 = pnand %p127, %p128
    %p130 = pneg %p129
    // Predicated region
    $region9: #{down_conv_forward.5} parent=5 // pred_check
      _
    $region10: #{down_conv_forward.5} parent=5 // pred_check_branch
      %132 = sbr.rel (%p129) target = $region12
    $region11: #{down_conv_forward.5} parent=5 // pred_region
      %s133 = ssub.s32 %s9, 1
      // Predicated region
      $region13: #{down_conv_forward.5} parent=11 // pred_check
        %p134 = pneg %p70
      $region14: #{down_conv_forward.5} parent=11 // pred_check_branch
        %136 = sbr.rel (%p134) target = $region16
      $region15: #{down_conv_forward.5} parent=11 // pred_region
        _
      $region16: #{down_conv_forward.5} parent=11 // pred_fallthru
        _
      // Predicated region
      $region17: #{down_conv_forward.5} parent=11 // pred_check
        %p137 = pneg %p91
      $region18: #{down_conv_forward.5} parent=11 // pred_check_branch
        %139 = sbr.rel (%p137) target = $region20
      $region19: #{down_conv_forward.5} parent=11 // pred_region
        _
      $region20: #{down_conv_forward.5} parent=11 // pred_fallthru
        _
    $region12: #{down_conv_forward.5} parent=5 // pred_fallthru
      _
    %p140 = scmp.lt.s32.totalorder %s9, 4
    // Predicated region
    $region21: #{down_conv_forward.5} parent=5 // pred_check
      %p141 = pneg %p140
    $region22: #{down_conv_forward.5} parent=5 // pred_check_branch
      %143 = sbr.rel (%p141) target = $region24
    $region23: #{down_conv_forward.5} parent=5 // pred_region
      // Predicated region
      $region25: #{down_conv_forward.5} parent=23 // pred_check
        %p144 = pneg %p43
      $region26: #{down_conv_forward.5} parent=23 // pred_check_branch
        %146 = sbr.rel (%p144) target = $region28
      $region27: #{down_conv_forward.5} parent=23 // pred_region
        %s147 = smul.u32 8, %s17
        %p148 = scmp.lt.s32.totalorder %s16, 1
        %s149 = scalar_select %p148, %s16, 1
        %p150 = scmp.lt.s32.totalorder %s147, 15
        %s151 = scalar_select %p150, %s147, 15
        %s152 = smul.addr %s151, 2
        %s153 = smul.addr %s149, 32
        %s154 = sadd.s32 %s152, %s153
        %s155 = smul.addr %s154, 8
        %s156 = scalar_lea.vmem %s0, %s155
        %s157 = smul.u32 8, %s17
      $region28: #{down_conv_forward.5} parent=23 // pred_fallthru
        _
    $region24: #{down_conv_forward.5} parent=5 // pred_fallthru
      _
    %p158 = scmp.le.s32.totalorder 1, %s9
    %p159 = scmp.lt.s32.totalorder %s9, 5
    %p160 = pnand %p158, %p159
    %p161 = pneg %p160
    // Predicated region
    $region29: #{down_conv_forward.5} parent=5 // pred_check
      _
    $region30: #{down_conv_forward.5} parent=5 // pred_check_branch
      %163 = sbr.rel (%p160) target = $region32
    $region31: #{down_conv_forward.5} parent=5 // pred_region
      %s164 = ssub.s32 %s9, 1
      %s165 = smul.u32 8, %s19
      %p166 = scmp.lt.s32.totalorder %s18, 1
      %s167 = scalar_select %p166, %s18, 1
      %p168 = scmp.lt.s32.totalorder %s165, 15
      %s169 = scalar_select %p168, %s165, 15
      %s170 = smul.addr %s169, 2
      %s171 = smul.addr %s167, 32
      %s172 = sadd.s32 %s170, %s171
      %s173 = smul.addr %s172, 8
      %s174 = scalar_lea.vmem %s0, %s173
      %p175 = pneg %p49
      %p176 = pneg %p46
      %p177 = pneg %p70
      %p178 = pneg %p67
      %p179 = pneg %p91
      %p180 = pneg %p88
      %p181 = pneg %p119
      %p182 = pneg %p116
      %s183 = smul.u32 8, %s19
      %p184 = scmp.lt.s32.totalorder %s18, 1
      %s185 = scalar_select %p184, %s18, 1
      %p186 = scmp.lt.s32.totalorder %s183, 15
      %s187 = scalar_select %p186, %s183, 15
      %s188 = smul.addr %s187, 2
      %s189 = smul.addr %s185, 32
      %s190 = sadd.s32 %s188, %s189
      %s191 = smul.addr %s190, 4
      %s192 = scalar_lea.vmem %s3, %s191
      %s193 = smul.u32 8, %s19
      %p194 = scmp.lt.s32.totalorder %s18, 1
      %s195 = scalar_select %p194, %s18, 1
      %p196 = scmp.lt.s32.totalorder %s193, 15
      %s197 = scalar_select %p196, %s193, 15
      %s198 = smul.addr %s197, 2
      %s199 = smul.addr %s195, 32
      %s200 = sadd.s32 %s198, %s199
      %s201 = smul.addr %s200, 8
      %s202 = scalar_lea.vmem %s0, %s201
      %s203 = smul.u32 8, %s19
      %s204 = smul.u32 8, %s19
      %p205 = scmp.lt.s32.totalorder %s18, 1
      %s206 = scalar_select %p205, %s18, 1
      %p207 = scmp.lt.s32.totalorder %s204, 15
      %s208 = scalar_select %p207, %s204, 15
      %s209 = smul.addr %s208, 2
      %s210 = smul.addr %s206, 32
      %s211 = sadd.s32 %s209, %s210
      %s212 = smul.addr %s211, 4
      %s213 = scalar_lea.vmem %s3, %s212
      %s214 = smul.u32 8, %s19
      %v215 = vld [vmem:[%s202] sm:$0xff]
      %v216 = vld [vmem:[%s202 + $0x8] sm:$0xff]
      %v217 = vld [vmem:[%s202 + $0x10] sm:$0xff]
      %v218 = vld [vmem:[%s202 + $0x18] sm:$0xff]
      %v219 = vld [vmem:[%s202 + $0x20] sm:$0xff]
      %v220 = vld [vmem:[%s202 + $0x28] sm:$0xff]
      %v221 = vld [vmem:[%s202 + $0x30] sm:$0xff]
      %v222 = vld [vmem:[%s202 + $0x38] sm:$0xff]
      %v223 = vld [vmem:[%s202 + $0x40] sm:$0xff]
      %v224 = vld [vmem:[%s202 + $0x48] sm:$0xff]
      %v225 = vld [vmem:[%s202 + $0x50] sm:$0xff]
      %v226 = vld [vmem:[%s202 + $0x58] sm:$0xff]
      %v227 = vld [vmem:[%s202 + $0x60] sm:$0xff]
      %v228 = vld [vmem:[%s202 + $0x68] sm:$0xff]
      %v229 = vld [vmem:[%s202 + $0x70] sm:$0xff]
      %v230 = vld [vmem:[%s202 + $0x78] sm:$0xff]
      %v231 = vld [vmem:[%s1] sm:$0x1]
      %v233 = vlaneseq
      %v234 = vshrl.u32 %v233, 7
      %v235 = vsub.s32 0, %v234
      %v236 = vrot.slane %v231, %v235
      %v238 = vmul.f32 %v215, %v236
      %v239 = vmul.f32 %v216, %v236
      %v240 = vmul.f32 %v217, %v236
      %v241 = vmul.f32 %v218, %v236
      %v242 = vmul.f32 %v219, %v236
      %v243 = vmul.f32 %v220, %v236
      %v244 = vmul.f32 %v221, %v236
      %v245 = vmul.f32 %v222, %v236
      %v246 = vmul.f32 %v223, %v236
      %v247 = vmul.f32 %v224, %v236
      %v248 = vmul.f32 %v225, %v236
      %v249 = vmul.f32 %v226, %v236
      %v250 = vmul.f32 %v227, %v236
      %v251 = vmul.f32 %v228, %v236
      %v252 = vmul.f32 %v229, %v236
      %v253 = vmul.f32 %v230, %v236
      %v254 = vld [vmem:[%s2] sm:$0x1]
      %v256 = vlaneseq
      %v257 = vshrl.u32 %v256, 7
      %v258 = vsub.s32 0, %v257
      %v259 = vrot.slane %v254, %v258
      %v261 = vadd.f32 %v238, %v259
      %v262 = vadd.f32 %v239, %v259
      %v263 = vadd.f32 %v240, %v259
      %v264 = vadd.f32 %v241, %v259
      %v265 = vadd.f32 %v242, %v259
      %v266 = vadd.f32 %v243, %v259
      %v267 = vadd.f32 %v244, %v259
      %v268 = vadd.f32 %v245, %v259
      %v269 = vadd.f32 %v246, %v259
      %v270 = vadd.f32 %v247, %v259
      %v271 = vadd.f32 %v248, %v259
      %v272 = vadd.f32 %v249, %v259
      %v273 = vadd.f32 %v250, %v259
      %v274 = vadd.f32 %v251, %v259
      %v275 = vadd.f32 %v252, %v259
      %v276 = vadd.f32 %v253, %v259
      %v277 = vmax.f32 %v261, 0.0
      %v278 = vmax.f32 %v262, 0.0
      %v279 = vmax.f32 %v263, 0.0
      %v280 = vmax.f32 %v264, 0.0
      %v281 = vmax.f32 %v265, 0.0
      %v282 = vmax.f32 %v266, 0.0
      %v283 = vmax.f32 %v267, 0.0
      %v284 = vmax.f32 %v268, 0.0
      %v285 = vmax.f32 %v269, 0.0
      %v286 = vmax.f32 %v270, 0.0
      %v287 = vmax.f32 %v271, 0.0
      %v288 = vmax.f32 %v272, 0.0
      %v289 = vmax.f32 %v273, 0.0
      %v290 = vmax.f32 %v274, 0.0
      %v291 = vmax.f32 %v275, 0.0
      %v292 = vmax.f32 %v276, 0.0
      %v293 = vpack.c.bf16 %v278, %v277
      %v294 = vpack.c.bf16 %v280, %v279
      %v295 = vpack.c.bf16 %v282, %v281
      %v296 = vpack.c.bf16 %v284, %v283
      %v297 = vpack.c.bf16 %v286, %v285
      %v298 = vpack.c.bf16 %v288, %v287
      %v299 = vpack.c.bf16 %v290, %v289
      %v300 = vpack.c.bf16 %v292, %v291
      %v309 = vunpack.c.l.b16 %v293
      %v310 = vunpack.c.h.b16 %v293
      %v311 = vunpack.c.l.b16 %v294
      %v312 = vunpack.c.h.b16 %v294
      %v313 = vunpack.c.l.b16 %v295
      %v314 = vunpack.c.h.b16 %v295
      %v315 = vunpack.c.l.b16 %v296
      %v316 = vunpack.c.h.b16 %v296
      %v317 = vunpack.c.l.b16 %v297
      %v318 = vunpack.c.h.b16 %v297
      %v319 = vunpack.c.l.b16 %v298
      %v320 = vunpack.c.h.b16 %v298
      %v321 = vunpack.c.l.b16 %v299
      %v322 = vunpack.c.h.b16 %v299
      %v323 = vunpack.c.l.b16 %v300
      %v324 = vunpack.c.h.b16 %v300
      %v325 = vpack.c.b16 %v309, %v309
      %v326 = vpack.c.b16 %v310, %v310
      %v327 = vpack.c.b16 %v311, %v311
      %v328 = vpack.c.b16 %v312, %v312
      %v329 = vpack.c.b16 %v313, %v313
      %v330 = vpack.c.b16 %v314, %v314
      %v331 = vpack.c.b16 %v315, %v315
      %v332 = vpack.c.b16 %v316, %v316
      %v333 = vpack.c.b16 %v317, %v317
      %v334 = vpack.c.b16 %v318, %v318
      %v335 = vpack.c.b16 %v319, %v319
      %v336 = vpack.c.b16 %v320, %v320
      %v337 = vpack.c.b16 %v321, %v321
      %v338 = vpack.c.b16 %v322, %v322
      %v339 = vpack.c.b16 %v323, %v323
      %v340 = vpack.c.b16 %v324, %v324
      %357 = vst [vmem:[%s213] sm:$0xf] %v325
      %358 = vst [vmem:[%s213 + $0x4] sm:$0xf] %v326
      %359 = vst [vmem:[%s213 + $0x8] sm:$0xf] %v327
      %360 = vst [vmem:[%s213 + $0xc] sm:$0xf] %v328
      %361 = vst [vmem:[%s213 + $0x10] sm:$0xf] %v329
      %362 = vst [vmem:[%s213 + $0x14] sm:$0xf] %v330
      %363 = vst [vmem:[%s213 + $0x18] sm:$0xf] %v331
      %364 = vst [vmem:[%s213 + $0x1c] sm:$0xf] %v332
      %365 = vst [vmem:[%s213 + $0x20] sm:$0xf] %v333
      %366 = vst [vmem:[%s213 + $0x24] sm:$0xf] %v334
      %367 = vst [vmem:[%s213 + $0x28] sm:$0xf] %v335
      %368 = vst [vmem:[%s213 + $0x2c] sm:$0xf] %v336
      %369 = vst [vmem:[%s213 + $0x30] sm:$0xf] %v337
      %370 = vst [vmem:[%s213 + $0x34] sm:$0xf] %v338
      %371 = vst [vmem:[%s213 + $0x38] sm:$0xf] %v339
      %372 = vst [vmem:[%s213 + $0x3c] sm:$0xf] %v340
      %s373 = smul.u32 8, %s19
      %p374 = scmp.lt.s32.totalorder %s18, 1
      %s375 = scalar_select %p374, %s18, 1
      %p376 = scmp.lt.s32.totalorder %s373, 15
      %s377 = scalar_select %p376, %s373, 15
      %s378 = smul.addr %s377, 2
      %s379 = smul.addr %s375, 32
      %s380 = sadd.s32 %s378, %s379
      %s381 = smul.addr %s380, 4
      %s382 = scalar_lea.vmem %s3, %s381
      // Predicated region
      $region33: #{down_conv_forward.5} parent=31 // pred_check
        %p383 = pneg %p116
      $region34: #{down_conv_forward.5} parent=31 // pred_check_branch
        %385 = sbr.rel (%p383) target = $region36
      $region35: #{down_conv_forward.5} parent=31 // pred_region
        %s386 = smul.u32 8, %s19
      $region36: #{down_conv_forward.5} parent=31 // pred_fallthru
        _
    $region32: #{down_conv_forward.5} parent=5 // pred_fallthru
      _
    %p387 = scmp.le.s32.totalorder 2, %s9
    // Predicated region
    $region37: #{down_conv_forward.5} parent=5 // pred_check
      %p388 = pneg %p387
    $region38: #{down_conv_forward.5} parent=5 // pred_check_branch
      %390 = sbr.rel (%p388) target = $region40
    $region39: #{down_conv_forward.5} parent=5 // pred_region
      %s391 = ssub.s32 %s9, 2
      // Predicated region
      $region41: #{down_conv_forward.5} parent=39 // pred_check
        %p392 = pneg %p122
      $region42: #{down_conv_forward.5} parent=39 // pred_check_branch
        %394 = sbr.rel (%p392) target = $region44
      $region43: #{down_conv_forward.5} parent=39 // pred_region
        %s395 = smul.u32 8, %s21
        %p396 = scmp.lt.s32.totalorder %s20, 1
        %s397 = scalar_select %p396, %s20, 1
        %p398 = scmp.lt.s32.totalorder %s395, 15
        %s399 = scalar_select %p398, %s395, 15
        %s400 = smul.addr %s399, 2
        %s401 = smul.addr %s397, 32
        %s402 = sadd.s32 %s400, %s401
        %s403 = smul.addr %s402, 4
        %s404 = scalar_lea.vmem %s3, %s403
      $region44: #{down_conv_forward.5} parent=39 // pred_fallthru
        _
    $region40: #{down_conv_forward.5} parent=5 // pred_fallthru
      _
  $region6: #{down_conv_forward.5} parent=0 // loop_footer
    %s13 = sadd.s32 1, %s9
  $region7: #{down_conv_forward.5} parent=0 // loop_footer_branch
    %8 = sbr.rel target = $region3
  $region8: #{down_conv_forward.5} parent=0 // loop_exit
    _

// kernel: down_conv_forward.7
$region0: #{down_conv_forward.7}
  #allocation0 [shape = 'u32[]', space=smem, size = 0x4, offset = 0x4, fixed_abs, tag = 'smem constant byte address 0x4 - core index']
  #allocation1 [shape = 'u32[144,128]{1,0:T(1,128)}', space=vmem, size = 0x12000, scoped, tag = 'internal scratch']
  %s0 = inlined_call_operand.vmem [shape: f32[2,16,8,256], index: 0, kind: input, shape index: {}]
  %s1 = inlined_call_operand.vmem [shape: f32[1,1,1,256], index: 1, kind: input, shape index: {}]
  %s2 = inlined_call_operand.vmem [shape: f32[1,1,1,256], index: 2, kind: input, shape index: {}]
  %s3 = inlined_call_operand.vmem [shape: f32[2,16,8,256], index: 3, kind: output, shape index: {0}]
  %s4 = inlined_call_operand.vmem [shape: f32[2,8,8,128], index: 4, kind: output, shape index: {1}]
  %5 = xla_tuple %s3, %s4
  %s6 = sld [smem:[#allocation0]]
  $region53: #{down_conv_forward.7} parent=0
    _
  %s8 = ssub.s32 1, %s6
  %s9 = scalar_select 0, %s8, %s6
  loop: start=0, step=1, limit=6
  $region2: #{down_conv_forward.7} parent=0 // loop_pre_header
    _
  $region3: #{down_conv_forward.7} parent=0 // loop_header
    %s11 = sphi 0, %s15
    %p12 = scmp.ge.s32.totalorder %s11, 6
    %s18 = sphi 0, %s30
    %s19 = sphi 0, %s26
    %s20 = sphi 0, %s18
    %s21 = sphi 0, %s19
    %s22 = sphi 0, %s20
    %s23 = sphi 0, %s21
    %s35 = sphi 0, %s37
    %s38 = sphi 0, %s35
    %s39 = sphi 0, %s38
    %s55 = sphi 0, %s39
    %s59 = sphi 0, %s59
    %s61 = sphi 0, %s59
    %s62 = sphi 0, %s61
    %s76 = sphi 0, %s62
    %s80 = sphi 0, %s80
    %s82 = sphi 0, %s80
    %s83 = sphi 0, %s82
    %s97 = sphi 0, %s83
    %s105 = sphi 0, %s107
    %s108 = sphi 0, %s105
    %s109 = sphi 0, %s108
    %s125 = sphi 0, %s109
    %s133 = sphi 0, %s135
    %s136 = sphi 0, %s133
    %s137 = sphi 0, %s136
    %s153 = sphi 0, %s137
  $region4: #{down_conv_forward.7} parent=0 // loop_header_branch
    %14 = sbr.rel (%p12) target = $region8
  $region5: #{down_conv_forward.7} parent=0 // loop_body
    %s16 = ssub.s32 %s11, 1
    %s17 = ssub.s32 %s11, 2
    %s24 = sadd.s32 1, %s19
    %p25 = scmp.ge.s32.totalorder %s24, 2
    %s26 = scalar_select %p25, 0, %s24
    %s27 = sadd.s32 1, %s18
    %s28 = scalar_select %p25, %s27, %s18
    %p29 = scmp.ge.s32.totalorder %s28, 2
    %s30 = scalar_select %p29, 0, %s28
    %s31 = ssub.s32 %s18, %s30
    %s32 = ssub.s32 %s19, %s26
    %s33 = sor.u32 %s31, %s32
    %p34 = scmp.eq.s32.totalorder %s33, 0
    %s36 = sadd.s32 %s35, 1
    %s37 = scalar_select %p34, %s35, %s36
    %p40 = pneg %p34
    %p41 = scmp.eq.s32.totalorder %s11, 3
    %p42 = por %p40, %p41
    %p43 = scmp.ne.s32.totalorder %s35, %s38
    %p44 = scmp.eq.s32.totalorder %s11, 0
    %p45 = por %p43, %p44
    %p46 = scmp.ne.s32.totalorder %s35, %s38
    %p47 = scmp.eq.s32.totalorder %s16, 3
    %p48 = por %p46, %p47
    %p49 = scmp.ne.s32.totalorder %s38, %s39
    %p50 = scmp.eq.s32.totalorder %s16, 0
    %p51 = por %p49, %p50
    %p52 = scmp.ne.s32.totalorder %s38, %s39
    %p53 = scmp.eq.s32.totalorder %s17, 3
    %p54 = por %p52, %p53
    %p56 = scmp.ne.s32.totalorder %s39, %s55
    %p57 = scmp.eq.s32.totalorder %s17, 0
    %p58 = por %p56, %p57
    %s60 = sadd.s32 %s59, 1
    %p63 = scmp.eq.s32.totalorder %s11, 3
    %p64 = scmp.ne.s32.totalorder %s59, %s61
    %p65 = scmp.eq.s32.totalorder %s11, 0
    %p66 = por %p64, %p65
    %p67 = scmp.ne.s32.totalorder %s59, %s61
    %p68 = scmp.eq.s32.totalorder %s16, 3
    %p69 = por %p67, %p68
    %p70 = scmp.ne.s32.totalorder %s61, %s62
    %p71 = scmp.eq.s32.totalorder %s16, 0
    %p72 = por %p70, %p71
    %p73 = scmp.ne.s32.totalorder %s61, %s62
    %p74 = scmp.eq.s32.totalorder %s17, 3
    %p75 = por %p73, %p74
    %p77 = scmp.ne.s32.totalorder %s62, %s76
    %p78 = scmp.eq.s32.totalorder %s17, 0
    %p79 = por %p77, %p78
    %s81 = sadd.s32 %s80, 1
    %p84 = scmp.eq.s32.totalorder %s11, 3
    %p85 = scmp.ne.s32.totalorder %s80, %s82
    %p86 = scmp.eq.s32.totalorder %s11, 0
    %p87 = por %p85, %p86
    %p88 = scmp.ne.s32.totalorder %s80, %s82
    %p89 = scmp.eq.s32.totalorder %s16, 3
    %p90 = por %p88, %p89
    %p91 = scmp.ne.s32.totalorder %s82, %s83
    %p92 = scmp.eq.s32.totalorder %s16, 0
    %p93 = por %p91, %p92
    %p94 = scmp.ne.s32.totalorder %s82, %s83
    %p95 = scmp.eq.s32.totalorder %s17, 3
    %p96 = por %p94, %p95
    %p98 = scmp.ne.s32.totalorder %s83, %s97
    %p99 = scmp.eq.s32.totalorder %s17, 0
    %p100 = por %p98, %p99
    %s101 = ssub.s32 %s18, %s30
    %s102 = ssub.s32 %s19, %s26
    %s103 = sor.u32 %s101, %s102
    %p104 = scmp.eq.s32.totalorder %s103, 0
    %s106 = sadd.s32 %s105, 1
    %s107 = scalar_select %p104, %s105, %s106
    %p110 = pneg %p104
    %p111 = scmp.eq.s32.totalorder %s11, 3
    %p112 = por %p110, %p111
    %p113 = scmp.ne.s32.totalorder %s105, %s108
    %p114 = scmp.eq.s32.totalorder %s11, 0
    %p115 = por %p113, %p114
    %p116 = scmp.ne.s32.totalorder %s105, %s108
    %p117 = scmp.eq.s32.totalorder %s16, 3
    %p118 = por %p116, %p117
    %p119 = scmp.ne.s32.totalorder %s108, %s109
    %p120 = scmp.eq.s32.totalorder %s16, 0
    %p121 = por %p119, %p120
    %p122 = scmp.ne.s32.totalorder %s108, %s109
    %p123 = scmp.eq.s32.totalorder %s17, 3
    %p124 = por %p122, %p123
    %p126 = scmp.ne.s32.totalorder %s109, %s125
    %p127 = scmp.eq.s32.totalorder %s17, 0
    %p128 = por %p126, %p127
    %s129 = ssub.s32 %s18, %s30
    %s130 = ssub.s32 %s19, %s26
    %s131 = sor.u32 %s129, %s130
    %p132 = scmp.eq.s32.totalorder %s131, 0
    %s134 = sadd.s32 %s133, 1
    %s135 = scalar_select %p132, %s133, %s134
    %p138 = pneg %p132
    %p139 = scmp.eq.s32.totalorder %s11, 3
    %p140 = por %p138, %p139
    %p141 = scmp.ne.s32.totalorder %s133, %s136
    %p142 = scmp.eq.s32.totalorder %s11, 0
    %p143 = por %p141, %p142
    %p144 = scmp.ne.s32.totalorder %s133, %s136
    %p145 = scmp.eq.s32.totalorder %s16, 3
    %p146 = por %p144, %p145
    %p147 = scmp.ne.s32.totalorder %s136, %s137
    %p148 = scmp.eq.s32.totalorder %s16, 0
    %p149 = por %p147, %p148
    %p150 = scmp.ne.s32.totalorder %s136, %s137
    %p151 = scmp.eq.s32.totalorder %s17, 3
    %p152 = por %p150, %p151
    %p154 = scmp.ne.s32.totalorder %s137, %s153
    %p155 = scmp.eq.s32.totalorder %s17, 0
    %p156 = por %p154, %p155
    %p157 = scmp.le.s32.totalorder 1, %s11
    %p158 = scmp.lt.s32.totalorder %s11, 5
    %p159 = pnand %p157, %p158
    %p160 = pneg %p159
    // Predicated region
    $region9: #{down_conv_forward.7} parent=5 // pred_check
      _
    $region10: #{down_conv_forward.7} parent=5 // pred_check_branch
      %162 = sbr.rel (%p159) target = $region12
    $region11: #{down_conv_forward.7} parent=5 // pred_region
      %s163 = ssub.s32 %s11, 1
      // Predicated region
      $region13: #{down_conv_forward.7} parent=11 // pred_check
        %p164 = pneg %p72
      $region14: #{down_conv_forward.7} parent=11 // pred_check_branch
        %166 = sbr.rel (%p164) target = $region16
      $region15: #{down_conv_forward.7} parent=11 // pred_region
        _
      $region16: #{down_conv_forward.7} parent=11 // pred_fallthru
        _
      // Predicated region
      $region17: #{down_conv_forward.7} parent=11 // pred_check
        %p167 = pneg %p93
      $region18: #{down_conv_forward.7} parent=11 // pred_check_branch
        %169 = sbr.rel (%p167) target = $region20
      $region19: #{down_conv_forward.7} parent=11 // pred_region
        _
      $region20: #{down_conv_forward.7} parent=11 // pred_fallthru
        _
    $region12: #{down_conv_forward.7} parent=5 // pred_fallthru
      _
    %p170 = scmp.lt.s32.totalorder %s11, 4
    // Predicated region
    $region21: #{down_conv_forward.7} parent=5 // pred_check
      %p171 = pneg %p170
    $region22: #{down_conv_forward.7} parent=5 // pred_check_branch
      %173 = sbr.rel (%p171) target = $region24
    $region23: #{down_conv_forward.7} parent=5 // pred_region
      // Predicated region
      $region25: #{down_conv_forward.7} parent=23 // pred_check
        %p174 = pneg %p45
      $region26: #{down_conv_forward.7} parent=23 // pred_check_branch
        %176 = sbr.rel (%p174) target = $region28
      $region27: #{down_conv_forward.7} parent=23 // pred_region
        %s177 = smul.u32 8, %s19
        %p178 = scmp.lt.s32.totalorder %s18, 1
        %s179 = scalar_select %p178, %s18, 1
        %p180 = scmp.lt.s32.totalorder %s177, 15
        %s181 = scalar_select %p180, %s177, 15
        %s182 = smul.addr %s181, 2
        %s183 = smul.addr %s179, 32
        %s184 = sadd.s32 %s182, %s183
        %s185 = smul.addr %s184, 8
        %s186 = scalar_lea.vmem %s0, %s185
        %s187 = smul.u32 8, %s19
      $region28: #{down_conv_forward.7} parent=23 // pred_fallthru
        _
    $region24: #{down_conv_forward.7} parent=5 // pred_fallthru
      _
    %p188 = scmp.le.s32.totalorder 1, %s11
    %p189 = scmp.lt.s32.totalorder %s11, 5
    %p190 = pnand %p188, %p189
    %p191 = pneg %p190
    // Predicated region
    $region29: #{down_conv_forward.7} parent=5 // pred_check
      _
    $region30: #{down_conv_forward.7} parent=5 // pred_check_branch
      %193 = sbr.rel (%p190) target = $region32
    $region31: #{down_conv_forward.7} parent=5 // pred_region
      %s194 = ssub.s32 %s11, 1
      %s195 = smul.u32 8, %s21
      %p196 = scmp.lt.s32.totalorder %s20, 1
      %s197 = scalar_select %p196, %s20, 1
      %p198 = scmp.lt.s32.totalorder %s195, 15
      %s199 = scalar_select %p198, %s195, 15
      %s200 = smul.addr %s199, 2
      %s201 = smul.addr %s197, 32
      %s202 = sadd.s32 %s200, %s201
      %s203 = smul.addr %s202, 8
      %s204 = scalar_lea.vmem %s0, %s203
      %p205 = pneg %p51
      %p206 = pneg %p48
      %p207 = pneg %p72
      %p208 = pneg %p69
      %p209 = pneg %p93
      %p210 = pneg %p90
      %p211 = pneg %p121
      %p212 = pneg %p118
      %s213 = smul.u32 8, %s21
      %p214 = scmp.lt.s32.totalorder %s20, 1
      %s215 = scalar_select %p214, %s20, 1
      %p216 = scmp.lt.s32.totalorder %s213, 15
      %s217 = scalar_select %p216, %s213, 15
      %s218 = smul.addr %s217, 2
      %s219 = smul.addr %s215, 32
      %s220 = sadd.s32 %s218, %s219
      %s221 = smul.addr %s220, 8
      %s222 = scalar_lea.vmem %s3, %s221
      %p223 = pneg %p149
      %p224 = pneg %p146
      %s225 = smul.u32 4, %s21
      %p226 = scmp.lt.s32.totalorder %s20, 1
      %s227 = scalar_select %p226, %s20, 1
      %p228 = scmp.lt.s32.totalorder %s225, 7
      %s229 = scalar_select %p228, %s225, 7
      %s230 = smul.addr %s227, 8
      %s231 = sadd.s32 %s229, %s230
      %s232 = smul.addr %s231, 8
      %s233 = scalar_lea.vmem %s4, %s232
      %s234 = smul.u32 8, %s21
      %p235 = scmp.lt.s32.totalorder %s20, 1
      %s236 = scalar_select %p235, %s20, 1
      %p237 = scmp.lt.s32.totalorder %s234, 15
      %s238 = scalar_select %p237, %s234, 15
      %s239 = smul.addr %s238, 2
      %s240 = smul.addr %s236, 32
      %s241 = sadd.s32 %s239, %s240
      %s242 = smul.addr %s241, 8
      %s243 = scalar_lea.vmem %s0, %s242
      %s244 = smul.u32 8, %s21
      %s245 = smul.u32 8, %s21
      %p246 = scmp.lt.s32.totalorder %s20, 1
      %s247 = scalar_select %p246, %s20, 1
      %p248 = scmp.lt.s32.totalorder %s245, 15
      %s249 = scalar_select %p248, %s245, 15
      %s250 = smul.addr %s249, 2
      %s251 = smul.addr %s247, 32
      %s252 = sadd.s32 %s250, %s251
      %s253 = smul.addr %s252, 8
      %s254 = scalar_lea.vmem %s3, %s253
      %s255 = smul.u32 8, %s21
      %s256 = smul.u32 4, %s21
      %p257 = scmp.lt.s32.totalorder %s20, 1
      %s258 = scalar_select %p257, %s20, 1
      %p259 = scmp.lt.s32.totalorder %s256, 7
      %s260 = scalar_select %p259, %s256, 7
      %s261 = smul.addr %s258, 8
      %s262 = sadd.s32 %s260, %s261
      %s263 = smul.addr %s262, 8
      %s264 = scalar_lea.vmem %s4, %s263
      %s265 = smul.u32 4, %s21
      %v266 = vld [vmem:[%s243] sm:$0xff]
      %v267 = vld [vmem:[%s243 + $0x8] sm:$0xff]
      %v268 = vld [vmem:[%s243 + $0x10] sm:$0xff]
      %v269 = vld [vmem:[%s243 + $0x18] sm:$0xff]
      %v270 = vld [vmem:[%s243 + $0x20] sm:$0xff]
      %v271 = vld [vmem:[%s243 + $0x28] sm:$0xff]
      %v272 = vld [vmem:[%s243 + $0x30] sm:$0xff]
      %v273 = vld [vmem:[%s243 + $0x38] sm:$0xff]
      %v274 = vld [vmem:[%s243 + $0x40] sm:$0xff]
      %v275 = vld [vmem:[%s243 + $0x48] sm:$0xff]
      %v276 = vld [vmem:[%s243 + $0x50] sm:$0xff]
      %v277 = vld [vmem:[%s243 + $0x58] sm:$0xff]
      %v278 = vld [vmem:[%s243 + $0x60] sm:$0xff]
      %v279 = vld [vmem:[%s243 + $0x68] sm:$0xff]
      %v280 = vld [vmem:[%s243 + $0x70] sm:$0xff]
      %v281 = vld [vmem:[%s243 + $0x78] sm:$0xff]
      %v282 = vld [vmem:[%s1] sm:$0x3]
      %v284 = vlaneseq
      %v285 = vshrl.u32 %v284, 7
      %v286 = vsub.s32 0, %v285
      %v287 = vrot.slane %v282, %v286
      %v288 = vlaneseq
      %v289 = vshrl.u32 %v288, 7
      %v290 = vsub.s32 1, %v289
      %v291 = vrot.slane %v282, %v290
      %v294 = vmul.f32 %v266, %v287
      %v295 = vmul.f32 %v267, %v291
      %v296 = vmul.f32 %v268, %v287
      %v297 = vmul.f32 %v269, %v291
      %v298 = vmul.f32 %v270, %v287
      %v299 = vmul.f32 %v271, %v291
      %v300 = vmul.f32 %v272, %v287
      %v301 = vmul.f32 %v273, %v291
      %v302 = vmul.f32 %v274, %v287
      %v303 = vmul.f32 %v275, %v291
      %v304 = vmul.f32 %v276, %v287
      %v305 = vmul.f32 %v277, %v291
      %v306 = vmul.f32 %v278, %v287
      %v307 = vmul.f32 %v279, %v291
      %v308 = vmul.f32 %v280, %v287
      %v309 = vmul.f32 %v281, %v291
      %v310 = vld [vmem:[%s2] sm:$0x3]
      %v312 = vlaneseq
      %v313 = vshrl.u32 %v312, 7
      %v314 = vsub.s32 0, %v313
      %v315 = vrot.slane %v310, %v314
      %v316 = vlaneseq
      %v317 = vshrl.u32 %v316, 7
      %v318 = vsub.s32 1, %v317
      %v319 = vrot.slane %v310, %v318
      %v322 = vadd.f32 %v294, %v315
      %v323 = vadd.f32 %v295, %v319
      %v324 = vadd.f32 %v296, %v315
      %v325 = vadd.f32 %v297, %v319
      %v326 = vadd.f32 %v298, %v315
      %v327 = vadd.f32 %v299, %v319
      %v328 = vadd.f32 %v300, %v315
      %v329 = vadd.f32 %v301, %v319
      %v330 = vadd.f32 %v302, %v315
      %v331 = vadd.f32 %v303, %v319
      %v332 = vadd.f32 %v304, %v315
      %v333 = vadd.f32 %v305, %v319
      %v334 = vadd.f32 %v306, %v315
      %v335 = vadd.f32 %v307, %v319
      %v336 = vadd.f32 %v308, %v315
      %v337 = vadd.f32 %v309, %v319
      %v338 = vmax.f32 %v322, 0.0
      %v339 = vmax.f32 %v323, 0.0
      %v340 = vmax.f32 %v324, 0.0
      %v341 = vmax.f32 %v325, 0.0
      %v342 = vmax.f32 %v326, 0.0
      %v343 = vmax.f32 %v327, 0.0
      %v344 = vmax.f32 %v328, 0.0
      %v345 = vmax.f32 %v329, 0.0
      %v346 = vmax.f32 %v330, 0.0
      %v347 = vmax.f32 %v331, 0.0
      %v348 = vmax.f32 %v332, 0.0
      %v349 = vmax.f32 %v333, 0.0
      %v350 = vmax.f32 %v334, 0.0
      %v351 = vmax.f32 %v335, 0.0
      %v352 = vmax.f32 %v336, 0.0
      %v353 = vmax.f32 %v337, 0.0
      %354 = vst [vmem:[%s254] sm:$0xff] %v338
      %355 = vst [vmem:[%s254 + $0x8] sm:$0xff] %v339
      %356 = vst [vmem:[%s254 + $0x10] sm:$0xff] %v340
      %357 = vst [vmem:[%s254 + $0x18] sm:$0xff] %v341
      %358 = vst [vmem:[%s254 + $0x20] sm:$0xff] %v342
      %359 = vst [vmem:[%s254 + $0x28] sm:$0xff] %v343
      %360 = vst [vmem:[%s254 + $0x30] sm:$0xff] %v344
      %361 = vst [vmem:[%s254 + $0x38] sm:$0xff] %v345
      %362 = vst [vmem:[%s254 + $0x40] sm:$0xff] %v346
      %363 = vst [vmem:[%s254 + $0x48] sm:$0xff] %v347
      %364 = vst [vmem:[%s254 + $0x50] sm:$0xff] %v348
      %365 = vst [vmem:[%s254 + $0x58] sm:$0xff] %v349
      %366 = vst [vmem:[%s254 + $0x60] sm:$0xff] %v350
      %367 = vst [vmem:[%s254 + $0x68] sm:$0xff] %v351
      %368 = vst [vmem:[%s254 + $0x70] sm:$0xff] %v352
      %369 = vst [vmem:[%s254 + $0x78] sm:$0xff] %v353
      %v370 = vmax.f32 %v338, %v340
      %v371 = vmax.f32 %v339, %v341
      %v372 = vmax.f32 %v342, %v344
      %v373 = vmax.f32 %v343, %v345
      %v374 = vmax.f32 %v346, %v348
      %v375 = vmax.f32 %v347, %v349
      %v376 = vmax.f32 %v350, %v352
      %v377 = vmax.f32 %v351, %v353
      %v378 = vmax.f32 %v370, %v371
      %v379 = vmax.f32 %v372, %v373
      %v380 = vmax.f32 %v374, %v375
      %v381 = vmax.f32 %v376, %v377
      %382 = vst [vmem:[%s264] sm:$0xff] %v378
      %383 = vst [vmem:[%s264 + $0x8] sm:$0xff] %v379
      %384 = vst [vmem:[%s264 + $0x10] sm:$0xff] %v380
      %385 = vst [vmem:[%s264 + $0x18] sm:$0xff] %v381
      %s386 = smul.u32 8, %s21
      %p387 = scmp.lt.s32.totalorder %s20, 1
      %s388 = scalar_select %p387, %s20, 1
      %p389 = scmp.lt.s32.totalorder %s386, 15
      %s390 = scalar_select %p389, %s386, 15
      %s391 = smul.addr %s390, 2
      %s392 = smul.addr %s388, 32
      %s393 = sadd.s32 %s391, %s392
      %s394 = smul.addr %s393, 8
      %s395 = scalar_lea.vmem %s3, %s394
      %s396 = smul.u32 4, %s21
      %p397 = scmp.lt.s32.totalorder %s20, 1
      %s398 = scalar_select %p397, %s20, 1
      %p399 = scmp.lt.s32.totalorder %s396, 7
      %s400 = scalar_select %p399, %s396, 7
      %s401 = smul.addr %s398, 8
      %s402 = sadd.s32 %s400, %s401
      %s403 = smul.addr %s402, 8
      %s404 = scalar_lea.vmem %s4, %s403
      // Predicated region
      $region33: #{down_conv_forward.7} parent=31 // pred_check
        %p405 = pneg %p118
      $region34: #{down_conv_forward.7} parent=31 // pred_check_branch
        %407 = sbr.rel (%p405) target = $region36
      $region35: #{down_conv_forward.7} parent=31 // pred_region
        %s408 = smul.u32 8, %s21
      $region36: #{down_conv_forward.7} parent=31 // pred_fallthru
        _
      // Predicated region
      $region37: #{down_conv_forward.7} parent=31 // pred_check
        %p409 = pneg %p146
      $region38: #{down_conv_forward.7} parent=31 // pred_check_branch
        %411 = sbr.rel (%p409) target = $region40
      $region39: #{down_conv_forward.7} parent=31 // pred_region
        %s412 = smul.u32 4, %s21
      $region40: #{down_conv_forward.7} parent=31 // pred_fallthru
        _
    $region32: #{down_conv_forward.7} parent=5 // pred_fallthru
      _
    %p413 = scmp.le.s32.totalorder 2, %s11
    // Predicated region
    $region41: #{down_conv_forward.7} parent=5 // pred_check
      %p414 = pneg %p413
    $region42: #{down_conv_forward.7} parent=5 // pred_check_branch
      %416 = sbr.rel (%p414) target = $region44
    $region43: #{down_conv_forward.7} parent=5 // pred_region
      %s417 = ssub.s32 %s11, 2
      // Predicated region
      $region45: #{down_conv_forward.7} parent=43 // pred_check
        %p418 = pneg %p124
      $region46: #{down_conv_forward.7} parent=43 // pred_check_branch
        %420 = sbr.rel (%p418) target = $region48
      $region47: #{down_conv_forward.7} parent=43 // pred_region
        %s421 = smul.u32 8, %s23
        %p422 = scmp.lt.s32.totalorder %s22, 1
        %s423 = scalar_select %p422, %s22, 1
        %p424 = scmp.lt.s32.totalorder %s421, 15
        %s425 = scalar_select %p424, %s421, 15
        %s426 = smul.addr %s425, 2
        %s427 = smul.addr %s423, 32
        %s428 = sadd.s32 %s426, %s427
        %s429 = smul.addr %s428, 8
        %s430 = scalar_lea.vmem %s3, %s429
      $region48: #{down_conv_forward.7} parent=43 // pred_fallthru
        _
      // Predicated region
      $region49: #{down_conv_forward.7} parent=43 // pred_check
        %p431 = pneg %p152
      $region50: #{down_conv_forward.7} parent=43 // pred_check_branch
        %433 = sbr.rel (%p431) target = $region52
      $region51: #{down_conv_forward.7} parent=43 // pred_region
        %s434 = smul.u32 4, %s23
        %p435 = scmp.lt.s32.totalorder %s22, 1
        %s436 = scalar_select %p435, %s22, 1
        %p437 = scmp.lt.s32.totalorder %s434, 7
        %s438 = scalar_select %p437, %s434, 7
        %s439 = smul.addr %s436, 8
        %s440 = sadd.s32 %s438, %s439
        %s441 = smul.addr %s440, 8
        %s442 = scalar_lea.vmem %s4, %s441
      $region52: #{down_conv_forward.7} parent=43 // pred_fallthru
        _
    $region44: #{down_conv_forward.7} parent=5 // pred_fallthru
      _
  $region6: #{down_conv_forward.7} parent=0 // loop_footer
    %s15 = sadd.s32 1, %s11
  $region7: #{down_conv_forward.7} parent=0 // loop_footer_branch
    %10 = sbr.rel target = $region3
  $region8: #{down_conv_forward.7} parent=0 // loop_exit
    _

// kernel: down_conv_forward.4
$region0: #{down_conv_forward.4}
  #allocation0 [shape = 'u32[]', space=smem, size = 0x4, offset = 0x4, fixed_abs, tag = 'smem constant byte address 0x4 - core index']
  #allocation1 [shape = 'u32[144,128]{1,0:T(1,128)}', space=vmem, size = 0x12000, scoped, tag = 'internal scratch']
  %s0 = inlined_call_operand.vmem [shape: bf16[2,18,18,128], index: 0, kind: input, shape index: {}]
  %s1 = inlined_call_operand.vmem [shape: bf16[9,128,128], index: 1, kind: input, shape index: {}]
  %s2 = inlined_call_operand.vmem [shape: f32[2,16,16,128], index: 2, kind: output, shape index: {0}]
  %s3 = inlined_call_operand.vmem [shape: f32[2,2,1,128], index: 3, kind: output, shape index: {1}]
  %s4 = inlined_call_operand.vmem [shape: f32[2,2,1,128], index: 4, kind: output, shape index: {2}]
  %5 = xla_tuple %s2, %s3, %s4
  %s6 = sld [smem:[#allocation0]]
  $region57: #{down_conv_forward.4} parent=0
    _
  %s8 = ssub.s32 1, %s6
  %s9 = scalar_select 0, %s8, %s6
  loop: start=0, step=1, limit=6
  $region2: #{down_conv_forward.4} parent=0 // loop_pre_header
    _
  $region3: #{down_conv_forward.4} parent=0 // loop_header
    %s11 = sphi 0, %s15
    %p12 = scmp.ge.s32.totalorder %s11, 6
    %s18 = sphi 0, %s30
    %s19 = sphi 0, %s26
    %s20 = sphi 0, %s18
    %s21 = sphi 0, %s19
    %s22 = sphi 0, %s20
    %s23 = sphi 0, %s21
    %s33 = sphi 0, %s35
    %s36 = sphi 0, %s33
    %s37 = sphi 0, %s36
    %s53 = sphi 0, %s37
    %s57 = sphi 0, %s57
    %s59 = sphi 0, %s57
    %s60 = sphi 0, %s59
    %s74 = sphi 0, %s60
    %s82 = sphi 0, %s84
    %s85 = sphi 0, %s82
    %s86 = sphi 0, %s85
    %s102 = sphi 0, %s86
    %s110 = sphi 0, %s112
    %s113 = sphi 0, %s110
    %s114 = sphi 0, %s113
    %s130 = sphi 0, %s114
    %s138 = sphi 0, %s140
    %s141 = sphi 0, %s138
    %s142 = sphi 0, %s141
    %s158 = sphi 0, %s142
  $region4: #{down_conv_forward.4} parent=0 // loop_header_branch
    %14 = sbr.rel (%p12) target = $region8
  $region5: #{down_conv_forward.4} parent=0 // loop_body
    %s16 = ssub.s32 %s11, 1
    %s17 = ssub.s32 %s11, 2
    %s24 = sadd.s32 1, %s19
    %p25 = scmp.ge.s32.totalorder %s24, 2
    %s26 = scalar_select %p25, 0, %s24
    %s27 = sadd.s32 1, %s18
    %s28 = scalar_select %p25, %s27, %s18
    %p29 = scmp.ge.s32.totalorder %s28, 2
    %s30 = scalar_select %p29, 0, %s28
    %s31 = ssub.s32 %s18, %s30
    %p32 = scmp.eq.s32.totalorder %s31, 0
    %s34 = sadd.s32 %s33, 1
    %s35 = scalar_select %p32, %s33, %s34
    %p38 = pneg %p32
    %p39 = scmp.eq.s32.totalorder %s11, 3
    %p40 = por %p38, %p39
    %p41 = scmp.ne.s32.totalorder %s33, %s36
    %p42 = scmp.eq.s32.totalorder %s11, 0
    %p43 = por %p41, %p42
    %p44 = scmp.ne.s32.totalorder %s33, %s36
    %p45 = scmp.eq.s32.totalorder %s16, 3
    %p46 = por %p44, %p45
    %p47 = scmp.ne.s32.totalorder %s36, %s37
    %p48 = scmp.eq.s32.totalorder %s16, 0
    %p49 = por %p47, %p48
    %p50 = scmp.ne.s32.totalorder %s36, %s37
    %p51 = scmp.eq.s32.totalorder %s17, 3
    %p52 = por %p50, %p51
    %p54 = scmp.ne.s32.totalorder %s37, %s53
    %p55 = scmp.eq.s32.totalorder %s17, 0
    %p56 = por %p54, %p55
    %s58 = sadd.s32 %s57, 1
    %p61 = scmp.eq.s32.totalorder %s11, 3
    %p62 = scmp.ne.s32.totalorder %s57, %s59
    %p63 = scmp.eq.s32.totalorder %s11, 0
    %p64 = por %p62, %p63
    %p65 = scmp.ne.s32.totalorder %s57, %s59
    %p66 = scmp.eq.s32.totalorder %s16, 3
    %p67 = por %p65, %p66
    %p68 = scmp.ne.s32.totalorder %s59, %s60
    %p69 = scmp.eq.s32.totalorder %s16, 0
    %p70 = por %p68, %p69
    %p71 = scmp.ne.s32.totalorder %s59, %s60
    %p72 = scmp.eq.s32.totalorder %s17, 3
    %p73 = por %p71, %p72
    %p75 = scmp.ne.s32.totalorder %s60, %s74
    %p76 = scmp.eq.s32.totalorder %s17, 0
    %p77 = por %p75, %p76
    %s78 = ssub.s32 %s18, %s30
    %s79 = ssub.s32 %s19, %s26
    %s80 = sor.u32 %s78, %s79
    %p81 = scmp.eq.s32.totalorder %s80, 0
    %s83 = sadd.s32 %s82, 1
    %s84 = scalar_select %p81, %s82, %s83
    %p87 = pneg %p81
    %p88 = scmp.eq.s32.totalorder %s11, 3
    %p89 = por %p87, %p88
    %p90 = scmp.ne.s32.totalorder %s82, %s85
    %p91 = scmp.eq.s32.totalorder %s11, 0
    %p92 = por %p90, %p91
    %p93 = scmp.ne.s32.totalorder %s82, %s85
    %p94 = scmp.eq.s32.totalorder %s16, 3
    %p95 = por %p93, %p94
    %p96 = scmp.ne.s32.totalorder %s85, %s86
    %p97 = scmp.eq.s32.totalorder %s16, 0
    %p98 = por %p96, %p97
    %p99 = scmp.ne.s32.totalorder %s85, %s86
    %p100 = scmp.eq.s32.totalorder %s17, 3
    %p101 = por %p99, %p100
    %p103 = scmp.ne.s32.totalorder %s86, %s102
    %p104 = scmp.eq.s32.totalorder %s17, 0
    %p105 = por %p103, %p104
    %s106 = ssub.s32 %s18, %s30
    %s107 = ssub.s32 %s19, %s26
    %s108 = sor.u32 %s106, %s107
    %p109 = scmp.eq.s32.totalorder %s108, 0
    %s111 = sadd.s32 %s110, 1
    %s112 = scalar_select %p109, %s110, %s111
    %p115 = pneg %p109
    %p116 = scmp.eq.s32.totalorder %s11, 3
    %p117 = por %p115, %p116
    %p118 = scmp.ne.s32.totalorder %s110, %s113
    %p119 = scmp.eq.s32.totalorder %s11, 0
    %p120 = por %p118, %p119
    %p121 = scmp.ne.s32.totalorder %s110, %s113
    %p122 = scmp.eq.s32.totalorder %s16, 3
    %p123 = por %p121, %p122
    %p124 = scmp.ne.s32.totalorder %s113, %s114
    %p125 = scmp.eq.s32.totalorder %s16, 0
    %p126 = por %p124, %p125
    %p127 = scmp.ne.s32.totalorder %s113, %s114
    %p128 = scmp.eq.s32.totalorder %s17, 3
    %p129 = por %p127, %p128
    %p131 = scmp.ne.s32.totalorder %s114, %s130
    %p132 = scmp.eq.s32.totalorder %s17, 0
    %p133 = por %p131, %p132
    %s134 = ssub.s32 %s18, %s30
    %s135 = ssub.s32 %s19, %s26
    %s136 = sor.u32 %s134, %s135
    %p137 = scmp.eq.s32.totalorder %s136, 0
    %s139 = sadd.s32 %s138, 1
    %s140 = scalar_select %p137, %s138, %s139
    %p143 = pneg %p137
    %p144 = scmp.eq.s32.totalorder %s11, 3
    %p145 = por %p143, %p144
    %p146 = scmp.ne.s32.totalorder %s138, %s141
    %p147 = scmp.eq.s32.totalorder %s11, 0
    %p148 = por %p146, %p147
    %p149 = scmp.ne.s32.totalorder %s138, %s141
    %p150 = scmp.eq.s32.totalorder %s16, 3
    %p151 = por %p149, %p150
    %p152 = scmp.ne.s32.totalorder %s141, %s142
    %p153 = scmp.eq.s32.totalorder %s16, 0
    %p154 = por %p152, %p153
    %p155 = scmp.ne.s32.totalorder %s141, %s142
    %p156 = scmp.eq.s32.totalorder %s17, 3
    %p157 = por %p155, %p156
    %p159 = scmp.ne.s32.totalorder %s142, %s158
    %p160 = scmp.eq.s32.totalorder %s17, 0
    %p161 = por %p159, %p160
    %p162 = scmp.le.s32.totalorder 1, %s11
    %p163 = scmp.lt.s32.totalorder %s11, 5
    %p164 = pnand %p162, %p163
    %p165 = pneg %p164
    // Predicated region
    $region9: #{down_conv_forward.4} parent=5 // pred_check
      _
    $region10: #{down_conv_forward.4} parent=5 // pred_check_branch
      %167 = sbr.rel (%p164) target = $region12
    $region11: #{down_conv_forward.4} parent=5 // pred_region
      %s168 = ssub.s32 %s11, 1
      // Predicated region
      $region13: #{down_conv_forward.4} parent=11 // pred_check
        %p169 = pneg %p70
      $region14: #{down_conv_forward.4} parent=11 // pred_check_branch
        %171 = sbr.rel (%p169) target = $region16
      $region15: #{down_conv_forward.4} parent=11 // pred_region
        _
      $region16: #{down_conv_forward.4} parent=11 // pred_fallthru
        _
    $region12: #{down_conv_forward.4} parent=5 // pred_fallthru
      _
    %p172 = scmp.lt.s32.totalorder %s11, 4
    // Predicated region
    $region17: #{down_conv_forward.4} parent=5 // pred_check
      %p173 = pneg %p172
    $region18: #{down_conv_forward.4} parent=5 // pred_check_branch
      %175 = sbr.rel (%p173) target = $region20
    $region19: #{down_conv_forward.4} parent=5 // pred_region
      // Predicated region
      $region21: #{down_conv_forward.4} parent=19 // pred_check
        %p176 = pneg %p43
      $region22: #{down_conv_forward.4} parent=19 // pred_check_branch
        %178 = sbr.rel (%p176) target = $region24
      $region23: #{down_conv_forward.4} parent=19 // pred_region
        %p179 = scmp.lt.s32.totalorder %s18, 1
        %s180 = scalar_select %p179, %s18, 1
        %s181 = smul.addr %s180, 54
        %s182 = smul.addr %s181, 4
        %s183 = scalar_lea.vmem %s0, %s182
      $region24: #{down_conv_forward.4} parent=19 // pred_fallthru
        _
    $region20: #{down_conv_forward.4} parent=5 // pred_fallthru
      _
    %p184 = scmp.le.s32.totalorder 1, %s11
    %p185 = scmp.lt.s32.totalorder %s11, 5
    %p186 = pnand %p184, %p185
    %p187 = pneg %p186
    // Predicated region
    $region25: #{down_conv_forward.4} parent=5 // pred_check
      _
    $region26: #{down_conv_forward.4} parent=5 // pred_check_branch
      %189 = sbr.rel (%p186) target = $region28
    $region27: #{down_conv_forward.4} parent=5 // pred_region
      %s190 = ssub.s32 %s11, 1
      %p191 = scmp.lt.s32.totalorder %s20, 1
      %s192 = scalar_select %p191, %s20, 1
      %s193 = smul.addr %s192, 54
      %s194 = smul.addr %s193, 4
      %s195 = scalar_lea.vmem %s0, %s194
      %p196 = pneg %p49
      %p197 = pneg %p46
      %p198 = pneg %p70
      %p199 = pneg %p67
      %p200 = pneg %p98
      %p201 = pneg %p95
      %s202 = smul.u32 8, %s21
      %p203 = scmp.lt.s32.totalorder %s20, 1
      %s204 = scalar_select %p203, %s20, 1
      %p205 = scmp.lt.s32.totalorder %s202, 15
      %s206 = scalar_select %p205, %s202, 15
      %s207 = smul.addr %s206, 2
      %s208 = smul.addr %s204, 32
      %s209 = sadd.s32 %s207, %s208
      %s210 = smul.addr %s209, 8
      %s211 = scalar_lea.vmem %s2, %s210
      %p212 = pneg %p126
      %p213 = pneg %p123
      %p214 = scmp.lt.s32.totalorder %s20, 1
      %s215 = scalar_select %p214, %s20, 1
      %p216 = scmp.lt.s32.totalorder %s21, 1
      %s217 = scalar_select %p216, %s21, 1
      %s218 = smul.addr %s215, 2
      %s219 = sadd.s32 %s217, %s218
      %s220 = scalar_lea.vmem %s3, %s219
      %p221 = pneg %p154
      %p222 = pneg %p151
      %p223 = scmp.lt.s32.totalorder %s20, 1
      %s224 = scalar_select %p223, %s20, 1
      %p225 = scmp.lt.s32.totalorder %s21, 1
      %s226 = scalar_select %p225, %s21, 1
      %s227 = smul.addr %s224, 2
      %s228 = sadd.s32 %s226, %s227
      %s229 = scalar_lea.vmem %s4, %s228
      %p230 = scmp.lt.s32.totalorder %s20, 1
      %s231 = scalar_select %p230, %s20, 1
      %s232 = smul.addr %s231, 54
      %s233 = smul.addr %s232, 4
      %s234 = scalar_lea.vmem %s0, %s233
      %s235 = smul.u32 8, %s21
      %p236 = scmp.lt.s32.totalorder %s20, 1
      %s237 = scalar_select %p236, %s20, 1
      %p238 = scmp.lt.s32.totalorder %s235, 15
      %s239 = scalar_select %p238, %s235, 15
      %s240 = smul.addr %s239, 2
      %s241 = smul.addr %s237, 32
      %s242 = sadd.s32 %s240, %s241
      %s243 = smul.addr %s242, 8
      %s244 = scalar_lea.vmem %s2, %s243
      %s245 = smul.u32 8, %s21
      %p246 = scmp.lt.s32.totalorder %s20, 1
      %s247 = scalar_select %p246, %s20, 1
      %p248 = scmp.lt.s32.totalorder %s21, 1
      %s249 = scalar_select %p248, %s21, 1
      %s250 = smul.addr %s247, 2
      %s251 = sadd.s32 %s249, %s250
      %s252 = scalar_lea.vmem %s3, %s251
      %p253 = scmp.lt.s32.totalorder %s20, 1
      %s254 = scalar_select %p253, %s20, 1
      %p255 = scmp.lt.s32.totalorder %s21, 1
      %s256 = scalar_select %p255, %s21, 1
      %s257 = smul.addr %s254, 2
      %s258 = sadd.s32 %s256, %s257
      %s259 = scalar_lea.vmem %s4, %s258
      %s261 = smul.u32 %s21, 8
      %s262 = smul.u32 %s261, 3
      %s263 = smul.addr %s262, 4
      %s264 = scalar_lea.vmem %s234, %s263
      %v265 = vld [vmem:[%s264] sm:$0xf]
      %v266 = vld [vmem:[%s264 + $0x4] sm:$0xf]
      %v267 = vld [vmem:[%s264 + $0xc] sm:$0xf]
      %v268 = vld [vmem:[%s264 + $0x10] sm:$0xf]
      %v269 = vld [vmem:[%s264 + $0x18] sm:$0xf]
      %v270 = vld [vmem:[%s264 + $0x1c] sm:$0xf]
      %v271 = vld [vmem:[%s264 + $0x24] sm:$0xf]
      %v272 = vld [vmem:[%s264 + $0x28] sm:$0xf]
      %v273 = vld [vmem:[%s264 + $0x30] sm:$0xf]
      %v274 = vld [vmem:[%s264 + $0x34] sm:$0xf]
      %v275 = vld [vmem:[%s264 + $0x3c] sm:$0xf]
      %v276 = vld [vmem:[%s264 + $0x40] sm:$0xf]
      %v277 = vld [vmem:[%s264 + $0x48] sm:$0xf]
      %v278 = vld [vmem:[%s264 + $0x4c] sm:$0xf]
      %v279 = vld [vmem:[%s264 + $0x54] sm:$0xf]
      %v280 = vld [vmem:[%s264 + $0x58] sm:$0xf]
      %v281 = vld [vmem:[%s1] sm:$0xf]
      %v282 = vld [vmem:[%s1 + $0x4] sm:$0xf]
      %v283 = vld [vmem:[%s1 + $0x8] sm:$0xf]
      %v284 = vld [vmem:[%s1 + $0xc] sm:$0xf]
      %v285 = vld [vmem:[%s1 + $0x10] sm:$0xf]
      %v286 = vld [vmem:[%s1 + $0x14] sm:$0xf]
      %v287 = vld [vmem:[%s1 + $0x18] sm:$0xf]
      %v288 = vld [vmem:[%s1 + $0x1c] sm:$0xf]
      %v289 = vld [vmem:[%s1 + $0x20] sm:$0xf]
      %v290 = vld [vmem:[%s1 + $0x24] sm:$0xf]
      %v291 = vld [vmem:[%s1 + $0x28] sm:$0xf]
      %v292 = vld [vmem:[%s1 + $0x2c] sm:$0xf]
      %v293 = vld [vmem:[%s1 + $0x30] sm:$0xf]
      %v294 = vld [vmem:[%s1 + $0x34] sm:$0xf]
      %v295 = vld [vmem:[%s1 + $0x38] sm:$0xf]
      %v296 = vld [vmem:[%s1 + $0x3c] sm:$0xf]
      %v297 = vld [vmem:[%s264 + $0x8] sm:$0x1]
      %v298 = vld [vmem:[%s264 + $0x14] sm:$0x1]
      %v299 = vld [vmem:[%s264 + $0x20] sm:$0x1]
      %v300 = vld [vmem:[%s264 + $0x2c] sm:$0x1]
      %v301 = vld [vmem:[%s264 + $0x38] sm:$0x1]
      %v302 = vld [vmem:[%s264 + $0x44] sm:$0x1]
      %v303 = vld [vmem:[%s264 + $0x50] sm:$0x1]
      %v304 = vld [vmem:[%s264 + $0x5c] sm:$0x1]
      %vm305 = vsmask.f32 3328
      %vm306 = vsmask.f32 7440
      %vm307 = vmor %vm305, %vm306
      %v309 = vshrl.u32 %v265, 16
      %v311 = vrot.slane %v309, 4
      %v312 = vshll.u32 %v265, 16
      %v314 = vrot.slane %v312, 5
      %v315 = vor.u32 %v311, %v314
      %v316 = vrot.slane %v315, 4
      %v318 = vshll.u32 %v266, 16
      %v320 = vrot.slane %v318, 5
      %v321 = vsel %vm307, %v316, %v320
      %v322 = vshrl.u32 %v266, 16
      %v324 = vrot.slane %v322, 4
      %v325 = vor.u32 %v324, %v320
      %v326 = vrot.slane %v325, 4
      %v328 = vshll.u32 %v297, 16
      %v330 = vrot.slane %v328, 5
      %v331 = vsel %vm307, %v326, %v330
      %v333 = vshrl.u32 %v267, 16
      %v335 = vrot.slane %v333, 4
      %v336 = vshll.u32 %v267, 16
      %v338 = vrot.slane %v336, 5
      %v339 = vor.u32 %v335, %v338
      %v340 = vrot.slane %v339, 4
      %v342 = vshll.u32 %v268, 16
      %v344 = vrot.slane %v342, 5
      %v345 = vsel %vm307, %v340, %v344
      %v346 = vshrl.u32 %v268, 16
      %v348 = vrot.slane %v346, 4
      %v349 = vor.u32 %v348, %v344
      %v350 = vrot.slane %v349, 4
      %v352 = vshll.u32 %v298, 16
      %v354 = vrot.slane %v352, 5
      %v355 = vsel %vm307, %v350, %v354
      %v357 = vshrl.u32 %v269, 16
      %v359 = vrot.slane %v357, 4
      %v360 = vshll.u32 %v269, 16
      %v362 = vrot.slane %v360, 5
      %v363 = vor.u32 %v359, %v362
      %v364 = vrot.slane %v363, 4
      %v366 = vshll.u32 %v270, 16
      %v368 = vrot.slane %v366, 5
      %v369 = vsel %vm307, %v364, %v368
      %v370 = vshrl.u32 %v270, 16
      %v372 = vrot.slane %v370, 4
      %v373 = vor.u32 %v372, %v368
      %v374 = vrot.slane %v373, 4
      %v376 = vshll.u32 %v299, 16
      %v378 = vrot.slane %v376, 5
      %v379 = vsel %vm307, %v374, %v378
      %v381 = vshrl.u32 %v271, 16
      %v383 = vrot.slane %v381, 4
      %v384 = vshll.u32 %v271, 16
      %v386 = vrot.slane %v384, 5
      %v387 = vor.u32 %v383, %v386
      %v388 = vrot.slane %v387, 4
      %v390 = vshll.u32 %v272, 16
      %v392 = vrot.slane %v390, 5
      %v393 = vsel %vm307, %v388, %v392
      %v394 = vshrl.u32 %v272, 16
      %v396 = vrot.slane %v394, 4
      %v397 = vor.u32 %v396, %v392
      %v398 = vrot.slane %v397, 4
      %v400 = vshll.u32 %v300, 16
      %v402 = vrot.slane %v400, 5
      %v403 = vsel %vm307, %v398, %v402
      %v405 = vshrl.u32 %v273, 16
      %v407 = vrot.slane %v405, 4
      %v408 = vshll.u32 %v273, 16
      %v410 = vrot.slane %v408, 5
      %v411 = vor.u32 %v407, %v410
      %v412 = vrot.slane %v411, 4
      %v414 = vshll.u32 %v274, 16
      %v416 = vrot.slane %v414, 5
      %v417 = vsel %vm307, %v412, %v416
      %v418 = vshrl.u32 %v274, 16
      %v420 = vrot.slane %v418, 4
      %v421 = vor.u32 %v420, %v416
      %v422 = vrot.slane %v421, 4
      %v424 = vshll.u32 %v301, 16
      %v426 = vrot.slane %v424, 5
      %v427 = vsel %vm307, %v422, %v426
      %v429 = vshrl.u32 %v275, 16
      %v431 = vrot.slane %v429, 4
      %v432 = vshll.u32 %v275, 16
      %v434 = vrot.slane %v432, 5
      %v435 = vor.u32 %v431, %v434
      %v436 = vrot.slane %v435, 4
      %v438 = vshll.u32 %v276, 16
      %v440 = vrot.slane %v438, 5
      %v441 = vsel %vm307, %v436, %v440
      %v442 = vshrl.u32 %v276, 16
      %v444 = vrot.slane %v442, 4
      %v445 = vor.u32 %v444, %v440
      %v446 = vrot.slane %v445, 4
      %v448 = vshll.u32 %v302, 16
      %v450 = vrot.slane %v448, 5
      %v451 = vsel %vm307, %v446, %v450
      %v453 = vshrl.u32 %v277, 16
      %v455 = vrot.slane %v453, 4
      %v456 = vshll.u32 %v277, 16
      %v458 = vrot.slane %v456, 5
      %v459 = vor.u32 %v455, %v458
      %v460 = vrot.slane %v459, 4
      %v462 = vshll.u32 %v278, 16
      %v464 = vrot.slane %v462, 5
      %v465 = vsel %vm307, %v460, %v464
      %v466 = vshrl.u32 %v278, 16
      %v468 = vrot.slane %v466, 4
      %v469 = vor.u32 %v468, %v464
      %v470 = vrot.slane %v469, 4
      %v472 = vshll.u32 %v303, 16
      %v474 = vrot.slane %v472, 5
      %v475 = vsel %vm307, %v470, %v474
      %v477 = vshrl.u32 %v279, 16
      %v479 = vrot.slane %v477, 4
      %v480 = vshll.u32 %v279, 16
      %v482 = vrot.slane %v480, 5
      %v483 = vor.u32 %v479, %v482
      %v484 = vrot.slane %v483, 4
      %v486 = vshll.u32 %v280, 16
      %v488 = vrot.slane %v486, 5
      %v489 = vsel %vm307, %v484, %v488
      %v490 = vshrl.u32 %v280, 16
      %v492 = vrot.slane %v490, 4
      %v493 = vor.u32 %v492, %v488
      %v494 = vrot.slane %v493, 4
      %v496 = vshll.u32 %v304, 16
      %v498 = vrot.slane %v496, 5
      %v499 = vsel %vm307, %v494, %v498
      %s500 = scalar_lea.vmem %s1, 64
      %v501 = vld [vmem:[%s500] sm:$0xf]
      %v502 = vld [vmem:[%s500 + $0x4] sm:$0xf]
      %v503 = vld [vmem:[%s500 + $0x8] sm:$0xf]
      %v504 = vld [vmem:[%s500 + $0xc] sm:$0xf]
      %v505 = vld [vmem:[%s500 + $0x10] sm:$0xf]
      %v506 = vld [vmem:[%s500 + $0x14] sm:$0xf]
      %v507 = vld [vmem:[%s500 + $0x18] sm:$0xf]
      %v508 = vld [vmem:[%s500 + $0x1c] sm:$0xf]
      %v509 = vld [vmem:[%s500 + $0x20] sm:$0xf]
      %v510 = vld [vmem:[%s500 + $0x24] sm:$0xf]
      %v511 = vld [vmem:[%s500 + $0x28] sm:$0xf]
      %v512 = vld [vmem:[%s500 + $0x2c] sm:$0xf]
      %v513 = vld [vmem:[%s500 + $0x30] sm:$0xf]
      %v514 = vld [vmem:[%s500 + $0x34] sm:$0xf]
      %v515 = vld [vmem:[%s500 + $0x38] sm:$0xf]
      %v516 = vld [vmem:[%s500 + $0x3c] sm:$0xf]
      %v517 = vunpack.c.l.b16 %v321
      %v518 = vunpack.c.l.b16 %v331
      %v519 = vunpack.c.l.b16 %v345
      %v520 = vunpack.c.l.b16 %v355
      %v521 = vunpack.c.l.b16 %v369
      %v522 = vunpack.c.l.b16 %v379
      %v523 = vunpack.c.l.b16 %v393
      %v524 = vunpack.c.l.b16 %v403
      %v525 = vunpack.c.l.b16 %v417
      %v526 = vunpack.c.l.b16 %v427
      %v527 = vunpack.c.l.b16 %v441
      %v528 = vunpack.c.l.b16 %v451
      %v529 = vunpack.c.l.b16 %v465
      %v530 = vunpack.c.l.b16 %v475
      %v531 = vunpack.c.l.b16 %v489
      %v532 = vunpack.c.l.b16 %v499
      %v533 = vpack.c.b16 %v518, %v517
      %v534 = vpack.c.b16 %v520, %v519
      %v535 = vpack.c.b16 %v522, %v521
      %v536 = vpack.c.b16 %v524, %v523
      %v537 = vpack.c.b16 %v526, %v525
      %v538 = vpack.c.b16 %v528, %v527
      %v539 = vpack.c.b16 %v530, %v529
      %v540 = vpack.c.b16 %v532, %v531
      %v565 = vunpack.c.l.b16 %v501
      %v566 = vunpack.c.l.b16 %v502
      %v567 = vunpack.c.l.b16 %v503
      %v568 = vunpack.c.l.b16 %v504
      %v569 = vunpack.c.l.b16 %v505
      %v570 = vunpack.c.l.b16 %v506
      %v571 = vunpack.c.l.b16 %v507
      %v572 = vunpack.c.l.b16 %v508
      %v573 = vunpack.c.l.b16 %v509
      %v574 = vunpack.c.l.b16 %v510
      %v575 = vunpack.c.l.b16 %v511
      %v576 = vunpack.c.l.b16 %v512
      %v577 = vunpack.c.l.b16 %v513
      %v578 = vunpack.c.l.b16 %v514
      %v579 = vunpack.c.l.b16 %v515
      %v580 = vunpack.c.l.b16 %v516
      %v581 = vpack.c.b16 %v566, %v565
      %v582 = vpack.c.b16 %v568, %v567
      %v583 = vpack.c.b16 %v570, %v569
      %v584 = vpack.c.b16 %v572, %v571
      %v585 = vpack.c.b16 %v574, %v573
      %v586 = vpack.c.b16 %v576, %v575
      %v587 = vpack.c.b16 %v578, %v577
      %v588 = vpack.c.b16 %v580, %v579
      %597 = vmatprep.subr.bf16.mxu0 0
      %598 = vmatpush1.bf16.msra.mxu0 %v581
      %599 = vmatprep.subr.bf16.mxu0 0
      %600 = vmatpush1.bf16.msra.mxu0 %v582
      %601 = vmatprep.subr.bf16.mxu0 0
      %602 = vmatpush1.bf16.msra.mxu0 %v583
      %603 = vmatprep.subr.bf16.mxu0 0
      %604 = vmatpush1.bf16.msra.mxu0 %v584
      %605 = vmatprep.subr.bf16.mxu0 0
      %606 = vmatpush1.bf16.msra.mxu0 %v585
      %607 = vmatprep.subr.bf16.mxu0 0
      %608 = vmatpush1.bf16.msra.mxu0 %v586
      %609 = vmatprep.subr.bf16.mxu0 0
      %610 = vmatpush1.bf16.msra.mxu0 %v587
      %611 = vmatprep.subr.bf16.mxu0 0
      %612 = vmatpush1.bf16.msra.mxu0 %v588
      %613 = vmatprep.subr.bf16.mxu0 0
      %614 = vmatpush1.bf16.msra.mxu0 0
      %615 = vmatprep.subr.bf16.mxu0 0
      %616 = vmatpush1.bf16.msra.mxu0 0
      %617 = vmatprep.subr.bf16.mxu0 0
      %618 = vmatpush1.bf16.msra.mxu0 0
      %619 = vmatprep.subr.bf16.mxu0 0
      %620 = vmatpush1.bf16.msra.mxu0 0
      %621 = vmatprep.subr.bf16.mxu0 0
      %622 = vmatpush1.bf16.msra.mxu0 0
      %623 = vmatprep.subr.bf16.mxu0 0
      %624 = vmatpush1.bf16.msra.mxu0 0
      %625 = vmatprep.subr.bf16.mxu0 0
      %626 = vmatpush1.bf16.msra.mxu0 0
      %627 = vmatprep.subr.bf16.mxu0 0
      %628 = vmatpush1.bf16.msra.mxu0 0
      %629 = vmatprep.mubr.bf16.mxu0 0
      %630 = vmatmul.mubr.bf16.gmra.mrb[0].mxu0 %v533
      %v631 = vpop.f32.mrb[0].mxu0
      %v632 = vadd.f32 0.0, %v631
      %v633 = vpop.f32.mrb[0].mxu0
      %v634 = vpop.f32.mrb[0].mxu0
      %v635 = vadd.f32 0.0, %v634
      %v636 = vpop.f32.mrb[0].mxu0
      %637 = vmatprep.mubr.bf16.mxu0 0
      %638 = vmatmul.mubr.bf16.gmra.mrb[0].mxu0 %v534
      %v639 = vpop.f32.mrb[0].mxu0
      %v640 = vadd.f32 0.0, %v639
      %v641 = vpop.f32.mrb[0].mxu0
      %v642 = vpop.f32.mrb[0].mxu0
      %v643 = vadd.f32 0.0, %v642
      %v644 = vpop.f32.mrb[0].mxu0
      %645 = vmatprep.mubr.bf16.mxu0 0
      %646 = vmatmul.mubr.bf16.gmra.mrb[0].mxu0 %v535
      %v647 = vpop.f32.mrb[0].mxu0
      %v648 = vadd.f32 0.0, %v647
      %v649 = vpop.f32.mrb[0].mxu0
      %v650 = vpop.f32.mrb[0].mxu0
      %v651 = vadd.f32 0.0, %v650
      %v652 = vpop.f32.mrb[0].mxu0
      %653 = vmatprep.mubr.bf16.mxu0 0
      %654 = vmatmul.mubr.bf16.gmra.mrb[0].mxu0 %v536
      %v655 = vpop.f32.mrb[0].mxu0
      %v656 = vadd.f32 0.0, %v655
      %v657 = vpop.f32.mrb[0].mxu0
      %v658 = vpop.f32.mrb[0].mxu0
      %v659 = vadd.f32 0.0, %v658
      %v660 = vpop.f32.mrb[0].mxu0
      %661 = vmatprep.mubr.bf16.mxu0 0
      %662 = vmatmul.mubr.bf16.gmra.mrb[0].mxu0 %v537
      %v663 = vpop.f32.mrb[0].mxu0
      %v664 = vadd.f32 0.0, %v663
      %v665 = vpop.f32.mrb[0].mxu0
      %v666 = vpop.f32.mrb[0].mxu0
      %v667 = vadd.f32 0.0, %v666
      %v668 = vpop.f32.mrb[0].mxu0
      %669 = vmatprep.mubr.bf16.mxu0 0
      %670 = vmatmul.mubr.bf16.gmra.mrb[0].mxu0 %v538
      %v671 = vpop.f32.mrb[0].mxu0
      %v672 = vadd.f32 0.0, %v671
      %v673 = vpop.f32.mrb[0].mxu0
      %v674 = vpop.f32.mrb[0].mxu0
      %v675 = vadd.f32 0.0, %v674
      %v676 = vpop.f32.mrb[0].mxu0
      %677 = vmatprep.mubr.bf16.mxu0 0
      %678 = vmatmul.mubr.bf16.gmra.mrb[0].mxu0 %v539
      %v679 = vpop.f32.mrb[0].mxu0
      %v680 = vadd.f32 0.0, %v679
      %v681 = vpop.f32.mrb[0].mxu0
      %v682 = vpop.f32.mrb[0].mxu0
      %v683 = vadd.f32 0.0, %v682
      %v684 = vpop.f32.mrb[0].mxu0
      %685 = vmatprep.mubr.bf16.mxu0 0
      %686 = vmatmul.mubr.bf16.gmra.mrb[0].mxu0 %v540
      %v687 = vpop.f32.mrb[0].mxu0
      %v688 = vadd.f32 0.0, %v687
      %v689 = vpop.f32.mrb[0].mxu0
      %v690 = vpop.f32.mrb[0].mxu0
      %v691 = vadd.f32 0.0, %v690
      %v692 = vpop.f32.mrb[0].mxu0
      %693 = vdwg.mxu0
      %v710 = vunpack.c.l.b16 %v265
      %v711 = vunpack.c.l.b16 %v266
      %v712 = vunpack.c.l.b16 %v267
      %v713 = vunpack.c.l.b16 %v268
      %v714 = vunpack.c.l.b16 %v269
      %v715 = vunpack.c.l.b16 %v270
      %v716 = vunpack.c.l.b16 %v271
      %v717 = vunpack.c.l.b16 %v272
      %v718 = vunpack.c.l.b16 %v273
      %v719 = vunpack.c.l.b16 %v274
      %v720 = vunpack.c.l.b16 %v275
      %v721 = vunpack.c.l.b16 %v276
      %v722 = vunpack.c.l.b16 %v277
      %v723 = vunpack.c.l.b16 %v278
      %v724 = vunpack.c.l.b16 %v279
      %v725 = vunpack.c.l.b16 %v280
      %v726 = vpack.c.b16 %v711, %v710
      %v727 = vpack.c.b16 %v713, %v712
      %v728 = vpack.c.b16 %v715, %v714
      %v729 = vpack.c.b16 %v717, %v716
      %v730 = vpack.c.b16 %v719, %v718
      %v731 = vpack.c.b16 %v721, %v720
      %v732 = vpack.c.b16 %v723, %v722
      %v733 = vpack.c.b16 %v725, %v724
      %v758 = vunpack.c.l.b16 %v281
      %v759 = vunpack.c.l.b16 %v282
      %v760 = vunpack.c.l.b16 %v283
      %v761 = vunpack.c.l.b16 %v284
      %v762 = vunpack.c.l.b16 %v285
      %v763 = vunpack.c.l.b16 %v286
      %v764 = vunpack.c.l.b16 %v287
      %v765 = vunpack.c.l.b16 %v288
      %v766 = vunpack.c.l.b16 %v289
      %v767 = vunpack.c.l.b16 %v290
      %v768 = vunpack.c.l.b16 %v291
      %v769 = vunpack.c.l.b16 %v292
      %v770 = vunpack.c.l.b16 %v293
      %v771 = vunpack.c.l.b16 %v294
      %v772 = vunpack.c.l.b16 %v295
      %v773 = vunpack.c.l.b16 %v296
      %v774 = vpack.c.b16 %v759, %v758
      %v775 = vpack.c.b16 %v761, %v760
      %v776 = vpack.c.b16 %v763, %v762
      %v777 = vpack.c.b16 %v765, %v764
      %v778 = vpack.c.b16 %v767, %v766
      %v779 = vpack.c.b16 %v769, %v768
      %v780 = vpack.c.b16 %v771, %v770
      %v781 = vpack.c.b16 %v773, %v772
      %790 = vmatprep.subr.bf16.mxu0 0
      %791 = vmatpush1.bf16.msra.mxu0 %v774
      %792 = vmatprep.subr.bf16.mxu0 0
      %793 = vmatpush1.bf16.msra.mxu0 %v775
      %794 = vmatprep.subr.bf16.mxu0 0
      %795 = vmatpush1.bf16.msra.mxu0 %v776
      %796 = vmatprep.subr.bf16.mxu0 0
      %797 = vmatpush1.bf16.msra.mxu0 %v777
      %798 = vmatprep.subr.bf16.mxu0 0
      %799 = vmatpush1.bf16.msra.mxu0 %v778
      %800 = vmatprep.subr.bf16.mxu0 0
      %801 = vmatpush1.bf16.msra.mxu0 %v779
      %802 = vmatprep.subr.bf16.mxu0 0
      %803 = vmatpush1.bf16.msra.mxu0 %v780
      %804 = vmatprep.subr.bf16.mxu0 0
      %805 = vmatpush1.bf16.msra.mxu0 %v781
      %806 = vmatprep.subr.bf16.mxu0 0
      %807 = vmatpush1.bf16.msra.mxu0 0
      %808 = vmatprep.subr.bf16.mxu0 0
      %809 = vmatpush1.bf16.msra.mxu0 0
      %810 = vmatprep.subr.bf16.mxu0 0
      %811 = vmatpush1.bf16.msra.mxu0 0
      %812 = vmatprep.subr.bf16.mxu0 0
      %813 = vmatpush1.bf16.msra.mxu0 0
      %814 = vmatprep.subr.bf16.mxu0 0
      %815 = vmatpush1.bf16.msra.mxu0 0
      %816 = vmatprep.subr.bf16.mxu0 0
      %817 = vmatpush1.bf16.msra.mxu0 0
      %818 = vmatprep.subr.bf16.mxu0 0
      %819 = vmatpush1.bf16.msra.mxu0 0
      %820 = vmatprep.subr.bf16.mxu0 0
      %821 = vmatpush1.bf16.msra.mxu0 0
      %822 = vmatprep.mubr.bf16.mxu0 0
      %823 = vmatmul.mubr.bf16.gmra.mrb[0].mxu0 %v726
      %v824 = vpop.f32.mrb[0].mxu0
      %v825 = vadd.f32 %v632, %v824
      %v826 = vpop.f32.mrb[0].mxu0
      %v827 = vpop.f32.mrb[0].mxu0
      %v828 = vadd.f32 %v635, %v827
      %v829 = vpop.f32.mrb[0].mxu0
      %830 = vmatprep.mubr.bf16.mxu0 0
      %831 = vmatmul.mubr.bf16.gmra.mrb[0].mxu0 %v727
      %v832 = vpop.f32.mrb[0].mxu0
      %v833 = vadd.f32 %v640, %v832
      %v834 = vpop.f32.mrb[0].mxu0
      %v835 = vpop.f32.mrb[0].mxu0
      %v836 = vadd.f32 %v643, %v835
      %v837 = vpop.f32.mrb[0].mxu0
      %838 = vmatprep.mubr.bf16.mxu0 0
      %839 = vmatmul.mubr.bf16.gmra.mrb[0].mxu0 %v728
      %v840 = vpop.f32.mrb[0].mxu0
      %v841 = vadd.f32 %v648, %v840
      %v842 = vpop.f32.mrb[0].mxu0
      %v843 = vpop.f32.mrb[0].mxu0
      %v844 = vadd.f32 %v651, %v843
      %v845 = vpop.f32.mrb[0].mxu0
      %846 = vmatprep.mubr.bf16.mxu0 0
      %847 = vmatmul.mubr.bf16.gmra.mrb[0].mxu0 %v729
      %v848 = vpop.f32.mrb[0].mxu0
      %v849 = vadd.f32 %v656, %v848
      %v850 = vpop.f32.mrb[0].mxu0
      %v851 = vpop.f32.mrb[0].mxu0
      %v852 = vadd.f32 %v659, %v851
      %v853 = vpop.f32.mrb[0].mxu0
      %854 = vmatprep.mubr.bf16.mxu0 0
      %855 = vmatmul.mubr.bf16.gmra.mrb[0].mxu0 %v730
      %v856 = vpop.f32.mrb[0].mxu0
      %v857 = vadd.f32 %v664, %v856
      %v858 = vpop.f32.mrb[0].mxu0
      %v859 = vpop.f32.mrb[0].mxu0
      %v860 = vadd.f32 %v667, %v859
      %v861 = vpop.f32.mrb[0].mxu0
      %862 = vmatprep.mubr.bf16.mxu0 0
      %863 = vmatmul.mubr.bf16.gmra.mrb[0].mxu0 %v731
      %v864 = vpop.f32.mrb[0].mxu0
      %v865 = vadd.f32 %v672, %v864
      %v866 = vpop.f32.mrb[0].mxu0
      %v867 = vpop.f32.mrb[0].mxu0
      %v868 = vadd.f32 %v675, %v867
      %v869 = vpop.f32.mrb[0].mxu0
      %870 = vmatprep.mubr.bf16.mxu0 0
      %871 = vmatmul.mubr.bf16.gmra.mrb[0].mxu0 %v732
      %v872 = vpop.f32.mrb[0].mxu0
      %v873 = vadd.f32 %v680, %v872
      %v874 = vpop.f32.mrb[0].mxu0
      %v875 = vpop.f32.mrb[0].mxu0
      %v876 = vadd.f32 %v683, %v875
      %v877 = vpop.f32.mrb[0].mxu0
      %878 = vmatprep.mubr.bf16.mxu0 0
      %879 = vmatmul.mubr.bf16.gmra.mrb[0].mxu0 %v733
      %v880 = vpop.f32.mrb[0].mxu0
      %v881 = vadd.f32 %v688, %v880
      %v882 = vpop.f32.mrb[0].mxu0
      %v883 = vpop.f32.mrb[0].mxu0
      %v884 = vadd.f32 %v691, %v883
      %v885 = vpop.f32.mrb[0].mxu0
      %886 = vdwg.mxu0
      %v887 = vld [vmem:[%s264] sm:$0xe]
      %v888 = vld [vmem:[%s264 + $0xc] sm:$0xe]
      %v889 = vld [vmem:[%s264 + $0x18] sm:$0xe]
      %v890 = vld [vmem:[%s264 + $0x24] sm:$0xe]
      %v891 = vld [vmem:[%s264 + $0x30] sm:$0xe]
      %v892 = vld [vmem:[%s264 + $0x3c] sm:$0xe]
      %v893 = vld [vmem:[%s264 + $0x48] sm:$0xe]
      %v894 = vld [vmem:[%s264 + $0x54] sm:$0xe]
      %vm911 = vcmask 1042432
      %vm912 = vcmask 1046532
      %vm913 = vmor %vm911, %vm912
      %v914 = vrot.slane %v887, 5
      %v915 = vrot.slane %v914, 4
      %v916 = vrot.slane %v266, 5
      %v917 = vsel %vm913, %v915, %v916
      %v918 = vrot.slane %v916, 4
      %v919 = vrot.slane %v297, 5
      %v920 = vsel %vm913, %v918, %v919
      %v921 = vrot.slane %v888, 5
      %v922 = vrot.slane %v921, 4
      %v923 = vrot.slane %v268, 5
      %v924 = vsel %vm913, %v922, %v923
      %v925 = vrot.slane %v923, 4
      %v926 = vrot.slane %v298, 5
      %v927 = vsel %vm913, %v925, %v926
      %v928 = vrot.slane %v889, 5
      %v929 = vrot.slane %v928, 4
      %v930 = vrot.slane %v270, 5
      %v931 = vsel %vm913, %v929, %v930
      %v932 = vrot.slane %v930, 4
      %v933 = vrot.slane %v299, 5
      %v934 = vsel %vm913, %v932, %v933
      %v935 = vrot.slane %v890, 5
      %v936 = vrot.slane %v935, 4
      %v937 = vrot.slane %v272, 5
      %v938 = vsel %vm913, %v936, %v937
      %v939 = vrot.slane %v937, 4
      %v940 = vrot.slane %v300, 5
      %v941 = vsel %vm913, %v939, %v940
      %v942 = vrot.slane %v891, 5
      %v943 = vrot.slane %v942, 4
      %v944 = vrot.slane %v274, 5
      %v945 = vsel %vm913, %v943, %v944
      %v946 = vrot.slane %v944, 4
      %v947 = vrot.slane %v301, 5
      %v948 = vsel %vm913, %v946, %v947
      %v949 = vrot.slane %v892, 5
      %v950 = vrot.slane %v949, 4
      %v951 = vrot.slane %v276, 5
      %v952 = vsel %vm913, %v950, %v951
      %v953 = vrot.slane %v951, 4
      %v954 = vrot.slane %v302, 5
      %v955 = vsel %vm913, %v953, %v954
      %v956 = vrot.slane %v893, 5
      %v957 = vrot.slane %v956, 4
      %v958 = vrot.slane %v278, 5
      %v959 = vsel %vm913, %v957, %v958
      %v960 = vrot.slane %v958, 4
      %v961 = vrot.slane %v303, 5
      %v962 = vsel %vm913, %v960, %v961
      %v963 = vrot.slane %v894, 5
      %v964 = vrot.slane %v963, 4
      %v965 = vrot.slane %v280, 5
      %v966 = vsel %vm913, %v964, %v965
      %v967 = vrot.slane %v965, 4
      %v968 = vrot.slane %v304, 5
      %v969 = vsel %vm913, %v967, %v968
      %s970 = scalar_lea.vmem %s1, 128
      %v971 = vld [vmem:[%s970] sm:$0xf]
      %v972 = vld [vmem:[%s970 + $0x4] sm:$0xf]
      %v973 = vld [vmem:[%s970 + $0x8] sm:$0xf]
      %v974 = vld [vmem:[%s970 + $0xc] sm:$0xf]
      %v975 = vld [vmem:[%s970 + $0x10] sm:$0xf]
      %v976 = vld [vmem:[%s970 + $0x14] sm:$0xf]
      %v977 = vld [vmem:[%s970 + $0x18] sm:$0xf]
      %v978 = vld [vmem:[%s970 + $0x1c] sm:$0xf]
      %v979 = vld [vmem:[%s970 + $0x20] sm:$0xf]
      %v980 = vld [vmem:[%s970 + $0x24] sm:$0xf]
      %v981 = vld [vmem:[%s970 + $0x28] sm:$0xf]
      %v982 = vld [vmem:[%s970 + $0x2c] sm:$0xf]
      %v983 = vld [vmem:[%s970 + $0x30] sm:$0xf]
      %v984 = vld [vmem:[%s970 + $0x34] sm:$0xf]
      %v985 = vld [vmem:[%s970 + $0x38] sm:$0xf]
      %v986 = vld [vmem:[%s970 + $0x3c] sm:$0xf]
      %v987 = vunpack.c.l.b16 %v917
      %v988 = vunpack.c.l.b16 %v920
      %v989 = vunpack.c.l.b16 %v924
      %v990 = vunpack.c.l.b16 %v927
      %v991 = vunpack.c.l.b16 %v931
      %v992 = vunpack.c.l.b16 %v934
      %v993 = vunpack.c.l.b16 %v938
      %v994 = vunpack.c.l.b16 %v941
      %v995 = vunpack.c.l.b16 %v945
      %v996 = vunpack.c.l.b16 %v948
      %v997 = vunpack.c.l.b16 %v952
      %v998 = vunpack.c.l.b16 %v955
      %v999 = vunpack.c.l.b16 %v959
      %v1000 = vunpack.c.l.b16 %v962
      %v1001 = vunpack.c.l.b16 %v966
      %v1002 = vunpack.c.l.b16 %v969
      %v1003 = vpack.c.b16 %v988, %v987
      %v1004 = vpack.c.b16 %v990, %v989
      %v1005 = vpack.c.b16 %v992, %v991
      %v1006 = vpack.c.b16 %v994, %v993
      %v1007 = vpack.c.b16 %v996, %v995
      %v1008 = vpack.c.b16 %v998, %v997
      %v1009 = vpack.c.b16 %v1000, %v999
      %v1010 = vpack.c.b16 %v1002, %v1001
      %v1035 = vunpack.c.l.b16 %v971
      %v1036 = vunpack.c.l.b16 %v972
      %v1037 = vunpack.c.l.b16 %v973
      %v1038 = vunpack.c.l.b16 %v974
      %v1039 = vunpack.c.l.b16 %v975
      %v1040 = vunpack.c.l.b16 %v976
      %v1041 = vunpack.c.l.b16 %v977
      %v1042 = vunpack.c.l.b16 %v978
      %v1043 = vunpack.c.l.b16 %v979
      %v1044 = vunpack.c.l.b16 %v980
      %v1045 = vunpack.c.l.b16 %v981
      %v1046 = vunpack.c.l.b16 %v982
      %v1047 = vunpack.c.l.b16 %v983
      %v1048 = vunpack.c.l.b16 %v984
      %v1049 = vunpack.c.l.b16 %v985
      %v1050 = vunpack.c.l.b16 %v986
      %v1051 = vpack.c.b16 %v1036, %v1035
      %v1052 = vpack.c.b16 %v1038, %v1037
      %v1053 = vpack.c.b16 %v1040, %v1039
      %v1054 = vpack.c.b16 %v1042, %v1041
      %v1055 = vpack.c.b16 %v1044, %v1043
      %v1056 = vpack.c.b16 %v1046, %v1045
      %v1057 = vpack.c.b16 %v1048, %v1047
      %v1058 = vpack.c.b16 %v1050, %v1049
      %1067 = vmatprep.subr.bf16.mxu0 0
      %1068 = vmatpush1.bf16.msra.mxu0 %v1051
      %1069 = vmatprep.subr.bf16.mxu0 0
      %1070 = vmatpush1.bf16.msra.mxu0 %v1052
      %1071 = vmatprep.subr.bf16.mxu0 0
      %1072 = vmatpush1.bf16.msra.mxu0 %v1053
      %1073 = vmatprep.subr.bf16.mxu0 0
      %1074 = vmatpush1.bf16.msra.mxu0 %v1054
      %1075 = vmatprep.subr.bf16.mxu0 0
      %1076 = vmatpush1.bf16.msra.mxu0 %v1055
      %1077 = vmatprep.subr.bf16.mxu0 0
      %1078 = vmatpush1.bf16.msra.mxu0 %v1056
      %1079 = vmatprep.subr.bf16.mxu0 0
      %1080 = vmatpush1.bf16.msra.mxu0 %v1057
      %1081 = vmatprep.subr.bf16.mxu0 0
      %1082 = vmatpush1.bf16.msra.mxu0 %v1058
      %1083 = vmatprep.subr.bf16.mxu0 0
      %1084 = vmatpush1.bf16.msra.mxu0 0
      %1085 = vmatprep.subr.bf16.mxu0 0
      %1086 = vmatpush1.bf16.msra.mxu0 0
      %1087 = vmatprep.subr.bf16.mxu0 0
      %1088 = vmatpush1.bf16.msra.mxu0 0
      %1089 = vmatprep.subr.bf16.mxu0 0
      %1090 = vmatpush1.bf16.msra.mxu0 0
      %1091 = vmatprep.subr.bf16.mxu0 0
      %1092 = vmatpush1.bf16.msra.mxu0 0
      %1093 = vmatprep.subr.bf16.mxu0 0
      %1094 = vmatpush1.bf16.msra.mxu0 0
      %1095 = vmatprep.subr.bf16.mxu0 0
      %1096 = vmatpush1.bf16.msra.mxu0 0
      %1097 = vmatprep.subr.bf16.mxu0 0
      %1098 = vmatpush1.bf16.msra.mxu0 0
      %1099 = vmatprep.mubr.bf16.mxu0 0
      %1100 = vmatmul.mubr.bf16.gmra.mrb[0].mxu0 %v1003
      %v1101 = vpop.f32.mrb[0].mxu0
      %v1102 = vadd.f32 0.0, %v1101
      %v1103 = vpop.f32.mrb[0].mxu0
      %v1104 = vpop.f32.mrb[0].mxu0
      %v1105 = vadd.f32 0.0, %v1104
      %v1106 = vpop.f32.mrb[0].mxu0
      %1107 = vmatprep.mubr.bf16.mxu0 0
      %1108 = vmatmul.mubr.bf16.gmra.mrb[0].mxu0 %v1004
      %v1109 = vpop.f32.mrb[0].mxu0
      %v1110 = vadd.f32 0.0, %v1109
      %v1111 = vpop.f32.mrb[0].mxu0
      %v1112 = vpop.f32.mrb[0].mxu0
      %v1113 = vadd.f32 0.0, %v1112
      %v1114 = vpop.f32.mrb[0].mxu0
      %1115 = vmatprep.mubr.bf16.mxu0 0
      %1116 = vmatmul.mubr.bf16.gmra.mrb[0].mxu0 %v1005
      %v1117 = vpop.f32.mrb[0].mxu0
      %v1118 = vadd.f32 0.0, %v1117
      %v1119 = vpop.f32.mrb[0].mxu0
      %v1120 = vpop.f32.mrb[0].mxu0
      %v1121 = vadd.f32 0.0, %v1120
      %v1122 = vpop.f32.mrb[0].mxu0
      %1123 = vmatprep.mubr.bf16.mxu0 0
      %1124 = vmatmul.mubr.bf16.gmra.mrb[0].mxu0 %v1006
      %v1125 = vpop.f32.mrb[0].mxu0
      %v1126 = vadd.f32 0.0, %v1125
      %v1127 = vpop.f32.mrb[0].mxu0
      %v1128 = vpop.f32.mrb[0].mxu0
      %v1129 = vadd.f32 0.0, %v1128
      %v1130 = vpop.f32.mrb[0].mxu0
      %1131 = vmatprep.mubr.bf16.mxu0 0
      %1132 = vmatmul.mubr.bf16.gmra.mrb[0].mxu0 %v1007
      %v1133 = vpop.f32.mrb[0].mxu0
      %v1134 = vadd.f32 0.0, %v1133
      %v1135 = vpop.f32.mrb[0].mxu0
      %v1136 = vpop.f32.mrb[0].mxu0
      %v1137 = vadd.f32 0.0, %v1136
      %v1138 = vpop.f32.mrb[0].mxu0
      %1139 = vmatprep.mubr.bf16.mxu0 0
      %1140 = vmatmul.mubr.bf16.gmra.mrb[0].mxu0 %v1008
      %v1141 = vpop.f32.mrb[0].mxu0
      %v1142 = vadd.f32 0.0, %v1141
      %v1143 = vpop.f32.mrb[0].mxu0
      %v1144 = vpop.f32.mrb[0].mxu0
      %v1145 = vadd.f32 0.0, %v1144
      %v1146 = vpop.f32.mrb[0].mxu0
      %1147 = vmatprep.mubr.bf16.mxu0 0
      %1148 = vmatmul.mubr.bf16.gmra.mrb[0].mxu0 %v1009
      %v1149 = vpop.f32.mrb[0].mxu0
      %v1150 = vadd.f32 0.0, %v1149
      %v1151 = vpop.f32.mrb[0].mxu0
      %v1152 = vpop.f32.mrb[0].mxu0
      %v1153 = vadd.f32 0.0, %v1152
      %v1154 = vpop.f32.mrb[0].mxu0
      %1155 = vmatprep.mubr.bf16.mxu0 0
      %1156 = vmatmul.mubr.bf16.gmra.mrb[0].mxu0 %v1010
      %v1157 = vpop.f32.mrb[0].mxu0
      %v1158 = vadd.f32 0.0, %v1157
      %v1159 = vpop.f32.mrb[0].mxu0
      %v1160 = vpop.f32.mrb[0].mxu0
      %v1161 = vadd.f32 0.0, %v1160
      %v1162 = vpop.f32.mrb[0].mxu0
      %1163 = vdwg.mxu0
      %v1164 = vadd.f32 %v825, %v1102
      %v1165 = vadd.f32 %v828, %v1105
      %v1166 = vadd.f32 %v833, %v1110
      %v1167 = vadd.f32 %v836, %v1113
      %v1168 = vadd.f32 %v841, %v1118
      %v1169 = vadd.f32 %v844, %v1121
      %v1170 = vadd.f32 %v849, %v1126
      %v1171 = vadd.f32 %v852, %v1129
      %v1172 = vadd.f32 %v857, %v1134
      %v1173 = vadd.f32 %v860, %v1137
      %v1174 = vadd.f32 %v865, %v1142
      %v1175 = vadd.f32 %v868, %v1145
      %v1176 = vadd.f32 %v873, %v1150
      %v1177 = vadd.f32 %v876, %v1153
      %v1178 = vadd.f32 %v881, %v1158
      %v1179 = vadd.f32 %v884, %v1161
      %s1180 = sadd.s32 %s261, 1
      %s1181 = smul.u32 %s1180, 3
      %s1182 = smul.addr %s1181, 4
      %s1183 = scalar_lea.vmem %s234, %s1182
      %v1184 = vld [vmem:[%s1183] sm:$0xf]
      %v1185 = vld [vmem:[%s1183 + $0x4] sm:$0xf]
      %v1186 = vld [vmem:[%s1183 + $0xc] sm:$0xf]
      %v1187 = vld [vmem:[%s1183 + $0x10] sm:$0xf]
      %v1188 = vld [vmem:[%s1183 + $0x18] sm:$0xf]
      %v1189 = vld [vmem:[%s1183 + $0x1c] sm:$0xf]
      %v1190 = vld [vmem:[%s1183 + $0x24] sm:$0xf]
      %v1191 = vld [vmem:[%s1183 + $0x28] sm:$0xf]
      %v1192 = vld [vmem:[%s1183 + $0x30] sm:$0xf]
      %v1193 = vld [vmem:[%s1183 + $0x34] sm:$0xf]
      %v1194 = vld [vmem:[%s1183 + $0x3c] sm:$0xf]
      %v1195 = vld [vmem:[%s1183 + $0x40] sm:$0xf]
      %v1196 = vld [vmem:[%s1183 + $0x48] sm:$0xf]
      %v1197 = vld [vmem:[%s1183 + $0x4c] sm:$0xf]
      %v1198 = vld [vmem:[%s1183 + $0x54] sm:$0xf]
      %v1199 = vld [vmem:[%s1183 + $0x58] sm:$0xf]
      %s1200 = scalar_lea.vmem %s1, 192
      %v1201 = vld [vmem:[%s1200] sm:$0xf]
      %v1202 = vld [vmem:[%s1200 + $0x4] sm:$0xf]
      %v1203 = vld [vmem:[%s1200 + $0x8] sm:$0xf]
      %v1204 = vld [vmem:[%s1200 + $0xc] sm:$0xf]
      %v1205 = vld [vmem:[%s1200 + $0x10] sm:$0xf]
      %v1206 = vld [vmem:[%s1200 + $0x14] sm:$0xf]
      %v1207 = vld [vmem:[%s1200 + $0x18] sm:$0xf]
      %v1208 = vld [vmem:[%s1200 + $0x1c] sm:$0xf]
      %v1209 = vld [vmem:[%s1200 + $0x20] sm:$0xf]
      %v1210 = vld [vmem:[%s1200 + $0x24] sm:$0xf]
      %v1211 = vld [vmem:[%s1200 + $0x28] sm:$0xf]
      %v1212 = vld [vmem:[%s1200 + $0x2c] sm:$0xf]
      %v1213 = vld [vmem:[%s1200 + $0x30] sm:$0xf]
      %v1214 = vld [vmem:[%s1200 + $0x34] sm:$0xf]
      %v1215 = vld [vmem:[%s1200 + $0x38] sm:$0xf]
      %v1216 = vld [vmem:[%s1200 + $0x3c] sm:$0xf]
      %v1233 = vunpack.c.l.b16 %v1184
      %v1234 = vunpack.c.l.b16 %v1185
      %v1235 = vunpack.c.l.b16 %v1186
      %v1236 = vunpack.c.l.b16 %v1187
      %v1237 = vunpack.c.l.b16 %v1188
      %v1238 = vunpack.c.l.b16 %v1189
      %v1239 = vunpack.c.l.b16 %v1190
      %v1240 = vunpack.c.l.b16 %v1191
      %v1241 = vunpack.c.l.b16 %v1192
      %v1242 = vunpack.c.l.b16 %v1193
      %v1243 = vunpack.c.l.b16 %v1194
      %v1244 = vunpack.c.l.b16 %v1195
      %v1245 = vunpack.c.l.b16 %v1196
      %v1246 = vunpack.c.l.b16 %v1197
      %v1247 = vunpack.c.l.b16 %v1198
      %v1248 = vunpack.c.l.b16 %v1199
      %v1249 = vpack.c.b16 %v1234, %v1233
      %v1250 = vpack.c.b16 %v1236, %v1235
      %v1251 = vpack.c.b16 %v1238, %v1237
      %v1252 = vpack.c.b16 %v1240, %v1239
      %v1253 = vpack.c.b16 %v1242, %v1241
      %v1254 = vpack.c.b16 %v1244, %v1243
      %v1255 = vpack.c.b16 %v1246, %v1245
      %v1256 = vpack.c.b16 %v1248, %v1247
      %v1281 = vunpack.c.l.b16 %v1201
      %v1282 = vunpack.c.l.b16 %v1202
      %v1283 = vunpack.c.l.b16 %v1203
      %v1284 = vunpack.c.l.b16 %v1204
      %v1285 = vunpack.c.l.b16 %v1205
      %v1286 = vunpack.c.l.b16 %v1206
      %v1287 = vunpack.c.l.b16 %v1207
      %v1288 = vunpack.c.l.b16 %v1208
      %v1289 = vunpack.c.l.b16 %v1209
      %v1290 = vunpack.c.l.b16 %v1210
      %v1291 = vunpack.c.l.b16 %v1211
      %v1292 = vunpack.c.l.b16 %v1212
      %v1293 = vunpack.c.l.b16 %v1213
      %v1294 = vunpack.c.l.b16 %v1214
      %v1295 = vunpack.c.l.b16 %v1215
      %v1296 = vunpack.c.l.b16 %v1216
      %v1297 = vpack.c.b16 %v1282, %v1281
      %v1298 = vpack.c.b16 %v1284, %v1283
      %v1299 = vpack.c.b16 %v1286, %v1285
      %v1300 = vpack.c.b16 %v1288, %v1287
      %v1301 = vpack.c.b16 %v1290, %v1289
      %v1302 = vpack.c.b16 %v1292, %v1291
      %v1303 = vpack.c.b16 %v1294, %v1293
      %v1304 = vpack.c.b16 %v1296, %v1295
      %1313 = vmatprep.subr.bf16.mxu0 0
      %1314 = vmatpush1.bf16.msra.mxu0 %v1297
      %1315 = vmatprep.subr.bf16.mxu0 0
      %1316 = vmatpush1.bf16.msra.mxu0 %v1298
      %1317 = vmatprep.subr.bf16.mxu0 0
      %1318 = vmatpush1.bf16.msra.mxu0 %v1299
      %1319 = vmatprep.subr.bf16.mxu0 0
      %1320 = vmatpush1.bf16.msra.mxu0 %v1300
      %1321 = vmatprep.subr.bf16.mxu0 0
      %1322 = vmatpush1.bf16.msra.mxu0 %v1301
      %1323 = vmatprep.subr.bf16.mxu0 0
      %1324 = vmatpush1.bf16.msra.mxu0 %v1302
      %1325 = vmatprep.subr.bf16.mxu0 0
      %1326 = vmatpush1.bf16.msra.mxu0 %v1303
      %1327 = vmatprep.subr.bf16.mxu0 0
      %1328 = vmatpush1.bf16.msra.mxu0 %v1304
      %1329 = vmatprep.subr.bf16.mxu0 0
      %1330 = vmatpush1.bf16.msra.mxu0 0
      %1331 = vmatprep.subr.bf16.mxu0 0
      %1332 = vmatpush1.bf16.msra.mxu0 0
      %1333 = vmatprep.subr.bf16.mxu0 0
      %1334 = vmatpush1.bf16.msra.mxu0 0
      %1335 = vmatprep.subr.bf16.mxu0 0
      %1336 = vmatpush1.bf16.msra.mxu0 0
      %1337 = vmatprep.subr.bf16.mxu0 0
      %1338 = vmatpush1.bf16.msra.mxu0 0
      %1339 = vmatprep.subr.bf16.mxu0 0
      %1340 = vmatpush1.bf16.msra.mxu0 0
      %1341 = vmatprep.subr.bf16.mxu0 0
      %1342 = vmatpush1.bf16.msra.mxu0 0
      %1343 = vmatprep.subr.bf16.mxu0 0
      %1344 = vmatpush1.bf16.msra.mxu0 0
      %1345 = vmatprep.mubr.bf16.mxu0 0
      %1346 = vmatmul.mubr.bf16.gmra.mrb[0].mxu0 %v1249
      %v1347 = vpop.f32.mrb[0].mxu0
      %v1348 = vadd.f32 0.0, %v1347
      %v1349 = vpop.f32.mrb[0].mxu0
      %v1350 = vpop.f32.mrb[0].mxu0
      %v1351 = vadd.f32 0.0, %v1350
      %v1352 = vpop.f32.mrb[0].mxu0
      %1353 = vmatprep.mubr.bf16.mxu0 0
      %1354 = vmatmul.mubr.bf16.gmra.mrb[0].mxu0 %v1250
      %v1355 = vpop.f32.mrb[0].mxu0
      %v1356 = vadd.f32 0.0, %v1355
      %v1357 = vpop.f32.mrb[0].mxu0
      %v1358 = vpop.f32.mrb[0].mxu0
      %v1359 = vadd.f32 0.0, %v1358
      %v1360 = vpop.f32.mrb[0].mxu0
      %1361 = vmatprep.mubr.bf16.mxu0 0
      %1362 = vmatmul.mubr.bf16.gmra.mrb[0].mxu0 %v1251
      %v1363 = vpop.f32.mrb[0].mxu0
      %v1364 = vadd.f32 0.0, %v1363
      %v1365 = vpop.f32.mrb[0].mxu0
      %v1366 = vpop.f32.mrb[0].mxu0
      %v1367 = vadd.f32 0.0, %v1366
      %v1368 = vpop.f32.mrb[0].mxu0
      %1369 = vmatprep.mubr.bf16.mxu0 0
      %1370 = vmatmul.mubr.bf16.gmra.mrb[0].mxu0 %v1252
      %v1371 = vpop.f32.mrb[0].mxu0
      %v1372 = vadd.f32 0.0, %v1371
      %v1373 = vpop.f32.mrb[0].mxu0
      %v1374 = vpop.f32.mrb[0].mxu0
      %v1375 = vadd.f32 0.0, %v1374
      %v1376 = vpop.f32.mrb[0].mxu0
      %1377 = vmatprep.mubr.bf16.mxu0 0
      %1378 = vmatmul.mubr.bf16.gmra.mrb[0].mxu0 %v1253
      %v1379 = vpop.f32.mrb[0].mxu0
      %v1380 = vadd.f32 0.0, %v1379
      %v1381 = vpop.f32.mrb[0].mxu0
      %v1382 = vpop.f32.mrb[0].mxu0
      %v1383 = vadd.f32 0.0, %v1382
      %v1384 = vpop.f32.mrb[0].mxu0
      %1385 = vmatprep.mubr.bf16.mxu0 0
      %1386 = vmatmul.mubr.bf16.gmra.mrb[0].mxu0 %v1254
      %v1387 = vpop.f32.mrb[0].mxu0
      %v1388 = vadd.f32 0.0, %v1387
      %v1389 = vpop.f32.mrb[0].mxu0
      %v1390 = vpop.f32.mrb[0].mxu0
      %v1391 = vadd.f32 0.0, %v1390
      %v1392 = vpop.f32.mrb[0].mxu0
      %1393 = vmatprep.mubr.bf16.mxu0 0
      %1394 = vmatmul.mubr.bf16.gmra.mrb[0].mxu0 %v1255
      %v1395 = vpop.f32.mrb[0].mxu0
      %v1396 = vadd.f32 0.0, %v1395
      %v1397 = vpop.f32.mrb[0].mxu0
      %v1398 = vpop.f32.mrb[0].mxu0
      %v1399 = vadd.f32 0.0, %v1398
      %v1400 = vpop.f32.mrb[0].mxu0
      %1401 = vmatprep.mubr.bf16.mxu0 0
      %1402 = vmatmul.mubr.bf16.gmra.mrb[0].mxu0 %v1256
      %v1403 = vpop.f32.mrb[0].mxu0
      %v1404 = vadd.f32 0.0, %v1403
      %v1405 = vpop.f32.mrb[0].mxu0
      %v1406 = vpop.f32.mrb[0].mxu0
      %v1407 = vadd.f32 0.0, %v1406
      %v1408 = vpop.f32.mrb[0].mxu0
      %1409 = vdwg.mxu0
      %v1410 = vadd.f32 %v1164, %v1348
      %v1411 = vadd.f32 %v1165, %v1351
      %v1412 = vadd.f32 %v1166, %v1356
      %v1413 = vadd.f32 %v1167, %v1359
      %v1414 = vadd.f32 %v1168, %v1364
      %v1415 = vadd.f32 %v1169, %v1367
      %v1416 = vadd.f32 %v1170, %v1372
      %v1417 = vadd.f32 %v1171, %v1375
      %v1418 = vadd.f32 %v1172, %v1380
      %v1419 = vadd.f32 %v1173, %v1383
      %v1420 = vadd.f32 %v1174, %v1388
      %v1421 = vadd.f32 %v1175, %v1391
      %v1422 = vadd.f32 %v1176, %v1396
      %v1423 = vadd.f32 %v1177, %v1399
      %v1424 = vadd.f32 %v1178, %v1404
      %v1425 = vadd.f32 %v1179, %v1407
      %v1426 = vld [vmem:[%s1183] sm:$0xf]
      %v1427 = vld [vmem:[%s1183 + $0x4] sm:$0xf]
      %v1428 = vld [vmem:[%s1183 + $0x8] sm:$0x1]
      %v1429 = vld [vmem:[%s1183 + $0xc] sm:$0xf]
      %v1430 = vld [vmem:[%s1183 + $0x10] sm:$0xf]
      %v1431 = vld [vmem:[%s1183 + $0x14] sm:$0x1]
      %v1432 = vld [vmem:[%s1183 + $0x18] sm:$0xf]
      %v1433 = vld [vmem:[%s1183 + $0x1c] sm:$0xf]
      %v1434 = vld [vmem:[%s1183 + $0x20] sm:$0x1]
      %v1435 = vld [vmem:[%s1183 + $0x24] sm:$0xf]
      %v1436 = vld [vmem:[%s1183 + $0x28] sm:$0xf]
      %v1437 = vld [vmem:[%s1183 + $0x2c] sm:$0x1]
      %v1438 = vld [vmem:[%s1183 + $0x30] sm:$0xf]
      %v1439 = vld [vmem:[%s1183 + $0x34] sm:$0xf]
      %v1440 = vld [vmem:[%s1183 + $0x38] sm:$0x1]
      %v1441 = vld [vmem:[%s1183 + $0x3c] sm:$0xf]
      %v1442 = vld [vmem:[%s1183 + $0x40] sm:$0xf]
      %v1443 = vld [vmem:[%s1183 + $0x44] sm:$0x1]
      %v1444 = vld [vmem:[%s1183 + $0x48] sm:$0xf]
      %v1445 = vld [vmem:[%s1183 + $0x4c] sm:$0xf]
      %v1446 = vld [vmem:[%s1183 + $0x50] sm:$0x1]
      %v1447 = vld [vmem:[%s1183 + $0x54] sm:$0xf]
      %v1448 = vld [vmem:[%s1183 + $0x58] sm:$0xf]
      %v1449 = vld [vmem:[%s1183 + $0x5c] sm:$0x1]
      %v1451 = vshrl.u32 %v1426, 16
      %v1453 = vrot.slane %v1451, 4
      %v1454 = vshll.u32 %v1426, 16
      %v1456 = vrot.slane %v1454, 5
      %v1457 = vor.u32 %v1453, %v1456
      %v1458 = vrot.slane %v1457, 4
      %v1460 = vshll.u32 %v1427, 16
      %v1462 = vrot.slane %v1460, 5
      %v1463 = vsel %vm307, %v1458, %v1462
      %v1464 = vshrl.u32 %v1427, 16
      %v1466 = vrot.slane %v1464, 4
      %v1467 = vor.u32 %v1466, %v1462
      %v1468 = vrot.slane %v1467, 4
      %v1470 = vshll.u32 %v1428, 16
      %v1472 = vrot.slane %v1470, 5
      %v1473 = vsel %vm307, %v1468, %v1472
      %v1475 = vshrl.u32 %v1429, 16
      %v1477 = vrot.slane %v1475, 4
      %v1478 = vshll.u32 %v1429, 16
      %v1480 = vrot.slane %v1478, 5
      %v1481 = vor.u32 %v1477, %v1480
      %v1482 = vrot.slane %v1481, 4
      %v1484 = vshll.u32 %v1430, 16
      %v1486 = vrot.slane %v1484, 5
      %v1487 = vsel %vm307, %v1482, %v1486
      %v1488 = vshrl.u32 %v1430, 16
      %v1490 = vrot.slane %v1488, 4
      %v1491 = vor.u32 %v1490, %v1486
      %v1492 = vrot.slane %v1491, 4
      %v1494 = vshll.u32 %v1431, 16
      %v1496 = vrot.slane %v1494, 5
      %v1497 = vsel %vm307, %v1492, %v1496
      %v1499 = vshrl.u32 %v1432, 16
      %v1501 = vrot.slane %v1499, 4
      %v1502 = vshll.u32 %v1432, 16
      %v1504 = vrot.slane %v1502, 5
      %v1505 = vor.u32 %v1501, %v1504
      %v1506 = vrot.slane %v1505, 4
      %v1508 = vshll.u32 %v1433, 16
      %v1510 = vrot.slane %v1508, 5
      %v1511 = vsel %vm307, %v1506, %v1510
      %v1512 = vshrl.u32 %v1433, 16
      %v1514 = vrot.slane %v1512, 4
      %v1515 = vor.u32 %v1514, %v1510
      %v1516 = vrot.slane %v1515, 4
      %v1518 = vshll.u32 %v1434, 16
      %v1520 = vrot.slane %v1518, 5
      %v1521 = vsel %vm307, %v1516, %v1520
      %v1523 = vshrl.u32 %v1435, 16
      %v1525 = vrot.slane %v1523, 4
      %v1526 = vshll.u32 %v1435, 16
      %v1528 = vrot.slane %v1526, 5
      %v1529 = vor.u32 %v1525, %v1528
      %v1530 = vrot.slane %v1529, 4
      %v1532 = vshll.u32 %v1436, 16
      %v1534 = vrot.slane %v1532, 5
      %v1535 = vsel %vm307, %v1530, %v1534
      %v1536 = vshrl.u32 %v1436, 16
      %v1538 = vrot.slane %v1536, 4
      %v1539 = vor.u32 %v1538, %v1534
      %v1540 = vrot.slane %v1539, 4
      %v1542 = vshll.u32 %v1437, 16
      %v1544 = vrot.slane %v1542, 5
      %v1545 = vsel %vm307, %v1540, %v1544
      %v1547 = vshrl.u32 %v1438, 16
      %v1549 = vrot.slane %v1547, 4
      %v1550 = vshll.u32 %v1438, 16
      %v1552 = vrot.slane %v1550, 5
      %v1553 = vor.u32 %v1549, %v1552
      %v1554 = vrot.slane %v1553, 4
      %v1556 = vshll.u32 %v1439, 16
      %v1558 = vrot.slane %v1556, 5
      %v1559 = vsel %vm307, %v1554, %v1558
      %v1560 = vshrl.u32 %v1439, 16
      %v1562 = vrot.slane %v1560, 4
      %v1563 = vor.u32 %v1562, %v1558
      %v1564 = vrot.slane %v1563, 4
      %v1566 = vshll.u32 %v1440, 16
      %v1568 = vrot.slane %v1566, 5
      %v1569 = vsel %vm307, %v1564, %v1568
      %v1571 = vshrl.u32 %v1441, 16
      %v1573 = vrot.slane %v1571, 4
      %v1574 = vshll.u32 %v1441, 16
      %v1576 = vrot.slane %v1574, 5
      %v1577 = vor.u32 %v1573, %v1576
      %v1578 = vrot.slane %v1577, 4
      %v1580 = vshll.u32 %v1442, 16
      %v1582 = vrot.slane %v1580, 5
      %v1583 = vsel %vm307, %v1578, %v1582
      %v1584 = vshrl.u32 %v1442, 16
      %v1586 = vrot.slane %v1584, 4
      %v1587 = vor.u32 %v1586, %v1582
      %v1588 = vrot.slane %v1587, 4
      %v1590 = vshll.u32 %v1443, 16
      %v1592 = vrot.slane %v1590, 5
      %v1593 = vsel %vm307, %v1588, %v1592
      %v1595 = vshrl.u32 %v1444, 16
      %v1597 = vrot.slane %v1595, 4
      %v1598 = vshll.u32 %v1444, 16
      %v1600 = vrot.slane %v1598, 5
      %v1601 = vor.u32 %v1597, %v1600
      %v1602 = vrot.slane %v1601, 4
      %v1604 = vshll.u32 %v1445, 16
      %v1606 = vrot.slane %v1604, 5
      %v1607 = vsel %vm307, %v1602, %v1606
      %v1608 = vshrl.u32 %v1445, 16
      %v1610 = vrot.slane %v1608, 4
      %v1611 = vor.u32 %v1610, %v1606
      %v1612 = vrot.slane %v1611, 4
      %v1614 = vshll.u32 %v1446, 16
      %v1616 = vrot.slane %v1614, 5
      %v1617 = vsel %vm307, %v1612, %v1616
      %v1619 = vshrl.u32 %v1447, 16
      %v1621 = vrot.slane %v1619, 4
      %v1622 = vshll.u32 %v1447, 16
      %v1624 = vrot.slane %v1622, 5
      %v1625 = vor.u32 %v1621, %v1624
      %v1626 = vrot.slane %v1625, 4
      %v1628 = vshll.u32 %v1448, 16
      %v1630 = vrot.slane %v1628, 5
      %v1631 = vsel %vm307, %v1626, %v1630
      %v1632 = vshrl.u32 %v1448, 16
      %v1634 = vrot.slane %v1632, 4
      %v1635 = vor.u32 %v1634, %v1630
      %v1636 = vrot.slane %v1635, 4
      %v1638 = vshll.u32 %v1449, 16
      %v1640 = vrot.slane %v1638, 5
      %v1641 = vsel %vm307, %v1636, %v1640
      %s1642 = scalar_lea.vmem %s1, 256
      %v1643 = vld [vmem:[%s1642] sm:$0xf]
      %v1644 = vld [vmem:[%s1642 + $0x4] sm:$0xf]
      %v1645 = vld [vmem:[%s1642 + $0x8] sm:$0xf]
      %v1646 = vld [vmem:[%s1642 + $0xc] sm:$0xf]
      %v1647 = vld [vmem:[%s1642 + $0x10] sm:$0xf]
      %v1648 = vld [vmem:[%s1642 + $0x14] sm:$0xf]
      %v1649 = vld [vmem:[%s1642 + $0x18] sm:$0xf]
      %v1650 = vld [vmem:[%s1642 + $0x1c] sm:$0xf]
      %v1651 = vld [vmem:[%s1642 + $0x20] sm:$0xf]
      %v1652 = vld [vmem:[%s1642 + $0x24] sm:$0xf]
      %v1653 = vld [vmem:[%s1642 + $0x28] sm:$0xf]
      %v1654 = vld [vmem:[%s1642 + $0x2c] sm:$0xf]
      %v1655 = vld [vmem:[%s1642 + $0x30] sm:$0xf]
      %v1656 = vld [vmem:[%s1642 + $0x34] sm:$0xf]
      %v1657 = vld [vmem:[%s1642 + $0x38] sm:$0xf]
      %v1658 = vld [vmem:[%s1642 + $0x3c] sm:$0xf]
      %v1659 = vunpack.c.l.b16 %v1463
      %v1660 = vunpack.c.l.b16 %v1473
      %v1661 = vunpack.c.l.b16 %v1487
      %v1662 = vunpack.c.l.b16 %v1497
      %v1663 = vunpack.c.l.b16 %v1511
      %v1664 = vunpack.c.l.b16 %v1521
      %v1665 = vunpack.c.l.b16 %v1535
      %v1666 = vunpack.c.l.b16 %v1545
      %v1667 = vunpack.c.l.b16 %v1559
      %v1668 = vunpack.c.l.b16 %v1569
      %v1669 = vunpack.c.l.b16 %v1583
      %v1670 = vunpack.c.l.b16 %v1593
      %v1671 = vunpack.c.l.b16 %v1607
      %v1672 = vunpack.c.l.b16 %v1617
      %v1673 = vunpack.c.l.b16 %v1631
      %v1674 = vunpack.c.l.b16 %v1641
      %v1675 = vpack.c.b16 %v1660, %v1659
      %v1676 = vpack.c.b16 %v1662, %v1661
      %v1677 = vpack.c.b16 %v1664, %v1663
      %v1678 = vpack.c.b16 %v1666, %v1665
      %v1679 = vpack.c.b16 %v1668, %v1667
      %v1680 = vpack.c.b16 %v1670, %v1669
      %v1681 = vpack.c.b16 %v1672, %v1671
      %v1682 = vpack.c.b16 %v1674, %v1673
      %v1707 = vunpack.c.l.b16 %v1643
      %v1708 = vunpack.c.l.b16 %v1644
      %v1709 = vunpack.c.l.b16 %v1645
      %v1710 = vunpack.c.l.b16 %v1646
      %v1711 = vunpack.c.l.b16 %v1647
      %v1712 = vunpack.c.l.b16 %v1648
      %v1713 = vunpack.c.l.b16 %v1649
      %v1714 = vunpack.c.l.b16 %v1650
      %v1715 = vunpack.c.l.b16 %v1651
      %v1716 = vunpack.c.l.b16 %v1652
      %v1717 = vunpack.c.l.b16 %v1653
      %v1718 = vunpack.c.l.b16 %v1654
      %v1719 = vunpack.c.l.b16 %v1655
      %v1720 = vunpack.c.l.b16 %v1656
      %v1721 = vunpack.c.l.b16 %v1657
      %v1722 = vunpack.c.l.b16 %v1658
      %v1723 = vpack.c.b16 %v1708, %v1707
      %v1724 = vpack.c.b16 %v1710, %v1709
      %v1725 = vpack.c.b16 %v1712, %v1711
      %v1726 = vpack.c.b16 %v1714, %v1713
      %v1727 = vpack.c.b16 %v1716, %v1715
      %v1728 = vpack.c.b16 %v1718, %v1717
      %v1729 = vpack.c.b16 %v1720, %v1719
      %v1730 = vpack.c.b16 %v1722, %v1721
      %1739 = vmatprep.subr.bf16.mxu0 0
      %1740 = vmatpush1.bf16.msra.mxu0 %v1723
      %1741 = vmatprep.subr.bf16.mxu0 0
      %1742 = vmatpush1.bf16.msra.mxu0 %v1724
      %1743 = vmatprep.subr.bf16.mxu0 0
      %1744 = vmatpush1.bf16.msra.mxu0 %v1725
      %1745 = vmatprep.subr.bf16.mxu0 0
      %1746 = vmatpush1.bf16.msra.mxu0 %v1726
      %1747 = vmatprep.subr.bf16.mxu0 0
      %1748 = vmatpush1.bf16.msra.mxu0 %v1727
      %1749 = vmatprep.subr.bf16.mxu0 0
      %1750 = vmatpush1.bf16.msra.mxu0 %v1728
      %1751 = vmatprep.subr.bf16.mxu0 0
      %1752 = vmatpush1.bf16.msra.mxu0 %v1729
      %1753 = vmatprep.subr.bf16.mxu0 0
      %1754 = vmatpush1.bf16.msra.mxu0 %v1730
      %1755 = vmatprep.subr.bf16.mxu0 0
      %1756 = vmatpush1.bf16.msra.mxu0 0
      %1757 = vmatprep.subr.bf16.mxu0 0
      %1758 = vmatpush1.bf16.msra.mxu0 0
      %1759 = vmatprep.subr.bf16.mxu0 0
      %1760 = vmatpush1.bf16.msra.mxu0 0
      %1761 = vmatprep.subr.bf16.mxu0 0
      %1762 = vmatpush1.bf16.msra.mxu0 0
      %1763 = vmatprep.subr.bf16.mxu0 0
      %1764 = vmatpush1.bf16.msra.mxu0 0
      %1765 = vmatprep.subr.bf16.mxu0 0
      %1766 = vmatpush1.bf16.msra.mxu0 0
      %1767 = vmatprep.subr.bf16.mxu0 0
      %1768 = vmatpush1.bf16.msra.mxu0 0
      %1769 = vmatprep.subr.bf16.mxu0 0
      %1770 = vmatpush1.bf16.msra.mxu0 0
      %1771 = vmatprep.mubr.bf16.mxu0 0
      %1772 = vmatmul.mubr.bf16.gmra.mrb[0].mxu0 %v1675
      %v1773 = vpop.f32.mrb[0].mxu0
      %v1774 = vadd.f32 0.0, %v1773
      %v1775 = vpop.f32.mrb[0].mxu0
      %v1776 = vpop.f32.mrb[0].mxu0
      %v1777 = vadd.f32 0.0, %v1776
      %v1778 = vpop.f32.mrb[0].mxu0
      %1779 = vmatprep.mubr.bf16.mxu0 0
      %1780 = vmatmul.mubr.bf16.gmra.mrb[0].mxu0 %v1676
      %v1781 = vpop.f32.mrb[0].mxu0
      %v1782 = vadd.f32 0.0, %v1781
      %v1783 = vpop.f32.mrb[0].mxu0
      %v1784 = vpop.f32.mrb[0].mxu0
      %v1785 = vadd.f32 0.0, %v1784
      %v1786 = vpop.f32.mrb[0].mxu0
      %1787 = vmatprep.mubr.bf16.mxu0 0
      %1788 = vmatmul.mubr.bf16.gmra.mrb[0].mxu0 %v1677
      %v1789 = vpop.f32.mrb[0].mxu0
      %v1790 = vadd.f32 0.0, %v1789
      %v1791 = vpop.f32.mrb[0].mxu0
      %v1792 = vpop.f32.mrb[0].mxu0
      %v1793 = vadd.f32 0.0, %v1792
      %v1794 = vpop.f32.mrb[0].mxu0
      %1795 = vmatprep.mubr.bf16.mxu0 0
      %1796 = vmatmul.mubr.bf16.gmra.mrb[0].mxu0 %v1678
      %v1797 = vpop.f32.mrb[0].mxu0
      %v1798 = vadd.f32 0.0, %v1797
      %v1799 = vpop.f32.mrb[0].mxu0
      %v1800 = vpop.f32.mrb[0].mxu0
      %v1801 = vadd.f32 0.0, %v1800
      %v1802 = vpop.f32.mrb[0].mxu0
      %1803 = vmatprep.mubr.bf16.mxu0 0
      %1804 = vmatmul.mubr.bf16.gmra.mrb[0].mxu0 %v1679
      %v1805 = vpop.f32.mrb[0].mxu0
      %v1806 = vadd.f32 0.0, %v1805
      %v1807 = vpop.f32.mrb[0].mxu0
      %v1808 = vpop.f32.mrb[0].mxu0
      %v1809 = vadd.f32 0.0, %v1808
      %v1810 = vpop.f32.mrb[0].mxu0
      %1811 = vmatprep.mubr.bf16.mxu0 0
      %1812 = vmatmul.mubr.bf16.gmra.mrb[0].mxu0 %v1680
      %v1813 = vpop.f32.mrb[0].mxu0
      %v1814 = vadd.f32 0.0, %v1813
      %v1815 = vpop.f32.mrb[0].mxu0
      %v1816 = vpop.f32.mrb[0].mxu0
      %v1817 = vadd.f32 0.0, %v1816
      %v1818 = vpop.f32.mrb[0].mxu0
      %1819 = vmatprep.mubr.bf16.mxu0 0
      %1820 = vmatmul.mubr.bf16.gmra.mrb[0].mxu0 %v1681
      %v1821 = vpop.f32.mrb[0].mxu0
      %v1822 = vadd.f32 0.0, %v1821
      %v1823 = vpop.f32.mrb[0].mxu0
      %v1824 = vpop.f32.mrb[0].mxu0
      %v1825 = vadd.f32 0.0, %v1824
      %v1826 = vpop.f32.mrb[0].mxu0
      %1827 = vmatprep.mubr.bf16.mxu0 0
      %1828 = vmatmul.mubr.bf16.gmra.mrb[0].mxu0 %v1682
      %v1829 = vpop.f32.mrb[0].mxu0
      %v1830 = vadd.f32 0.0, %v1829
      %v1831 = vpop.f32.mrb[0].mxu0
      %v1832 = vpop.f32.mrb[0].mxu0
      %v1833 = vadd.f32 0.0, %v1832
      %v1834 = vpop.f32.mrb[0].mxu0
      %1835 = vdwg.mxu0
      %v1836 = vadd.f32 %v1410, %v1774
      %v1837 = vadd.f32 %v1411, %v1777
      %v1838 = vadd.f32 %v1412, %v1782
      %v1839 = vadd.f32 %v1413, %v1785
      %v1840 = vadd.f32 %v1414, %v1790
      %v1841 = vadd.f32 %v1415, %v1793
      %v1842 = vadd.f32 %v1416, %v1798
      %v1843 = vadd.f32 %v1417, %v1801
      %v1844 = vadd.f32 %v1418, %v1806
      %v1845 = vadd.f32 %v1419, %v1809
      %v1846 = vadd.f32 %v1420, %v1814
      %v1847 = vadd.f32 %v1421, %v1817
      %v1848 = vadd.f32 %v1422, %v1822
      %v1849 = vadd.f32 %v1423, %v1825
      %v1850 = vadd.f32 %v1424, %v1830
      %v1851 = vadd.f32 %v1425, %v1833
      %v1852 = vld [vmem:[%s1183] sm:$0xe]
      %v1853 = vld [vmem:[%s1183 + $0xc] sm:$0xe]
      %v1854 = vld [vmem:[%s1183 + $0x18] sm:$0xe]
      %v1855 = vld [vmem:[%s1183 + $0x24] sm:$0xe]
      %v1856 = vld [vmem:[%s1183 + $0x30] sm:$0xe]
      %v1857 = vld [vmem:[%s1183 + $0x3c] sm:$0xe]
      %v1858 = vld [vmem:[%s1183 + $0x48] sm:$0xe]
      %v1859 = vld [vmem:[%s1183 + $0x54] sm:$0xe]
      %v1884 = vrot.slane %v1852, 5
      %v1885 = vrot.slane %v1884, 4
      %v1886 = vrot.slane %v1427, 5
      %v1887 = vsel %vm913, %v1885, %v1886
      %v1888 = vrot.slane %v1886, 4
      %v1889 = vrot.slane %v1428, 5
      %v1890 = vsel %vm913, %v1888, %v1889
      %v1891 = vrot.slane %v1853, 5
      %v1892 = vrot.slane %v1891, 4
      %v1893 = vrot.slane %v1430, 5
      %v1894 = vsel %vm913, %v1892, %v1893
      %v1895 = vrot.slane %v1893, 4
      %v1896 = vrot.slane %v1431, 5
      %v1897 = vsel %vm913, %v1895, %v1896
      %v1898 = vrot.slane %v1854, 5
      %v1899 = vrot.slane %v1898, 4
      %v1900 = vrot.slane %v1433, 5
      %v1901 = vsel %vm913, %v1899, %v1900
      %v1902 = vrot.slane %v1900, 4
      %v1903 = vrot.slane %v1434, 5
      %v1904 = vsel %vm913, %v1902, %v1903
      %v1905 = vrot.slane %v1855, 5
      %v1906 = vrot.slane %v1905, 4
      %v1907 = vrot.slane %v1436, 5
      %v1908 = vsel %vm913, %v1906, %v1907
      %v1909 = vrot.slane %v1907, 4
      %v1910 = vrot.slane %v1437, 5
      %v1911 = vsel %vm913, %v1909, %v1910
      %v1912 = vrot.slane %v1856, 5
      %v1913 = vrot.slane %v1912, 4
      %v1914 = vrot.slane %v1439, 5
      %v1915 = vsel %vm913, %v1913, %v1914
      %v1916 = vrot.slane %v1914, 4
      %v1917 = vrot.slane %v1440, 5
      %v1918 = vsel %vm913, %v1916, %v1917
      %v1919 = vrot.slane %v1857, 5
      %v1920 = vrot.slane %v1919, 4
      %v1921 = vrot.slane %v1442, 5
      %v1922 = vsel %vm913, %v1920, %v1921
      %v1923 = vrot.slane %v1921, 4
      %v1924 = vrot.slane %v1443, 5
      %v1925 = vsel %vm913, %v1923, %v1924
      %v1926 = vrot.slane %v1858, 5
      %v1927 = vrot.slane %v1926, 4
      %v1928 = vrot.slane %v1445, 5
      %v1929 = vsel %vm913, %v1927, %v1928
      %v1930 = vrot.slane %v1928, 4
      %v1931 = vrot.slane %v1446, 5
      %v1932 = vsel %vm913, %v1930, %v1931
      %v1933 = vrot.slane %v1859, 5
      %v1934 = vrot.slane %v1933, 4
      %v1935 = vrot.slane %v1448, 5
      %v1936 = vsel %vm913, %v1934, %v1935
      %v1937 = vrot.slane %v1935, 4
      %v1938 = vrot.slane %v1449, 5
      %v1939 = vsel %vm913, %v1937, %v1938
      %s1940 = scalar_lea.vmem %s1, 320
      %v1941 = vld [vmem:[%s1940] sm:$0xf]
      %v1942 = vld [vmem:[%s1940 + $0x4] sm:$0xf]
      %v1943 = vld [vmem:[%s1940 + $0x8] sm:$0xf]
      %v1944 = vld [vmem:[%s1940 + $0xc] sm:$0xf]
      %v1945 = vld [vmem:[%s1940 + $0x10] sm:$0xf]
      %v1946 = vld [vmem:[%s1940 + $0x14] sm:$0xf]
      %v1947 = vld [vmem:[%s1940 + $0x18] sm:$0xf]
      %v1948 = vld [vmem:[%s1940 + $0x1c] sm:$0xf]
      %v1949 = vld [vmem:[%s1940 + $0x20] sm:$0xf]
      %v1950 = vld [vmem:[%s1940 + $0x24] sm:$0xf]
      %v1951 = vld [vmem:[%s1940 + $0x28] sm:$0xf]
      %v1952 = vld [vmem:[%s1940 + $0x2c] sm:$0xf]
      %v1953 = vld [vmem:[%s1940 + $0x30] sm:$0xf]
      %v1954 = vld [vmem:[%s1940 + $0x34] sm:$0xf]
      %v1955 = vld [vmem:[%s1940 + $0x38] sm:$0xf]
      %v1956 = vld [vmem:[%s1940 + $0x3c] sm:$0xf]
      %v1957 = vunpack.c.l.b16 %v1887
      %v1958 = vunpack.c.l.b16 %v1890
      %v1959 = vunpack.c.l.b16 %v1894
      %v1960 = vunpack.c.l.b16 %v1897
      %v1961 = vunpack.c.l.b16 %v1901
      %v1962 = vunpack.c.l.b16 %v1904
      %v1963 = vunpack.c.l.b16 %v1908
      %v1964 = vunpack.c.l.b16 %v1911
      %v1965 = vunpack.c.l.b16 %v1915
      %v1966 = vunpack.c.l.b16 %v1918
      %v1967 = vunpack.c.l.b16 %v1922
      %v1968 = vunpack.c.l.b16 %v1925
      %v1969 = vunpack.c.l.b16 %v1929
      %v1970 = vunpack.c.l.b16 %v1932
      %v1971 = vunpack.c.l.b16 %v1936
      %v1972 = vunpack.c.l.b16 %v1939
      %v1973 = vpack.c.b16 %v1958, %v1957
      %v1974 = vpack.c.b16 %v1960, %v1959
      %v1975 = vpack.c.b16 %v1962, %v1961
      %v1976 = vpack.c.b16 %v1964, %v1963
      %v1977 = vpack.c.b16 %v1966, %v1965
      %v1978 = vpack.c.b16 %v1968, %v1967
      %v1979 = vpack.c.b16 %v1970, %v1969
      %v1980 = vpack.c.b16 %v1972, %v1971
      %v2005 = vunpack.c.l.b16 %v1941
      %v2006 = vunpack.c.l.b16 %v1942
      %v2007 = vunpack.c.l.b16 %v1943
      %v2008 = vunpack.c.l.b16 %v1944
      %v2009 = vunpack.c.l.b16 %v1945
      %v2010 = vunpack.c.l.b16 %v1946
      %v2011 = vunpack.c.l.b16 %v1947
      %v2012 = vunpack.c.l.b16 %v1948
      %v2013 = vunpack.c.l.b16 %v1949
      %v2014 = vunpack.c.l.b16 %v1950
      %v2015 = vunpack.c.l.b16 %v1951
      %v2016 = vunpack.c.l.b16 %v1952
      %v2017 = vunpack.c.l.b16 %v1953
      %v2018 = vunpack.c.l.b16 %v1954
      %v2019 = vunpack.c.l.b16 %v1955
      %v2020 = vunpack.c.l.b16 %v1956
      %v2021 = vpack.c.b16 %v2006, %v2005
      %v2022 = vpack.c.b16 %v2008, %v2007
      %v2023 = vpack.c.b16 %v2010, %v2009
      %v2024 = vpack.c.b16 %v2012, %v2011
      %v2025 = vpack.c.b16 %v2014, %v2013
      %v2026 = vpack.c.b16 %v2016, %v2015
      %v2027 = vpack.c.b16 %v2018, %v2017
      %v2028 = vpack.c.b16 %v2020, %v2019
      %2037 = vmatprep.subr.bf16.mxu0 0
      %2038 = vmatpush1.bf16.msra.mxu0 %v2021
      %2039 = vmatprep.subr.bf16.mxu0 0
      %2040 = vmatpush1.bf16.msra.mxu0 %v2022
      %2041 = vmatprep.subr.bf16.mxu0 0
      %2042 = vmatpush1.bf16.msra.mxu0 %v2023
      %2043 = vmatprep.subr.bf16.mxu0 0
      %2044 = vmatpush1.bf16.msra.mxu0 %v2024
      %2045 = vmatprep.subr.bf16.mxu0 0
      %2046 = vmatpush1.bf16.msra.mxu0 %v2025
      %2047 = vmatprep.subr.bf16.mxu0 0
      %2048 = vmatpush1.bf16.msra.mxu0 %v2026
      %2049 = vmatprep.subr.bf16.mxu0 0
      %2050 = vmatpush1.bf16.msra.mxu0 %v2027
      %2051 = vmatprep.subr.bf16.mxu0 0
      %2052 = vmatpush1.bf16.msra.mxu0 %v2028
      %2053 = vmatprep.subr.bf16.mxu0 0
      %2054 = vmatpush1.bf16.msra.mxu0 0
      %2055 = vmatprep.subr.bf16.mxu0 0
      %2056 = vmatpush1.bf16.msra.mxu0 0
      %2057 = vmatprep.subr.bf16.mxu0 0
      %2058 = vmatpush1.bf16.msra.mxu0 0
      %2059 = vmatprep.subr.bf16.mxu0 0
      %2060 = vmatpush1.bf16.msra.mxu0 0
      %2061 = vmatprep.subr.bf16.mxu0 0
      %2062 = vmatpush1.bf16.msra.mxu0 0
      %2063 = vmatprep.subr.bf16.mxu0 0
      %2064 = vmatpush1.bf16.msra.mxu0 0
      %2065 = vmatprep.subr.bf16.mxu0 0
      %2066 = vmatpush1.bf16.msra.mxu0 0
      %2067 = vmatprep.subr.bf16.mxu0 0
      %2068 = vmatpush1.bf16.msra.mxu0 0
      %2069 = vmatprep.mubr.bf16.mxu0 0
      %2070 = vmatmul.mubr.bf16.gmra.mrb[0].mxu0 %v1973
      %v2071 = vpop.f32.mrb[0].mxu0
      %v2072 = vadd.f32 0.0, %v2071
      %v2073 = vpop.f32.mrb[0].mxu0
      %v2074 = vpop.f32.mrb[0].mxu0
      %v2075 = vadd.f32 0.0, %v2074
      %v2076 = vpop.f32.mrb[0].mxu0
      %2077 = vmatprep.mubr.bf16.mxu0 0
      %2078 = vmatmul.mubr.bf16.gmra.mrb[0].mxu0 %v1974
      %v2079 = vpop.f32.mrb[0].mxu0
      %v2080 = vadd.f32 0.0, %v2079
      %v2081 = vpop.f32.mrb[0].mxu0
      %v2082 = vpop.f32.mrb[0].mxu0
      %v2083 = vadd.f32 0.0, %v2082
      %v2084 = vpop.f32.mrb[0].mxu0
      %2085 = vmatprep.mubr.bf16.mxu0 0
      %2086 = vmatmul.mubr.bf16.gmra.mrb[0].mxu0 %v1975
      %v2087 = vpop.f32.mrb[0].mxu0
      %v2088 = vadd.f32 0.0, %v2087
      %v2089 = vpop.f32.mrb[0].mxu0
      %v2090 = vpop.f32.mrb[0].mxu0
      %v2091 = vadd.f32 0.0, %v2090
      %v2092 = vpop.f32.mrb[0].mxu0
      %2093 = vmatprep.mubr.bf16.mxu0 0
      %2094 = vmatmul.mubr.bf16.gmra.mrb[0].mxu0 %v1976
      %v2095 = vpop.f32.mrb[0].mxu0
      %v2096 = vadd.f32 0.0, %v2095
      %v2097 = vpop.f32.mrb[0].mxu0
      %v2098 = vpop.f32.mrb[0].mxu0
      %v2099 = vadd.f32 0.0, %v2098
      %v2100 = vpop.f32.mrb[0].mxu0
      %2101 = vmatprep.mubr.bf16.mxu0 0
      %2102 = vmatmul.mubr.bf16.gmra.mrb[0].mxu0 %v1977
      %v2103 = vpop.f32.mrb[0].mxu0
      %v2104 = vadd.f32 0.0, %v2103
      %v2105 = vpop.f32.mrb[0].mxu0
      %v2106 = vpop.f32.mrb[0].mxu0
      %v2107 = vadd.f32 0.0, %v2106
      %v2108 = vpop.f32.mrb[0].mxu0
      %2109 = vmatprep.mubr.bf16.mxu0 0
      %2110 = vmatmul.mubr.bf16.gmra.mrb[0].mxu0 %v1978
      %v2111 = vpop.f32.mrb[0].mxu0
      %v2112 = vadd.f32 0.0, %v2111
      %v2113 = vpop.f32.mrb[0].mxu0
      %v2114 = vpop.f32.mrb[0].mxu0
      %v2115 = vadd.f32 0.0, %v2114
      %v2116 = vpop.f32.mrb[0].mxu0
      %2117 = vmatprep.mubr.bf16.mxu0 0
      %2118 = vmatmul.mubr.bf16.gmra.mrb[0].mxu0 %v1979
      %v2119 = vpop.f32.mrb[0].mxu0
      %v2120 = vadd.f32 0.0, %v2119
      %v2121 = vpop.f32.mrb[0].mxu0
      %v2122 = vpop.f32.mrb[0].mxu0
      %v2123 = vadd.f32 0.0, %v2122
      %v2124 = vpop.f32.mrb[0].mxu0
      %2125 = vmatprep.mubr.bf16.mxu0 0
      %2126 = vmatmul.mubr.bf16.gmra.mrb[0].mxu0 %v1980
      %v2127 = vpop.f32.mrb[0].mxu0
      %v2128 = vadd.f32 0.0, %v2127
      %v2129 = vpop.f32.mrb[0].mxu0
      %v2130 = vpop.f32.mrb[0].mxu0
      %v2131 = vadd.f32 0.0, %v2130
      %v2132 = vpop.f32.mrb[0].mxu0
      %2133 = vdwg.mxu0
      %v2134 = vadd.f32 %v1836, %v2072
      %v2135 = vadd.f32 %v1837, %v2075
      %v2136 = vadd.f32 %v1838, %v2080
      %v2137 = vadd.f32 %v1839, %v2083
      %v2138 = vadd.f32 %v1840, %v2088
      %v2139 = vadd.f32 %v1841, %v2091
      %v2140 = vadd.f32 %v1842, %v2096
      %v2141 = vadd.f32 %v1843, %v2099
      %v2142 = vadd.f32 %v1844, %v2104
      %v2143 = vadd.f32 %v1845, %v2107
      %v2144 = vadd.f32 %v1846, %v2112
      %v2145 = vadd.f32 %v1847, %v2115
      %v2146 = vadd.f32 %v1848, %v2120
      %v2147 = vadd.f32 %v1849, %v2123
      %v2148 = vadd.f32 %v1850, %v2128
      %v2149 = vadd.f32 %v1851, %v2131
      %s2150 = sadd.s32 %s261, 2
      %s2151 = smul.u32 %s2150, 3
      %s2152 = smul.addr %s2151, 4
      %s2153 = scalar_lea.vmem %s234, %s2152
      %v2154 = vld [vmem:[%s2153] sm:$0xf]
      %v2155 = vld [vmem:[%s2153 + $0x4] sm:$0xf]
      %v2156 = vld [vmem:[%s2153 + $0xc] sm:$0xf]
      %v2157 = vld [vmem:[%s2153 + $0x10] sm:$0xf]
      %v2158 = vld [vmem:[%s2153 + $0x18] sm:$0xf]
      %v2159 = vld [vmem:[%s2153 + $0x1c] sm:$0xf]
      %v2160 = vld [vmem:[%s2153 + $0x24] sm:$0xf]
      %v2161 = vld [vmem:[%s2153 + $0x28] sm:$0xf]
      %v2162 = vld [vmem:[%s2153 + $0x30] sm:$0xf]
      %v2163 = vld [vmem:[%s2153 + $0x34] sm:$0xf]
      %v2164 = vld [vmem:[%s2153 + $0x3c] sm:$0xf]
      %v2165 = vld [vmem:[%s2153 + $0x40] sm:$0xf]
      %v2166 = vld [vmem:[%s2153 + $0x48] sm:$0xf]
      %v2167 = vld [vmem:[%s2153 + $0x4c] sm:$0xf]
      %v2168 = vld [vmem:[%s2153 + $0x54] sm:$0xf]
      %v2169 = vld [vmem:[%s2153 + $0x58] sm:$0xf]
      %s2170 = scalar_lea.vmem %s1, 384
      %v2171 = vld [vmem:[%s2170] sm:$0xf]
      %v2172 = vld [vmem:[%s2170 + $0x4] sm:$0xf]
      %v2173 = vld [vmem:[%s2170 + $0x8] sm:$0xf]
      %v2174 = vld [vmem:[%s2170 + $0xc] sm:$0xf]
      %v2175 = vld [vmem:[%s2170 + $0x10] sm:$0xf]
      %v2176 = vld [vmem:[%s2170 + $0x14] sm:$0xf]
      %v2177 = vld [vmem:[%s2170 + $0x18] sm:$0xf]
      %v2178 = vld [vmem:[%s2170 + $0x1c] sm:$0xf]
      %v2179 = vld [vmem:[%s2170 + $0x20] sm:$0xf]
      %v2180 = vld [vmem:[%s2170 + $0x24] sm:$0xf]
      %v2181 = vld [vmem:[%s2170 + $0x28] sm:$0xf]
      %v2182 = vld [vmem:[%s2170 + $0x2c] sm:$0xf]
      %v2183 = vld [vmem:[%s2170 + $0x30] sm:$0xf]
      %v2184 = vld [vmem:[%s2170 + $0x34] sm:$0xf]
      %v2185 = vld [vmem:[%s2170 + $0x38] sm:$0xf]
      %v2186 = vld [vmem:[%s2170 + $0x3c] sm:$0xf]
      %v2203 = vunpack.c.l.b16 %v2154
      %v2204 = vunpack.c.l.b16 %v2155
      %v2205 = vunpack.c.l.b16 %v2156
      %v2206 = vunpack.c.l.b16 %v2157
      %v2207 = vunpack.c.l.b16 %v2158
      %v2208 = vunpack.c.l.b16 %v2159
      %v2209 = vunpack.c.l.b16 %v2160
      %v2210 = vunpack.c.l.b16 %v2161
      %v2211 = vunpack.c.l.b16 %v2162
      %v2212 = vunpack.c.l.b16 %v2163
      %v2213 = vunpack.c.l.b16 %v2164
      %v2214 = vunpack.c.l.b16 %v2165
      %v2215 = vunpack.c.l.b16 %v2166
      %v2216 = vunpack.c.l.b16 %v2167
      %v2217 = vunpack.c.l.b16 %v2168
      %v2218 = vunpack.c.l.b16 %v2169
      %v2219 = vpack.c.b16 %v2204, %v2203
      %v2220 = vpack.c.b16 %v2206, %v2205
      %v2221 = vpack.c.b16 %v2208, %v2207
      %v2222 = vpack.c.b16 %v2210, %v2209
      %v2223 = vpack.c.b16 %v2212, %v2211
      %v2224 = vpack.c.b16 %v2214, %v2213
      %v2225 = vpack.c.b16 %v2216, %v2215
      %v2226 = vpack.c.b16 %v2218, %v2217
      %v2251 = vunpack.c.l.b16 %v2171
      %v2252 = vunpack.c.l.b16 %v2172
      %v2253 = vunpack.c.l.b16 %v2173
      %v2254 = vunpack.c.l.b16 %v2174
      %v2255 = vunpack.c.l.b16 %v2175
      %v2256 = vunpack.c.l.b16 %v2176
      %v2257 = vunpack.c.l.b16 %v2177
      %v2258 = vunpack.c.l.b16 %v2178
      %v2259 = vunpack.c.l.b16 %v2179
      %v2260 = vunpack.c.l.b16 %v2180
      %v2261 = vunpack.c.l.b16 %v2181
      %v2262 = vunpack.c.l.b16 %v2182
      %v2263 = vunpack.c.l.b16 %v2183
      %v2264 = vunpack.c.l.b16 %v2184
      %v2265 = vunpack.c.l.b16 %v2185
      %v2266 = vunpack.c.l.b16 %v2186
      %v2267 = vpack.c.b16 %v2252, %v2251
      %v2268 = vpack.c.b16 %v2254, %v2253
      %v2269 = vpack.c.b16 %v2256, %v2255
      %v2270 = vpack.c.b16 %v2258, %v2257
      %v2271 = vpack.c.b16 %v2260, %v2259
      %v2272 = vpack.c.b16 %v2262, %v2261
      %v2273 = vpack.c.b16 %v2264, %v2263
      %v2274 = vpack.c.b16 %v2266, %v2265
      %2283 = vmatprep.subr.bf16.mxu0 0
      %2284 = vmatpush1.bf16.msra.mxu0 %v2267
      %2285 = vmatprep.subr.bf16.mxu0 0
      %2286 = vmatpush1.bf16.msra.mxu0 %v2268
      %2287 = vmatprep.subr.bf16.mxu0 0
      %2288 = vmatpush1.bf16.msra.mxu0 %v2269
      %2289 = vmatprep.subr.bf16.mxu0 0
      %2290 = vmatpush1.bf16.msra.mxu0 %v2270
      %2291 = vmatprep.subr.bf16.mxu0 0
      %2292 = vmatpush1.bf16.msra.mxu0 %v2271
      %2293 = vmatprep.subr.bf16.mxu0 0
      %2294 = vmatpush1.bf16.msra.mxu0 %v2272
      %2295 = vmatprep.subr.bf16.mxu0 0
      %2296 = vmatpush1.bf16.msra.mxu0 %v2273
      %2297 = vmatprep.subr.bf16.mxu0 0
      %2298 = vmatpush1.bf16.msra.mxu0 %v2274
      %2299 = vmatprep.subr.bf16.mxu0 0
      %2300 = vmatpush1.bf16.msra.mxu0 0
      %2301 = vmatprep.subr.bf16.mxu0 0
      %2302 = vmatpush1.bf16.msra.mxu0 0
      %2303 = vmatprep.subr.bf16.mxu0 0
      %2304 = vmatpush1.bf16.msra.mxu0 0
      %2305 = vmatprep.subr.bf16.mxu0 0
      %2306 = vmatpush1.bf16.msra.mxu0 0
      %2307 = vmatprep.subr.bf16.mxu0 0
      %2308 = vmatpush1.bf16.msra.mxu0 0
      %2309 = vmatprep.subr.bf16.mxu0 0
      %2310 = vmatpush1.bf16.msra.mxu0 0
      %2311 = vmatprep.subr.bf16.mxu0 0
      %2312 = vmatpush1.bf16.msra.mxu0 0
      %2313 = vmatprep.subr.bf16.mxu0 0
      %2314 = vmatpush1.bf16.msra.mxu0 0
      %2315 = vmatprep.mubr.bf16.mxu0 0
      %2316 = vmatmul.mubr.bf16.gmra.mrb[0].mxu0 %v2219
      %v2317 = vpop.f32.mrb[0].mxu0
      %v2318 = vadd.f32 0.0, %v2317
      %v2319 = vpop.f32.mrb[0].mxu0
      %v2320 = vpop.f32.mrb[0].mxu0
      %v2321 = vadd.f32 0.0, %v2320
      %v2322 = vpop.f32.mrb[0].mxu0
      %2323 = vmatprep.mubr.bf16.mxu0 0
      %2324 = vmatmul.mubr.bf16.gmra.mrb[0].mxu0 %v2220
      %v2325 = vpop.f32.mrb[0].mxu0
      %v2326 = vadd.f32 0.0, %v2325
      %v2327 = vpop.f32.mrb[0].mxu0
      %v2328 = vpop.f32.mrb[0].mxu0
      %v2329 = vadd.f32 0.0, %v2328
      %v2330 = vpop.f32.mrb[0].mxu0
      %2331 = vmatprep.mubr.bf16.mxu0 0
      %2332 = vmatmul.mubr.bf16.gmra.mrb[0].mxu0 %v2221
      %v2333 = vpop.f32.mrb[0].mxu0
      %v2334 = vadd.f32 0.0, %v2333
      %v2335 = vpop.f32.mrb[0].mxu0
      %v2336 = vpop.f32.mrb[0].mxu0
      %v2337 = vadd.f32 0.0, %v2336
      %v2338 = vpop.f32.mrb[0].mxu0
      %2339 = vmatprep.mubr.bf16.mxu0 0
      %2340 = vmatmul.mubr.bf16.gmra.mrb[0].mxu0 %v2222
      %v2341 = vpop.f32.mrb[0].mxu0
      %v2342 = vadd.f32 0.0, %v2341
      %v2343 = vpop.f32.mrb[0].mxu0
      %v2344 = vpop.f32.mrb[0].mxu0
      %v2345 = vadd.f32 0.0, %v2344
      %v2346 = vpop.f32.mrb[0].mxu0
      %2347 = vmatprep.mubr.bf16.mxu0 0
      %2348 = vmatmul.mubr.bf16.gmra.mrb[0].mxu0 %v2223
      %v2349 = vpop.f32.mrb[0].mxu0
      %v2350 = vadd.f32 0.0, %v2349
      %v2351 = vpop.f32.mrb[0].mxu0
      %v2352 = vpop.f32.mrb[0].mxu0
      %v2353 = vadd.f32 0.0, %v2352
      %v2354 = vpop.f32.mrb[0].mxu0
      %2355 = vmatprep.mubr.bf16.mxu0 0
      %2356 = vmatmul.mubr.bf16.gmra.mrb[0].mxu0 %v2224
      %v2357 = vpop.f32.mrb[0].mxu0
      %v2358 = vadd.f32 0.0, %v2357
      %v2359 = vpop.f32.mrb[0].mxu0
      %v2360 = vpop.f32.mrb[0].mxu0
      %v2361 = vadd.f32 0.0, %v2360
      %v2362 = vpop.f32.mrb[0].mxu0
      %2363 = vmatprep.mubr.bf16.mxu0 0
      %2364 = vmatmul.mubr.bf16.gmra.mrb[0].mxu0 %v2225
      %v2365 = vpop.f32.mrb[0].mxu0
      %v2366 = vadd.f32 0.0, %v2365
      %v2367 = vpop.f32.mrb[0].mxu0
      %v2368 = vpop.f32.mrb[0].mxu0
      %v2369 = vadd.f32 0.0, %v2368
      %v2370 = vpop.f32.mrb[0].mxu0
      %2371 = vmatprep.mubr.bf16.mxu0 0
      %2372 = vmatmul.mubr.bf16.gmra.mrb[0].mxu0 %v2226
      %v2373 = vpop.f32.mrb[0].mxu0
      %v2374 = vadd.f32 0.0, %v2373
      %v2375 = vpop.f32.mrb[0].mxu0
      %v2376 = vpop.f32.mrb[0].mxu0
      %v2377 = vadd.f32 0.0, %v2376
      %v2378 = vpop.f32.mrb[0].mxu0
      %2379 = vdwg.mxu0
      %v2380 = vadd.f32 %v2134, %v2318
      %v2381 = vadd.f32 %v2135, %v2321
      %v2382 = vadd.f32 %v2136, %v2326
      %v2383 = vadd.f32 %v2137, %v2329
      %v2384 = vadd.f32 %v2138, %v2334
      %v2385 = vadd.f32 %v2139, %v2337
      %v2386 = vadd.f32 %v2140, %v2342
      %v2387 = vadd.f32 %v2141, %v2345
      %v2388 = vadd.f32 %v2142, %v2350
      %v2389 = vadd.f32 %v2143, %v2353
      %v2390 = vadd.f32 %v2144, %v2358
      %v2391 = vadd.f32 %v2145, %v2361
      %v2392 = vadd.f32 %v2146, %v2366
      %v2393 = vadd.f32 %v2147, %v2369
      %v2394 = vadd.f32 %v2148, %v2374
      %v2395 = vadd.f32 %v2149, %v2377
      %v2396 = vld [vmem:[%s2153] sm:$0xf]
      %v2397 = vld [vmem:[%s2153 + $0x4] sm:$0xf]
      %v2398 = vld [vmem:[%s2153 + $0x8] sm:$0x1]
      %v2399 = vld [vmem:[%s2153 + $0xc] sm:$0xf]
      %v2400 = vld [vmem:[%s2153 + $0x10] sm:$0xf]
      %v2401 = vld [vmem:[%s2153 + $0x14] sm:$0x1]
      %v2402 = vld [vmem:[%s2153 + $0x18] sm:$0xf]
      %v2403 = vld [vmem:[%s2153 + $0x1c] sm:$0xf]
      %v2404 = vld [vmem:[%s2153 + $0x20] sm:$0x1]
      %v2405 = vld [vmem:[%s2153 + $0x24] sm:$0xf]
      %v2406 = vld [vmem:[%s2153 + $0x28] sm:$0xf]
      %v2407 = vld [vmem:[%s2153 + $0x2c] sm:$0x1]
      %v2408 = vld [vmem:[%s2153 + $0x30] sm:$0xf]
      %v2409 = vld [vmem:[%s2153 + $0x34] sm:$0xf]
      %v2410 = vld [vmem:[%s2153 + $0x38] sm:$0x1]
      %v2411 = vld [vmem:[%s2153 + $0x3c] sm:$0xf]
      %v2412 = vld [vmem:[%s2153 + $0x40] sm:$0xf]
      %v2413 = vld [vmem:[%s2153 + $0x44] sm:$0x1]
      %v2414 = vld [vmem:[%s2153 + $0x48] sm:$0xf]
      %v2415 = vld [vmem:[%s2153 + $0x4c] sm:$0xf]
      %v2416 = vld [vmem:[%s2153 + $0x50] sm:$0x1]
      %v2417 = vld [vmem:[%s2153 + $0x54] sm:$0xf]
      %v2418 = vld [vmem:[%s2153 + $0x58] sm:$0xf]
      %v2419 = vld [vmem:[%s2153 + $0x5c] sm:$0x1]
      %v2421 = vshrl.u32 %v2396, 16
      %v2423 = vrot.slane %v2421, 4
      %v2424 = vshll.u32 %v2396, 16
      %v2426 = vrot.slane %v2424, 5
      %v2427 = vor.u32 %v2423, %v2426
      %v2428 = vrot.slane %v2427, 4
      %v2430 = vshll.u32 %v2397, 16
      %v2432 = vrot.slane %v2430, 5
      %v2433 = vsel %vm307, %v2428, %v2432
      %v2434 = vshrl.u32 %v2397, 16
      %v2436 = vrot.slane %v2434, 4
      %v2437 = vor.u32 %v2436, %v2432
      %v2438 = vrot.slane %v2437, 4
      %v2440 = vshll.u32 %v2398, 16
      %v2442 = vrot.slane %v2440, 5
      %v2443 = vsel %vm307, %v2438, %v2442
      %v2445 = vshrl.u32 %v2399, 16
      %v2447 = vrot.slane %v2445, 4
      %v2448 = vshll.u32 %v2399, 16
      %v2450 = vrot.slane %v2448, 5
      %v2451 = vor.u32 %v2447, %v2450
      %v2452 = vrot.slane %v2451, 4
      %v2454 = vshll.u32 %v2400, 16
      %v2456 = vrot.slane %v2454, 5
      %v2457 = vsel %vm307, %v2452, %v2456
      %v2458 = vshrl.u32 %v2400, 16
      %v2460 = vrot.slane %v2458, 4
      %v2461 = vor.u32 %v2460, %v2456
      %v2462 = vrot.slane %v2461, 4
      %v2464 = vshll.u32 %v2401, 16
      %v2466 = vrot.slane %v2464, 5
      %v2467 = vsel %vm307, %v2462, %v2466
      %v2469 = vshrl.u32 %v2402, 16
      %v2471 = vrot.slane %v2469, 4
      %v2472 = vshll.u32 %v2402, 16
      %v2474 = vrot.slane %v2472, 5
      %v2475 = vor.u32 %v2471, %v2474
      %v2476 = vrot.slane %v2475, 4
      %v2478 = vshll.u32 %v2403, 16
      %v2480 = vrot.slane %v2478, 5
      %v2481 = vsel %vm307, %v2476, %v2480
      %v2482 = vshrl.u32 %v2403, 16
      %v2484 = vrot.slane %v2482, 4
      %v2485 = vor.u32 %v2484, %v2480
      %v2486 = vrot.slane %v2485, 4
      %v2488 = vshll.u32 %v2404, 16
      %v2490 = vrot.slane %v2488, 5
      %v2491 = vsel %vm307, %v2486, %v2490
      %v2493 = vshrl.u32 %v2405, 16
      %v2495 = vrot.slane %v2493, 4
      %v2496 = vshll.u32 %v2405, 16
      %v2498 = vrot.slane %v2496, 5
      %v2499 = vor.u32 %v2495, %v2498
      %v2500 = vrot.slane %v2499, 4
      %v2502 = vshll.u32 %v2406, 16
      %v2504 = vrot.slane %v2502, 5
      %v2505 = vsel %vm307, %v2500, %v2504
      %v2506 = vshrl.u32 %v2406, 16
      %v2508 = vrot.slane %v2506, 4
      %v2509 = vor.u32 %v2508, %v2504
      %v2510 = vrot.slane %v2509, 4
      %v2512 = vshll.u32 %v2407, 16
      %v2514 = vrot.slane %v2512, 5
      %v2515 = vsel %vm307, %v2510, %v2514
      %v2517 = vshrl.u32 %v2408, 16
      %v2519 = vrot.slane %v2517, 4
      %v2520 = vshll.u32 %v2408, 16
      %v2522 = vrot.slane %v2520, 5
      %v2523 = vor.u32 %v2519, %v2522
      %v2524 = vrot.slane %v2523, 4
      %v2526 = vshll.u32 %v2409, 16
      %v2528 = vrot.slane %v2526, 5
      %v2529 = vsel %vm307, %v2524, %v2528
      %v2530 = vshrl.u32 %v2409, 16
      %v2532 = vrot.slane %v2530, 4
      %v2533 = vor.u32 %v2532, %v2528
      %v2534 = vrot.slane %v2533, 4
      %v2536 = vshll.u32 %v2410, 16
      %v2538 = vrot.slane %v2536, 5
      %v2539 = vsel %vm307, %v2534, %v2538
      %v2541 = vshrl.u32 %v2411, 16
      %v2543 = vrot.slane %v2541, 4
      %v2544 = vshll.u32 %v2411, 16
      %v2546 = vrot.slane %v2544, 5
      %v2547 = vor.u32 %v2543, %v2546
      %v2548 = vrot.slane %v2547, 4
      %v2550 = vshll.u32 %v2412, 16
      %v2552 = vrot.slane %v2550, 5
      %v2553 = vsel %vm307, %v2548, %v2552
      %v2554 = vshrl.u32 %v2412, 16
      %v2556 = vrot.slane %v2554, 4
      %v2557 = vor.u32 %v2556, %v2552
      %v2558 = vrot.slane %v2557, 4
      %v2560 = vshll.u32 %v2413, 16
      %v2562 = vrot.slane %v2560, 5
      %v2563 = vsel %vm307, %v2558, %v2562
      %v2565 = vshrl.u32 %v2414, 16
      %v2567 = vrot.slane %v2565, 4
      %v2568 = vshll.u32 %v2414, 16
      %v2570 = vrot.slane %v2568, 5
      %v2571 = vor.u32 %v2567, %v2570
      %v2572 = vrot.slane %v2571, 4
      %v2574 = vshll.u32 %v2415, 16
      %v2576 = vrot.slane %v2574, 5
      %v2577 = vsel %vm307, %v2572, %v2576
      %v2578 = vshrl.u32 %v2415, 16
      %v2580 = vrot.slane %v2578, 4
      %v2581 = vor.u32 %v2580, %v2576
      %v2582 = vrot.slane %v2581, 4
      %v2584 = vshll.u32 %v2416, 16
      %v2586 = vrot.slane %v2584, 5
      %v2587 = vsel %vm307, %v2582, %v2586
      %v2589 = vshrl.u32 %v2417, 16
      %v2591 = vrot.slane %v2589, 4
      %v2592 = vshll.u32 %v2417, 16
      %v2594 = vrot.slane %v2592, 5
      %v2595 = vor.u32 %v2591, %v2594
      %v2596 = vrot.slane %v2595, 4
      %v2598 = vshll.u32 %v2418, 16
      %v2600 = vrot.slane %v2598, 5
      %v2601 = vsel %vm307, %v2596, %v2600
      %v2602 = vshrl.u32 %v2418, 16
      %v2604 = vrot.slane %v2602, 4
      %v2605 = vor.u32 %v2604, %v2600
      %v2606 = vrot.slane %v2605, 4
      %v2608 = vshll.u32 %v2419, 16
      %v2610 = vrot.slane %v2608, 5
      %v2611 = vsel %vm307, %v2606, %v2610
      %s2612 = scalar_lea.vmem %s1, 448
      %v2613 = vld [vmem:[%s2612] sm:$0xf]
      %v2614 = vld [vmem:[%s2612 + $0x4] sm:$0xf]
      %v2615 = vld [vmem:[%s2612 + $0x8] sm:$0xf]
      %v2616 = vld [vmem:[%s2612 + $0xc] sm:$0xf]
      %v2617 = vld [vmem:[%s2612 + $0x10] sm:$0xf]
      %v2618 = vld [vmem:[%s2612 + $0x14] sm:$0xf]
      %v2619 = vld [vmem:[%s2612 + $0x18] sm:$0xf]
      %v2620 = vld [vmem:[%s2612 + $0x1c] sm:$0xf]
      %v2621 = vld [vmem:[%s2612 + $0x20] sm:$0xf]
      %v2622 = vld [vmem:[%s2612 + $0x24] sm:$0xf]
      %v2623 = vld [vmem:[%s2612 + $0x28] sm:$0xf]
      %v2624 = vld [vmem:[%s2612 + $0x2c] sm:$0xf]
      %v2625 = vld [vmem:[%s2612 + $0x30] sm:$0xf]
      %v2626 = vld [vmem:[%s2612 + $0x34] sm:$0xf]
      %v2627 = vld [vmem:[%s2612 + $0x38] sm:$0xf]
      %v2628 = vld [vmem:[%s2612 + $0x3c] sm:$0xf]
      %v2629 = vunpack.c.l.b16 %v2433
      %v2630 = vunpack.c.l.b16 %v2443
      %v2631 = vunpack.c.l.b16 %v2457
      %v2632 = vunpack.c.l.b16 %v2467
      %v2633 = vunpack.c.l.b16 %v2481
      %v2634 = vunpack.c.l.b16 %v2491
      %v2635 = vunpack.c.l.b16 %v2505
      %v2636 = vunpack.c.l.b16 %v2515
      %v2637 = vunpack.c.l.b16 %v2529
      %v2638 = vunpack.c.l.b16 %v2539
      %v2639 = vunpack.c.l.b16 %v2553
      %v2640 = vunpack.c.l.b16 %v2563
      %v2641 = vunpack.c.l.b16 %v2577
      %v2642 = vunpack.c.l.b16 %v2587
      %v2643 = vunpack.c.l.b16 %v2601
      %v2644 = vunpack.c.l.b16 %v2611
      %v2645 = vpack.c.b16 %v2630, %v2629
      %v2646 = vpack.c.b16 %v2632, %v2631
      %v2647 = vpack.c.b16 %v2634, %v2633
      %v2648 = vpack.c.b16 %v2636, %v2635
      %v2649 = vpack.c.b16 %v2638, %v2637
      %v2650 = vpack.c.b16 %v2640, %v2639
      %v2651 = vpack.c.b16 %v2642, %v2641
      %v2652 = vpack.c.b16 %v2644, %v2643
      %v2677 = vunpack.c.l.b16 %v2613
      %v2678 = vunpack.c.l.b16 %v2614
      %v2679 = vunpack.c.l.b16 %v2615
      %v2680 = vunpack.c.l.b16 %v2616
      %v2681 = vunpack.c.l.b16 %v2617
      %v2682 = vunpack.c.l.b16 %v2618
      %v2683 = vunpack.c.l.b16 %v2619
      %v2684 = vunpack.c.l.b16 %v2620
      %v2685 = vunpack.c.l.b16 %v2621
      %v2686 = vunpack.c.l.b16 %v2622
      %v2687 = vunpack.c.l.b16 %v2623
      %v2688 = vunpack.c.l.b16 %v2624
      %v2689 = vunpack.c.l.b16 %v2625
      %v2690 = vunpack.c.l.b16 %v2626
      %v2691 = vunpack.c.l.b16 %v2627
      %v2692 = vunpack.c.l.b16 %v2628
      %v2693 = vpack.c.b16 %v2678, %v2677
      %v2694 = vpack.c.b16 %v2680, %v2679
      %v2695 = vpack.c.b16 %v2682, %v2681
      %v2696 = vpack.c.b16 %v2684, %v2683
      %v2697 = vpack.c.b16 %v2686, %v2685
      %v2698 = vpack.c.b16 %v2688, %v2687
      %v2699 = vpack.c.b16 %v2690, %v2689
      %v2700 = vpack.c.b16 %v2692, %v2691
      %2709 = vmatprep.subr.bf16.mxu0 0
      %2710 = vmatpush1.bf16.msra.mxu0 %v2693
      %2711 = vmatprep.subr.bf16.mxu0 0
      %2712 = vmatpush1.bf16.msra.mxu0 %v2694
      %2713 = vmatprep.subr.bf16.mxu0 0
      %2714 = vmatpush1.bf16.msra.mxu0 %v2695
      %2715 = vmatprep.subr.bf16.mxu0 0
      %2716 = vmatpush1.bf16.msra.mxu0 %v2696
      %2717 = vmatprep.subr.bf16.mxu0 0
      %2718 = vmatpush1.bf16.msra.mxu0 %v2697
      %2719 = vmatprep.subr.bf16.mxu0 0
      %2720 = vmatpush1.bf16.msra.mxu0 %v2698
      %2721 = vmatprep.subr.bf16.mxu0 0
      %2722 = vmatpush1.bf16.msra.mxu0 %v2699
      %2723 = vmatprep.subr.bf16.mxu0 0
      %2724 = vmatpush1.bf16.msra.mxu0 %v2700
      %2725 = vmatprep.subr.bf16.mxu0 0
      %2726 = vmatpush1.bf16.msra.mxu0 0
      %2727 = vmatprep.subr.bf16.mxu0 0
      %2728 = vmatpush1.bf16.msra.mxu0 0
      %2729 = vmatprep.subr.bf16.mxu0 0
      %2730 = vmatpush1.bf16.msra.mxu0 0
      %2731 = vmatprep.subr.bf16.mxu0 0
      %2732 = vmatpush1.bf16.msra.mxu0 0
      %2733 = vmatprep.subr.bf16.mxu0 0
      %2734 = vmatpush1.bf16.msra.mxu0 0
      %2735 = vmatprep.subr.bf16.mxu0 0
      %2736 = vmatpush1.bf16.msra.mxu0 0
      %2737 = vmatprep.subr.bf16.mxu0 0
      %2738 = vmatpush1.bf16.msra.mxu0 0
      %2739 = vmatprep.subr.bf16.mxu0 0
      %2740 = vmatpush1.bf16.msra.mxu0 0
      %2741 = vmatprep.mubr.bf16.mxu0 0
      %2742 = vmatmul.mubr.bf16.gmra.mrb[0].mxu0 %v2645
      %v2743 = vpop.f32.mrb[0].mxu0
      %v2744 = vadd.f32 0.0, %v2743
      %v2745 = vpop.f32.mrb[0].mxu0
      %v2746 = vpop.f32.mrb[0].mxu0
      %v2747 = vadd.f32 0.0, %v2746
      %v2748 = vpop.f32.mrb[0].mxu0
      %2749 = vmatprep.mubr.bf16.mxu0 0
      %2750 = vmatmul.mubr.bf16.gmra.mrb[0].mxu0 %v2646
      %v2751 = vpop.f32.mrb[0].mxu0
      %v2752 = vadd.f32 0.0, %v2751
      %v2753 = vpop.f32.mrb[0].mxu0
      %v2754 = vpop.f32.mrb[0].mxu0
      %v2755 = vadd.f32 0.0, %v2754
      %v2756 = vpop.f32.mrb[0].mxu0
      %2757 = vmatprep.mubr.bf16.mxu0 0
      %2758 = vmatmul.mubr.bf16.gmra.mrb[0].mxu0 %v2647
      %v2759 = vpop.f32.mrb[0].mxu0
      %v2760 = vadd.f32 0.0, %v2759
      %v2761 = vpop.f32.mrb[0].mxu0
      %v2762 = vpop.f32.mrb[0].mxu0
      %v2763 = vadd.f32 0.0, %v2762
      %v2764 = vpop.f32.mrb[0].mxu0
      %2765 = vmatprep.mubr.bf16.mxu0 0
      %2766 = vmatmul.mubr.bf16.gmra.mrb[0].mxu0 %v2648
      %v2767 = vpop.f32.mrb[0].mxu0
      %v2768 = vadd.f32 0.0, %v2767
      %v2769 = vpop.f32.mrb[0].mxu0
      %v2770 = vpop.f32.mrb[0].mxu0
      %v2771 = vadd.f32 0.0, %v2770
      %v2772 = vpop.f32.mrb[0].mxu0
      %2773 = vmatprep.mubr.bf16.mxu0 0
      %2774 = vmatmul.mubr.bf16.gmra.mrb[0].mxu0 %v2649
      %v2775 = vpop.f32.mrb[0].mxu0
      %v2776 = vadd.f32 0.0, %v2775
      %v2777 = vpop.f32.mrb[0].mxu0
      %v2778 = vpop.f32.mrb[0].mxu0
      %v2779 = vadd.f32 0.0, %v2778
      %v2780 = vpop.f32.mrb[0].mxu0
      %2781 = vmatprep.mubr.bf16.mxu0 0
      %2782 = vmatmul.mubr.bf16.gmra.mrb[0].mxu0 %v2650
      %v2783 = vpop.f32.mrb[0].mxu0
      %v2784 = vadd.f32 0.0, %v2783
      %v2785 = vpop.f32.mrb[0].mxu0
      %v2786 = vpop.f32.mrb[0].mxu0
      %v2787 = vadd.f32 0.0, %v2786
      %v2788 = vpop.f32.mrb[0].mxu0
      %2789 = vmatprep.mubr.bf16.mxu0 0
      %2790 = vmatmul.mubr.bf16.gmra.mrb[0].mxu0 %v2651
      %v2791 = vpop.f32.mrb[0].mxu0
      %v2792 = vadd.f32 0.0, %v2791
      %v2793 = vpop.f32.mrb[0].mxu0
      %v2794 = vpop.f32.mrb[0].mxu0
      %v2795 = vadd.f32 0.0, %v2794
      %v2796 = vpop.f32.mrb[0].mxu0
      %2797 = vmatprep.mubr.bf16.mxu0 0
      %2798 = vmatmul.mubr.bf16.gmra.mrb[0].mxu0 %v2652
      %v2799 = vpop.f32.mrb[0].mxu0
      %v2800 = vadd.f32 0.0, %v2799
      %v2801 = vpop.f32.mrb[0].mxu0
      %v2802 = vpop.f32.mrb[0].mxu0
      %v2803 = vadd.f32 0.0, %v2802
      %v2804 = vpop.f32.mrb[0].mxu0
      %2805 = vdwg.mxu0
      %v2806 = vadd.f32 %v2380, %v2744
      %v2807 = vadd.f32 %v2381, %v2747
      %v2808 = vadd.f32 %v2382, %v2752
      %v2809 = vadd.f32 %v2383, %v2755
      %v2810 = vadd.f32 %v2384, %v2760
      %v2811 = vadd.f32 %v2385, %v2763
      %v2812 = vadd.f32 %v2386, %v2768
      %v2813 = vadd.f32 %v2387, %v2771
      %v2814 = vadd.f32 %v2388, %v2776
      %v2815 = vadd.f32 %v2389, %v2779
      %v2816 = vadd.f32 %v2390, %v2784
      %v2817 = vadd.f32 %v2391, %v2787
      %v2818 = vadd.f32 %v2392, %v2792
      %v2819 = vadd.f32 %v2393, %v2795
      %v2820 = vadd.f32 %v2394, %v2800
      %v2821 = vadd.f32 %v2395, %v2803
      %v2822 = vld [vmem:[%s2153] sm:$0xe]
      %v2823 = vld [vmem:[%s2153 + $0xc] sm:$0xe]
      %v2824 = vld [vmem:[%s2153 + $0x18] sm:$0xe]
      %v2825 = vld [vmem:[%s2153 + $0x24] sm:$0xe]
      %v2826 = vld [vmem:[%s2153 + $0x30] sm:$0xe]
      %v2827 = vld [vmem:[%s2153 + $0x3c] sm:$0xe]
      %v2828 = vld [vmem:[%s2153 + $0x48] sm:$0xe]
      %v2829 = vld [vmem:[%s2153 + $0x54] sm:$0xe]
      %v2854 = vrot.slane %v2822, 5
      %v2855 = vrot.slane %v2854, 4
      %v2856 = vrot.slane %v2397, 5
      %v2857 = vsel %vm913, %v2855, %v2856
      %v2858 = vrot.slane %v2856, 4
      %v2859 = vrot.slane %v2398, 5
      %v2860 = vsel %vm913, %v2858, %v2859
      %v2861 = vrot.slane %v2823, 5
      %v2862 = vrot.slane %v2861, 4
      %v2863 = vrot.slane %v2400, 5
      %v2864 = vsel %vm913, %v2862, %v2863
      %v2865 = vrot.slane %v2863, 4
      %v2866 = vrot.slane %v2401, 5
      %v2867 = vsel %vm913, %v2865, %v2866
      %v2868 = vrot.slane %v2824, 5
      %v2869 = vrot.slane %v2868, 4
      %v2870 = vrot.slane %v2403, 5
      %v2871 = vsel %vm913, %v2869, %v2870
      %v2872 = vrot.slane %v2870, 4
      %v2873 = vrot.slane %v2404, 5
      %v2874 = vsel %vm913, %v2872, %v2873
      %v2875 = vrot.slane %v2825, 5
      %v2876 = vrot.slane %v2875, 4
      %v2877 = vrot.slane %v2406, 5
      %v2878 = vsel %vm913, %v2876, %v2877
      %v2879 = vrot.slane %v2877, 4
      %v2880 = vrot.slane %v2407, 5
      %v2881 = vsel %vm913, %v2879, %v2880
      %v2882 = vrot.slane %v2826, 5
      %v2883 = vrot.slane %v2882, 4
      %v2884 = vrot.slane %v2409, 5
      %v2885 = vsel %vm913, %v2883, %v2884
      %v2886 = vrot.slane %v2884, 4
      %v2887 = vrot.slane %v2410, 5
      %v2888 = vsel %vm913, %v2886, %v2887
      %v2889 = vrot.slane %v2827, 5
      %v2890 = vrot.slane %v2889, 4
      %v2891 = vrot.slane %v2412, 5
      %v2892 = vsel %vm913, %v2890, %v2891
      %v2893 = vrot.slane %v2891, 4
      %v2894 = vrot.slane %v2413, 5
      %v2895 = vsel %vm913, %v2893, %v2894
      %v2896 = vrot.slane %v2828, 5
      %v2897 = vrot.slane %v2896, 4
      %v2898 = vrot.slane %v2415, 5
      %v2899 = vsel %vm913, %v2897, %v2898
      %v2900 = vrot.slane %v2898, 4
      %v2901 = vrot.slane %v2416, 5
      %v2902 = vsel %vm913, %v2900, %v2901
      %v2903 = vrot.slane %v2829, 5
      %v2904 = vrot.slane %v2903, 4
      %v2905 = vrot.slane %v2418, 5
      %v2906 = vsel %vm913, %v2904, %v2905
      %v2907 = vrot.slane %v2905, 4
      %v2908 = vrot.slane %v2419, 5
      %v2909 = vsel %vm913, %v2907, %v2908
      %s2910 = scalar_lea.vmem %s1, 512
      %v2911 = vld [vmem:[%s2910] sm:$0xf]
      %v2912 = vld [vmem:[%s2910 + $0x4] sm:$0xf]
      %v2913 = vld [vmem:[%s2910 + $0x8] sm:$0xf]
      %v2914 = vld [vmem:[%s2910 + $0xc] sm:$0xf]
      %v2915 = vld [vmem:[%s2910 + $0x10] sm:$0xf]
      %v2916 = vld [vmem:[%s2910 + $0x14] sm:$0xf]
      %v2917 = vld [vmem:[%s2910 + $0x18] sm:$0xf]
      %v2918 = vld [vmem:[%s2910 + $0x1c] sm:$0xf]
      %v2919 = vld [vmem:[%s2910 + $0x20] sm:$0xf]
      %v2920 = vld [vmem:[%s2910 + $0x24] sm:$0xf]
      %v2921 = vld [vmem:[%s2910 + $0x28] sm:$0xf]
      %v2922 = vld [vmem:[%s2910 + $0x2c] sm:$0xf]
      %v2923 = vld [vmem:[%s2910 + $0x30] sm:$0xf]
      %v2924 = vld [vmem:[%s2910 + $0x34] sm:$0xf]
      %v2925 = vld [vmem:[%s2910 + $0x38] sm:$0xf]
      %v2926 = vld [vmem:[%s2910 + $0x3c] sm:$0xf]
      %v2927 = vunpack.c.l.b16 %v2857
      %v2928 = vunpack.c.l.b16 %v2860
      %v2929 = vunpack.c.l.b16 %v2864
      %v2930 = vunpack.c.l.b16 %v2867
      %v2931 = vunpack.c.l.b16 %v2871
      %v2932 = vunpack.c.l.b16 %v2874
      %v2933 = vunpack.c.l.b16 %v2878
      %v2934 = vunpack.c.l.b16 %v2881
      %v2935 = vunpack.c.l.b16 %v2885
      %v2936 = vunpack.c.l.b16 %v2888
      %v2937 = vunpack.c.l.b16 %v2892
      %v2938 = vunpack.c.l.b16 %v2895
      %v2939 = vunpack.c.l.b16 %v2899
      %v2940 = vunpack.c.l.b16 %v2902
      %v2941 = vunpack.c.l.b16 %v2906
      %v2942 = vunpack.c.l.b16 %v2909
      %v2943 = vpack.c.b16 %v2928, %v2927
      %v2944 = vpack.c.b16 %v2930, %v2929
      %v2945 = vpack.c.b16 %v2932, %v2931
      %v2946 = vpack.c.b16 %v2934, %v2933
      %v2947 = vpack.c.b16 %v2936, %v2935
      %v2948 = vpack.c.b16 %v2938, %v2937
      %v2949 = vpack.c.b16 %v2940, %v2939
      %v2950 = vpack.c.b16 %v2942, %v2941
      %v2975 = vunpack.c.l.b16 %v2911
      %v2976 = vunpack.c.l.b16 %v2912
      %v2977 = vunpack.c.l.b16 %v2913
      %v2978 = vunpack.c.l.b16 %v2914
      %v2979 = vunpack.c.l.b16 %v2915
      %v2980 = vunpack.c.l.b16 %v2916
      %v2981 = vunpack.c.l.b16 %v2917
      %v2982 = vunpack.c.l.b16 %v2918
      %v2983 = vunpack.c.l.b16 %v2919
      %v2984 = vunpack.c.l.b16 %v2920
      %v2985 = vunpack.c.l.b16 %v2921
      %v2986 = vunpack.c.l.b16 %v2922
      %v2987 = vunpack.c.l.b16 %v2923
      %v2988 = vunpack.c.l.b16 %v2924
      %v2989 = vunpack.c.l.b16 %v2925
      %v2990 = vunpack.c.l.b16 %v2926
      %v2991 = vpack.c.b16 %v2976, %v2975
      %v2992 = vpack.c.b16 %v2978, %v2977
      %v2993 = vpack.c.b16 %v2980, %v2979
      %v2994 = vpack.c.b16 %v2982, %v2981
      %v2995 = vpack.c.b16 %v2984, %v2983
      %v2996 = vpack.c.b16 %v2986, %v2985
      %v2997 = vpack.c.b16 %v2988, %v2987
      %v2998 = vpack.c.b16 %v2990, %v2989
      %3007 = vmatprep.subr.bf16.mxu0 0
      %3008 = vmatpush1.bf16.msra.mxu0 %v2991
      %3009 = vmatprep.subr.bf16.mxu0 0
      %3010 = vmatpush1.bf16.msra.mxu0 %v2992
      %3011 = vmatprep.subr.bf16.mxu0 0
      %3012 = vmatpush1.bf16.msra.mxu0 %v2993
      %3013 = vmatprep.subr.bf16.mxu0 0
      %3014 = vmatpush1.bf16.msra.mxu0 %v2994
      %3015 = vmatprep.subr.bf16.mxu0 0
      %3016 = vmatpush1.bf16.msra.mxu0 %v2995
      %3017 = vmatprep.subr.bf16.mxu0 0
      %3018 = vmatpush1.bf16.msra.mxu0 %v2996
      %3019 = vmatprep.subr.bf16.mxu0 0
      %3020 = vmatpush1.bf16.msra.mxu0 %v2997
      %3021 = vmatprep.subr.bf16.mxu0 0
      %3022 = vmatpush1.bf16.msra.mxu0 %v2998
      %3023 = vmatprep.subr.bf16.mxu0 0
      %3024 = vmatpush1.bf16.msra.mxu0 0
      %3025 = vmatprep.subr.bf16.mxu0 0
      %3026 = vmatpush1.bf16.msra.mxu0 0
      %3027 = vmatprep.subr.bf16.mxu0 0
      %3028 = vmatpush1.bf16.msra.mxu0 0
      %3029 = vmatprep.subr.bf16.mxu0 0
      %3030 = vmatpush1.bf16.msra.mxu0 0
      %3031 = vmatprep.subr.bf16.mxu0 0
      %3032 = vmatpush1.bf16.msra.mxu0 0
      %3033 = vmatprep.subr.bf16.mxu0 0
      %3034 = vmatpush1.bf16.msra.mxu0 0
      %3035 = vmatprep.subr.bf16.mxu0 0
      %3036 = vmatpush1.bf16.msra.mxu0 0
      %3037 = vmatprep.subr.bf16.mxu0 0
      %3038 = vmatpush1.bf16.msra.mxu0 0
      %3039 = vmatprep.mubr.bf16.mxu0 0
      %3040 = vmatmul.mubr.bf16.gmra.mrb[0].mxu0 %v2943
      %v3041 = vpop.f32.mrb[0].mxu0
      %v3042 = vadd.f32 0.0, %v3041
      %v3043 = vpop.f32.mrb[0].mxu0
      %v3044 = vpop.f32.mrb[0].mxu0
      %v3045 = vadd.f32 0.0, %v3044
      %v3046 = vpop.f32.mrb[0].mxu0
      %3047 = vmatprep.mubr.bf16.mxu0 0
      %3048 = vmatmul.mubr.bf16.gmra.mrb[0].mxu0 %v2944
      %v3049 = vpop.f32.mrb[0].mxu0
      %v3050 = vadd.f32 0.0, %v3049
      %v3051 = vpop.f32.mrb[0].mxu0
      %v3052 = vpop.f32.mrb[0].mxu0
      %v3053 = vadd.f32 0.0, %v3052
      %v3054 = vpop.f32.mrb[0].mxu0
      %3055 = vmatprep.mubr.bf16.mxu0 0
      %3056 = vmatmul.mubr.bf16.gmra.mrb[0].mxu0 %v2945
      %v3057 = vpop.f32.mrb[0].mxu0
      %v3058 = vadd.f32 0.0, %v3057
      %v3059 = vpop.f32.mrb[0].mxu0
      %v3060 = vpop.f32.mrb[0].mxu0
      %v3061 = vadd.f32 0.0, %v3060
      %v3062 = vpop.f32.mrb[0].mxu0
      %3063 = vmatprep.mubr.bf16.mxu0 0
      %3064 = vmatmul.mubr.bf16.gmra.mrb[0].mxu0 %v2946
      %v3065 = vpop.f32.mrb[0].mxu0
      %v3066 = vadd.f32 0.0, %v3065
      %v3067 = vpop.f32.mrb[0].mxu0
      %v3068 = vpop.f32.mrb[0].mxu0
      %v3069 = vadd.f32 0.0, %v3068
      %v3070 = vpop.f32.mrb[0].mxu0
      %3071 = vmatprep.mubr.bf16.mxu0 0
      %3072 = vmatmul.mubr.bf16.gmra.mrb[0].mxu0 %v2947
      %v3073 = vpop.f32.mrb[0].mxu0
      %v3074 = vadd.f32 0.0, %v3073
      %v3075 = vpop.f32.mrb[0].mxu0
      %v3076 = vpop.f32.mrb[0].mxu0
      %v3077 = vadd.f32 0.0, %v3076
      %v3078 = vpop.f32.mrb[0].mxu0
      %3079 = vmatprep.mubr.bf16.mxu0 0
      %3080 = vmatmul.mubr.bf16.gmra.mrb[0].mxu0 %v2948
      %v3081 = vpop.f32.mrb[0].mxu0
      %v3082 = vadd.f32 0.0, %v3081
      %v3083 = vpop.f32.mrb[0].mxu0
      %v3084 = vpop.f32.mrb[0].mxu0
      %v3085 = vadd.f32 0.0, %v3084
      %v3086 = vpop.f32.mrb[0].mxu0
      %3087 = vmatprep.mubr.bf16.mxu0 0
      %3088 = vmatmul.mubr.bf16.gmra.mrb[0].mxu0 %v2949
      %v3089 = vpop.f32.mrb[0].mxu0
      %v3090 = vadd.f32 0.0, %v3089
      %v3091 = vpop.f32.mrb[0].mxu0
      %v3092 = vpop.f32.mrb[0].mxu0
      %v3093 = vadd.f32 0.0, %v3092
      %v3094 = vpop.f32.mrb[0].mxu0
      %3095 = vmatprep.mubr.bf16.mxu0 0
      %3096 = vmatmul.mubr.bf16.gmra.mrb[0].mxu0 %v2950
      %v3097 = vpop.f32.mrb[0].mxu0
      %v3098 = vadd.f32 0.0, %v3097
      %v3099 = vpop.f32.mrb[0].mxu0
      %v3100 = vpop.f32.mrb[0].mxu0
      %v3101 = vadd.f32 0.0, %v3100
      %v3102 = vpop.f32.mrb[0].mxu0
      %3103 = vdwg.mxu0
      %v3104 = vadd.f32 %v2806, %v3042
      %v3105 = vadd.f32 %v2807, %v3045
      %v3106 = vadd.f32 %v2808, %v3050
      %v3107 = vadd.f32 %v2809, %v3053
      %v3108 = vadd.f32 %v2810, %v3058
      %v3109 = vadd.f32 %v2811, %v3061
      %v3110 = vadd.f32 %v2812, %v3066
      %v3111 = vadd.f32 %v2813, %v3069
      %v3112 = vadd.f32 %v2814, %v3074
      %v3113 = vadd.f32 %v2815, %v3077
      %v3114 = vadd.f32 %v2816, %v3082
      %v3115 = vadd.f32 %v2817, %v3085
      %v3116 = vadd.f32 %v2818, %v3090
      %v3117 = vadd.f32 %v2819, %v3093
      %v3118 = vadd.f32 %v2820, %v3098
      %v3119 = vadd.f32 %v2821, %v3101
      %3120 = vst [vmem:[%s244] sm:$0xff] %v3104
      %3121 = vst [vmem:[%s244 + $0x8] sm:$0xff] %v3105
      %3122 = vst [vmem:[%s244 + $0x10] sm:$0xff] %v3106
      %3123 = vst [vmem:[%s244 + $0x18] sm:$0xff] %v3107
      %3124 = vst [vmem:[%s244 + $0x20] sm:$0xff] %v3108
      %3125 = vst [vmem:[%s244 + $0x28] sm:$0xff] %v3109
      %3126 = vst [vmem:[%s244 + $0x30] sm:$0xff] %v3110
      %3127 = vst [vmem:[%s244 + $0x38] sm:$0xff] %v3111
      %3128 = vst [vmem:[%s244 + $0x40] sm:$0xff] %v3112
      %3129 = vst [vmem:[%s244 + $0x48] sm:$0xff] %v3113
      %3130 = vst [vmem:[%s244 + $0x50] sm:$0xff] %v3114
      %3131 = vst [vmem:[%s244 + $0x58] sm:$0xff] %v3115
      %3132 = vst [vmem:[%s244 + $0x60] sm:$0xff] %v3116
      %3133 = vst [vmem:[%s244 + $0x68] sm:$0xff] %v3117
      %3134 = vst [vmem:[%s244 + $0x70] sm:$0xff] %v3118
      %3135 = vst [vmem:[%s244 + $0x78] sm:$0xff] %v3119
      %v3136 = vadd.f32 %v3104, %v3105
      %v3137 = vadd.f32 %v3136, %v3106
      %v3138 = vadd.f32 %v3137, %v3107
      %v3139 = vadd.f32 %v3138, %v3108
      %v3140 = vadd.f32 %v3139, %v3109
      %v3141 = vadd.f32 %v3140, %v3110
      %v3142 = vadd.f32 %v3141, %v3111
      %v3143 = vadd.f32 %v3142, %v3112
      %v3144 = vadd.f32 %v3143, %v3113
      %v3145 = vadd.f32 %v3144, %v3114
      %v3146 = vadd.f32 %v3145, %v3115
      %v3147 = vadd.f32 %v3146, %v3116
      %v3148 = vadd.f32 %v3147, %v3117
      %v3149 = vadd.f32 %v3148, %v3118
      %v3150 = vadd.f32 %v3149, %v3119
      %v3151 = vrot.slane %v3150, 4
      %v3152 = vadd.f32 %v3150, %v3151
      %v3153 = vrot.slane %v3152, 2
      %v3154 = vadd.f32 %v3152, %v3153
      %v3155 = vrot.slane %v3154, 1
      %v3156 = vadd.f32 %v3154, %v3155
      %3157 = vst [vmem:[%s252] sm:$0x1] %v3156
      %v3158 = vmul.f32 %v3104, %v3104
      %v3159 = vmul.f32 %v3105, %v3105
      %v3160 = vmul.f32 %v3106, %v3106
      %v3161 = vmul.f32 %v3107, %v3107
      %v3162 = vmul.f32 %v3108, %v3108
      %v3163 = vmul.f32 %v3109, %v3109
      %v3164 = vmul.f32 %v3110, %v3110
      %v3165 = vmul.f32 %v3111, %v3111
      %v3166 = vmul.f32 %v3112, %v3112
      %v3167 = vmul.f32 %v3113, %v3113
      %v3168 = vmul.f32 %v3114, %v3114
      %v3169 = vmul.f32 %v3115, %v3115
      %v3170 = vmul.f32 %v3116, %v3116
      %v3171 = vmul.f32 %v3117, %v3117
      %v3172 = vmul.f32 %v3118, %v3118
      %v3173 = vmul.f32 %v3119, %v3119
      %v3174 = vadd.f32 %v3158, %v3159
      %v3175 = vadd.f32 %v3174, %v3160
      %v3176 = vadd.f32 %v3175, %v3161
      %v3177 = vadd.f32 %v3176, %v3162
      %v3178 = vadd.f32 %v3177, %v3163
      %v3179 = vadd.f32 %v3178, %v3164
      %v3180 = vadd.f32 %v3179, %v3165
      %v3181 = vadd.f32 %v3180, %v3166
      %v3182 = vadd.f32 %v3181, %v3167
      %v3183 = vadd.f32 %v3182, %v3168
      %v3184 = vadd.f32 %v3183, %v3169
      %v3185 = vadd.f32 %v3184, %v3170
      %v3186 = vadd.f32 %v3185, %v3171
      %v3187 = vadd.f32 %v3186, %v3172
      %v3188 = vadd.f32 %v3187, %v3173
      %v3189 = vrot.slane %v3188, 4
      %v3190 = vadd.f32 %v3188, %v3189
      %v3191 = vrot.slane %v3190, 2
      %v3192 = vadd.f32 %v3190, %v3191
      %v3193 = vrot.slane %v3192, 1
      %v3194 = vadd.f32 %v3192, %v3193
      %3195 = vst [vmem:[%s259] sm:$0x1] %v3194
      %s3196 = smul.u32 8, %s21
      %p3197 = scmp.lt.s32.totalorder %s20, 1
      %s3198 = scalar_select %p3197, %s20, 1
      %p3199 = scmp.lt.s32.totalorder %s3196, 15
      %s3200 = scalar_select %p3199, %s3196, 15
      %s3201 = smul.addr %s3200, 2
      %s3202 = smul.addr %s3198, 32
      %s3203 = sadd.s32 %s3201, %s3202
      %s3204 = smul.addr %s3203, 8
      %s3205 = scalar_lea.vmem %s2, %s3204
      %p3206 = scmp.lt.s32.totalorder %s20, 1
      %s3207 = scalar_select %p3206, %s20, 1
      %p3208 = scmp.lt.s32.totalorder %s21, 1
      %s3209 = scalar_select %p3208, %s21, 1
      %s3210 = smul.addr %s3207, 2
      %s3211 = sadd.s32 %s3209, %s3210
      %s3212 = scalar_lea.vmem %s3, %s3211
      %p3213 = scmp.lt.s32.totalorder %s20, 1
      %s3214 = scalar_select %p3213, %s20, 1
      %p3215 = scmp.lt.s32.totalorder %s21, 1
      %s3216 = scalar_select %p3215, %s21, 1
      %s3217 = smul.addr %s3214, 2
      %s3218 = sadd.s32 %s3216, %s3217
      %s3219 = scalar_lea.vmem %s4, %s3218
      // Predicated region
      $region29: #{down_conv_forward.4} parent=27 // pred_check
        %p3220 = pneg %p95
      $region30: #{down_conv_forward.4} parent=27 // pred_check_branch
        %3222 = sbr.rel (%p3220) target = $region32
      $region31: #{down_conv_forward.4} parent=27 // pred_region
        %s3223 = smul.u32 8, %s21
      $region32: #{down_conv_forward.4} parent=27 // pred_fallthru
        _
      // Predicated region
      $region33: #{down_conv_forward.4} parent=27 // pred_check
        %p3224 = pneg %p123
      $region34: #{down_conv_forward.4} parent=27 // pred_check_branch
        %3226 = sbr.rel (%p3224) target = $region36
      $region35: #{down_conv_forward.4} parent=27 // pred_region
        _
      $region36: #{down_conv_forward.4} parent=27 // pred_fallthru
        _
      // Predicated region
      $region37: #{down_conv_forward.4} parent=27 // pred_check
        %p3227 = pneg %p151
      $region38: #{down_conv_forward.4} parent=27 // pred_check_branch
        %3229 = sbr.rel (%p3227) target = $region40
      $region39: #{down_conv_forward.4} parent=27 // pred_region
        _
      $region40: #{down_conv_forward.4} parent=27 // pred_fallthru
        _
    $region28: #{down_conv_forward.4} parent=5 // pred_fallthru
      _
    %p3230 = scmp.le.s32.totalorder 2, %s11
    // Predicated region
    $region41: #{down_conv_forward.4} parent=5 // pred_check
      %p3231 = pneg %p3230
    $region42: #{down_conv_forward.4} parent=5 // pred_check_branch
      %3233 = sbr.rel (%p3231) target = $region44
    $region43: #{down_conv_forward.4} parent=5 // pred_region
      %s3234 = ssub.s32 %s11, 2
      // Predicated region
      $region45: #{down_conv_forward.4} parent=43 // pred_check
        %p3235 = pneg %p101
      $region46: #{down_conv_forward.4} parent=43 // pred_check_branch
        %3237 = sbr.rel (%p3235) target = $region48
      $region47: #{down_conv_forward.4} parent=43 // pred_region
        %s3238 = smul.u32 8, %s23
        %p3239 = scmp.lt.s32.totalorder %s22, 1
        %s3240 = scalar_select %p3239, %s22, 1
        %p3241 = scmp.lt.s32.totalorder %s3238, 15
        %s3242 = scalar_select %p3241, %s3238, 15
        %s3243 = smul.addr %s3242, 2
        %s3244 = smul.addr %s3240, 32
        %s3245 = sadd.s32 %s3243, %s3244
        %s3246 = smul.addr %s3245, 8
        %s3247 = scalar_lea.vmem %s2, %s3246
      $region48: #{down_conv_forward.4} parent=43 // pred_fallthru
        _
      // Predicated region
      $region49: #{down_conv_forward.4} parent=43 // pred_check
        %p3248 = pneg %p129
      $region50: #{down_conv_forward.4} parent=43 // pred_check_branch
        %3250 = sbr.rel (%p3248) target = $region52
      $region51: #{down_conv_forward.4} parent=43 // pred_region
        %p3251 = scmp.lt.s32.totalorder %s22, 1
        %s3252 = scalar_select %p3251, %s22, 1
        %p3253 = scmp.lt.s32.totalorder %s23, 1
        %s3254 = scalar_select %p3253, %s23, 1
        %s3255 = smul.addr %s3252, 2
        %s3256 = sadd.s32 %s3254, %s3255
        %s3257 = scalar_lea.vmem %s3, %s3256
      $region52: #{down_conv_forward.4} parent=43 // pred_fallthru
        _
      // Predicated region
      $region53: #{down_conv_forward.4} parent=43 // pred_check
        %p3258 = pneg %p157
      $region54: #{down_conv_forward.4} parent=43 // pred_check_branch
        %3260 = sbr.rel (%p3258) target = $region56
      $region55: #{down_conv_forward.4} parent=43 // pred_region
        %p3261 = scmp.lt.s32.totalorder %s22, 1
        %s3262 = scalar_select %p3261, %s22, 1
        %p3263 = scmp.lt.s32.totalorder %s23, 1
        %s3264 = scalar_select %p3263, %s23, 1
        %s3265 = smul.addr %s3262, 2
        %s3266 = sadd.s32 %s3264, %s3265
        %s3267 = scalar_lea.vmem %s4, %s3266
      $region56: #{down_conv_forward.4} parent=43 // pred_fallthru
        _
    $region44: #{down_conv_forward.4} parent=5 // pred_fallthru
      _
  $region6: #{down_conv_forward.4} parent=0 // loop_footer
    %s15 = sadd.s32 1, %s11
  $region7: #{down_conv_forward.4} parent=0 // loop_footer_branch
    %10 = sbr.rel target = $region3
  $region8: #{down_conv_forward.4} parent=0 // loop_exit
    _

</llo_original>
